<compile_context>
chip_gen: v6e
topology: v6e:2x2x1
jax: 0.10.0
libtpu: 0.0.40
codegen_flags: <defaults>
</compile_context>

<pallas_src>
import functools

import jax
import jax.numpy as jnp
from jax import lax
from jax.experimental import pallas as pl
from jax.experimental.pallas import tpu as pltpu


# ----------------------------- in-kernel helpers ---------------------------- #

def _layer_norm(x, a, b, eps):
    # Annotated-Transformer LayerNorm: a * (x - mean) / (std_unbiased + eps) + b
    # (unbiased variance, eps added to std — intentionally NOT torch.nn.LayerNorm)
    d = x.shape[-1]
    mean = jnp.mean(x, axis=-1, keepdims=True)
    c = x - mean
    var = jnp.sum(c * c, axis=-1, keepdims=True) / (d - 1)
    std = jnp.sqrt(var)
    return a * c / (std + eps) + b


def _layer_body(x_ref, mask_ref, ln1_a_ref, ln1_b_ref, wqkv_ref, bqkv_ref,
                wo_ref, bo_ref, ln2_a_ref, ln2_b_ref, w1_ref, b1_ref,
                w2_ref, b2_ref, *, n_heads, eps, want_att):
    """One pre-norm encoder layer for a single (S, D) sequence (one batch)."""
    x = x_ref[0]                                   # (S, D)  f32 residual stream
    # masked_fill(mask == 0, -1e9) as an additive bias, computed in-kernel.
    bias = (1.0 - mask_ref[0, 0].astype(jnp.float32)) * (-1e9)   # (S, S)
    S, D = x.shape
    dk = D // n_heads
    scale = 1.0 / (dk ** 0.5)

    # ---- sublayer 1: x + Wo @ MHA(LN1(x)) --------------------------------- #
    xn = _layer_norm(x, ln1_a_ref[...], ln1_b_ref[...], eps)
    qkv = jnp.dot(xn.astype(jnp.bfloat16), wqkv_ref[...],
                  preferred_element_type=jnp.float32) + bqkv_ref[...]   # (S, 3D)
    q, k, v = qkv[:, :D], qkv[:, D:2 * D], qkv[:, 2 * D:]

    proj = jnp.zeros((S, D), jnp.float32)
    atts = []
    for h in range(n_heads):                       # unrolled, static slices
        sl = slice(h * dk, (h + 1) * dk)
        qh = (q[:, sl] * scale).astype(jnp.bfloat16)     # fold 1/sqrt(dk) in
        kh = k[:, sl].astype(jnp.bfloat16)
        vh = v[:, sl].astype(jnp.bfloat16)
        # scores = q k^T / sqrt(dk) + mask_bias   (f32 accumulation / softmax)
        s = lax.dot_general(qh, kh, (((1,), (1,)), ((), ())),
                            preferred_element_type=jnp.float32) + bias
        s = s - jnp.max(s, axis=-1, keepdims=True)
        e = jnp.exp(s)
        p = e * pl.reciprocal(jnp.sum(e, axis=-1, keepdims=True), approx=True)
        oh = jnp.dot(p.astype(jnp.bfloat16), vh,
                     preferred_element_type=jnp.float32)          # (S, dk)
        # attn @ Wo == sum_h attn_h @ Wo[h]   (block matmul, no concat needed)
        proj = proj + jnp.dot(oh.astype(jnp.bfloat16), wo_ref[h],
                              preferred_element_type=jnp.float32)
        if want_att:
            atts.append(p)
    x = x + proj + bo_ref[...]

    # ---- sublayer 2: x + FFN(LN2(x)) --------------------------------------- #
    xn2 = _layer_norm(x, ln2_a_ref[...], ln2_b_ref[...], eps)
    h1 = jnp.dot(xn2.astype(jnp.bfloat16), w1_ref[...],
                 preferred_element_type=jnp.float32) + b1_ref[...]
    h1 = jnp.maximum(h1, 0.0)
    ff = jnp.dot(h1.astype(jnp.bfloat16), w2_ref[...],
                 preferred_element_type=jnp.float32) + b2_ref[...]
    return x + ff, atts


# --------------------------------- kernels ----------------------------------- #

def _layer_kernel(*refs, n_heads, eps):
    # layers 0..N-2: no attention-probability writeback.
    (x_ref, mask_ref, ln1_a, ln1_b, wqkv, bqkv, wo, bo,
     ln2_a, ln2_b, w1, b1, w2, b2, o_ref) = refs
    y, _ = _layer_body(x_ref, mask_ref, ln1_a, ln1_b, wqkv, bqkv, wo, bo,
                       ln2_a, ln2_b, w1, b1, w2, b2,
                       n_heads=n_heads, eps=eps, want_att=False)
    o_ref[0] = y


def _last_layer_kernel(*refs, n_heads, eps):
    # last layer: also writes attention probs and applies the final Encoder norm.
    (x_ref, mask_ref, ln1_a, ln1_b, wqkv, bqkv, wo, bo,
     ln2_a, ln2_b, w1, b1, w2, b2, fin_a, fin_b, o_ref, att_ref) = refs
    y, atts = _layer_body(x_ref, mask_ref, ln1_a, ln1_b, wqkv, bqkv, wo, bo,
                          ln2_a, ln2_b, w1, b1, w2, b2,
                          n_heads=n_heads, eps=eps, want_att=True)
    for h in range(n_heads):
        att_ref[0, h] = atts[h]
    o_ref[0] = _layer_norm(y, fin_a[...], fin_b[...], eps)   # Encoder.norm fused


# --------------------------------- wrappers ---------------------------------- #

# NOTE: 32 MiB scoped VMEM is safe on v5e/v6e/v7x at these shapes.
_CPARAMS = pltpu.CompilerParams(
    dimension_semantics=("parallel",),
    vmem_limit_bytes=32 * 1024 * 1024,
)


def _full(shape):
    return pl.BlockSpec(shape, lambda b: (0,) * len(shape))


def _layer_in_specs(S, D, DFF, n_heads):
    dk = D // n_heads
    return [
        pl.BlockSpec((1, S, D), lambda b: (b, 0, 0)),       # x (residual stream)
        pl.BlockSpec((1, 1, S, S), lambda b: (b, 0, 0, 0)),  # mask (B,1,S,S)
        _full((1, D)), _full((1, D)),                        # ln1 gamma / beta
        _full((D, 3 * D)), _full((1, 3 * D)),                # fused Wqkv / bqkv
        _full((n_heads, dk, D)), _full((1, D)),              # Wo (per-head) / bo
        _full((1, D)), _full((1, D)),                        # ln2 gamma / beta
        _full((D, DFF)), _full((1, DFF)),                    # W1 / b1
        _full((DFF, D)), _full((1, D)),                      # W2 / b2
    ]


def _layer_args(x, mask, p):
    return (x, mask,
            p["ln1_a"], p["ln1_b"], p["wqkv"], p["bqkv"], p["wo"], p["bo"],
            p["ln2_a"], p["ln2_b"], p["w1"], p["b1"], p["w2"], p["b2"])


def encoder_layer(x, mask, p, n_heads, eps=1e-6):
    B, S, D = x.shape
    DFF = p["w1"].shape[1]
    return pl.pallas_call(
        functools.partial(_layer_kernel, n_heads=n_heads, eps=eps),
        out_shape=jax.ShapeDtypeStruct((B, S, D), jnp.float32),
        grid=(B,),
        in_specs=_layer_in_specs(S, D, DFF, n_heads),
        out_specs=pl.BlockSpec((1, S, D), lambda b: (b, 0, 0)),
        compiler_params=_CPARAMS,
    )(*_layer_args(x, mask, p))


def encoder_last_layer(x, mask, p, final_norm, n_heads, eps=1e-6):
    B, S, D = x.shape
    DFF = p["w1"].shape[1]
    in_specs = _layer_in_specs(S, D, DFF, n_heads) + [_full((1, D)), _full((1, D))]
    return pl.pallas_call(
        functools.partial(_last_layer_kernel, n_heads=n_heads, eps=eps),
        out_shape=(jax.ShapeDtypeStruct((B, S, D), jnp.float32),
                   jax.ShapeDtypeStruct((B, n_heads, S, S), jnp.float32)),
        grid=(B,),
        in_specs=in_specs,
        out_specs=(pl.BlockSpec((1, S, D), lambda b: (b, 0, 0)),
                   pl.BlockSpec((1, n_heads, S, S), lambda b: (b, 0, 0, 0))),
        compiler_params=_CPARAMS,
    )(*(_layer_args(x, mask, p) + (final_norm["a"], final_norm["b"])))


# ------------------------------ Model forward -------------------------------- #

def encoder_forward(x, mask, mask1, mask2, layer_params, final_norm, n_heads):
    """Equivalent of Encoder.forward: loop layers, final LayerNorm, return (x, att)."""
    del mask1, mask2  # TODO(synk): original EncoderLayer not provided; unused here.
    for p in layer_params[:-1]:
        x = encoder_layer(x, mask, p, n_heads)
    out, att = encoder_last_layer(x, mask, layer_params[-1], final_norm, n_heads)
    return out, att


def init_params(key, d_model, d_ff, n_heads, n_layers):
    ks = jax.random.split(key, 6)
    dk = d_model // n_heads
    w = lambda k, shape: (0.1 * jax.random.normal(k, shape)).astype(jnp.float32)
    zeros = lambda *s: jnp.zeros(s, jnp.float32)
    ones = lambda *s: jnp.ones(s, jnp.float32)
    wq, wk, wv = (w(ks[i], (d_model, d_model)) for i in range(3))
    layer = dict(
        # Wq/Wk/Wv fused into one (D, 3D) matmul; matmul weights stored bf16.
        wqkv=jnp.concatenate([wq, wk, wv], axis=1).astype(jnp.bfloat16),
        bqkv=zeros(1, 3 * d_model),
        # Wo pre-split per head: (H, dk, D), so the output projection is a
        # per-head block-matmul accumulation inside the fused kernel.
        wo=w(ks[3], (d_model, d_model)).reshape(n_heads, dk, d_model).astype(jnp.bfloat16),
        bo=zeros(1, d_model),
        w1=w(ks[4], (d_model, d_ff)).astype(jnp.bfloat16), b1=zeros(1, d_ff),
        w2=w(ks[5], (d_ff, d_model)).astype(jnp.bfloat16), b2=zeros(1, d_model),
        ln1_a=ones(1, d_model), ln1_b=zeros(1, d_model),
        ln2_a=ones(1, d_model), ln2_b=zeros(1, d_model),
    )
    # clones() -> deepcopy: every layer starts with identical parameters.
    layer_params = [layer for _ in range(n_layers)]
    final_norm = dict(a=ones(1, d_model), b=zeros(1, d_model))
    return layer_params, final_norm


# ---------------------------------- Main ------------------------------------- #

if __name__ == "__main__":
    B, S, D, H, DFF, N = 2, 8, 32, 4, 64, 2

    key = jax.random.PRNGKey(0)
    k_x, k_p = jax.random.split(key)

    x = jax.random.normal(k_x, (B, S, D), dtype=jnp.float32)
    # Padding-style mask: last two key positions masked out for every query.
    mask = jnp.ones((B, 1, S, S), dtype=jnp.float32).at[:, :, :, S - 2:].set(0.0)
    mask1 = jnp.ones((B, 1, S, S), dtype=jnp.float32)
    mask2 = jnp.ones((B, 1, S, S), dtype=jnp.float32)

    layer_params, final_norm = init_params(k_p, D, DFF, H, N)

    fwd = jax.jit(functools.partial(encoder_forward, n_heads=H))
    out, att = fwd(x, mask, mask1, mask2, layer_params, final_norm)
    jax.block_until_ready((out, att))

    assert out.shape == (B, S, D) and att.shape == (B, H, S, S)
    assert bool(jnp.all(jnp.isfinite(out))) and bool(jnp.all(jnp.isfinite(att)))
    # Masked key positions must receive ~zero attention probability.
    assert float(jnp.max(att[:, :, :, S - 2:])) < 1e-6
    print("KERNEL_OK")
</pallas_src>

<mosaic_0001>
module attributes {stable_mosaic.version = 11 : i64} {
  func.func @_layer_kernel(%arg0: i32, %arg1: memref<1x8x32xf32, #tpu.memory_space<vmem>>, %arg2: memref<1x1x8x8xf32, #tpu.memory_space<vmem>>, %arg3: memref<1x32xf32, #tpu.memory_space<vmem>>, %arg4: memref<1x32xf32, #tpu.memory_space<vmem>>, %arg5: memref<32x96xbf16, #tpu.memory_space<vmem>>, %arg6: memref<1x96xf32, #tpu.memory_space<vmem>>, %arg7: memref<4x8x32xbf16, #tpu.memory_space<vmem>>, %arg8: memref<1x32xf32, #tpu.memory_space<vmem>>, %arg9: memref<1x32xf32, #tpu.memory_space<vmem>>, %arg10: memref<1x32xf32, #tpu.memory_space<vmem>>, %arg11: memref<32x64xbf16, #tpu.memory_space<vmem>>, %arg12: memref<1x64xf32, #tpu.memory_space<vmem>>, %arg13: memref<64x32xbf16, #tpu.memory_space<vmem>>, %arg14: memref<1x32xf32, #tpu.memory_space<vmem>>, %arg15: memref<1x8x32xf32, #tpu.memory_space<vmem>>) attributes {dimension_semantics = [#tpu.dimension_semantics<parallel>], iteration_bounds = array<i64: 2>, scalar_prefetch = 0 : i64, scratch_operands = 0 : i64, tpu.core_type = #tpu.core_type<tc>, window_params = [{transform_indices = @transform_0, window_bounds = array<i64: 1, 8, 32>}, {transform_indices = @transform_1, window_bounds = array<i64: 1, 1, 8, 8>}, {pipeline_mode = #tpu.pipeline_mode<synchronous>, transform_indices = @transform_2, window_bounds = array<i64: 1, 32>}, {pipeline_mode = #tpu.pipeline_mode<synchronous>, transform_indices = @transform_3, window_bounds = array<i64: 1, 32>}, {pipeline_mode = #tpu.pipeline_mode<synchronous>, transform_indices = @transform_4, window_bounds = array<i64: 32, 96>}, {pipeline_mode = #tpu.pipeline_mode<synchronous>, transform_indices = @transform_5, window_bounds = array<i64: 1, 96>}, {pipeline_mode = #tpu.pipeline_mode<synchronous>, transform_indices = @transform_6, window_bounds = array<i64: 4, 8, 32>}, {pipeline_mode = #tpu.pipeline_mode<synchronous>, transform_indices = @transform_7, window_bounds = array<i64: 1, 32>}, {pipeline_mode = #tpu.pipeline_mode<synchronous>, transform_indices = @transform_8, window_bounds = array<i64: 1, 32>}, {pipeline_mode = #tpu.pipeline_mode<synchronous>, transform_indices = @transform_9, window_bounds = array<i64: 1, 32>}, {pipeline_mode = #tpu.pipeline_mode<synchronous>, transform_indices = @transform_10, window_bounds = array<i64: 32, 64>}, {pipeline_mode = #tpu.pipeline_mode<synchronous>, transform_indices = @transform_11, window_bounds = array<i64: 1, 64>}, {pipeline_mode = #tpu.pipeline_mode<synchronous>, transform_indices = @transform_12, window_bounds = array<i64: 64, 32>}, {pipeline_mode = #tpu.pipeline_mode<synchronous>, transform_indices = @transform_13, window_bounds = array<i64: 1, 32>}, {transform_indices = @transform_14, window_bounds = array<i64: 1, 8, 32>}]} {
    %c0 = arith.constant 0 : index
    %c0_0 = arith.constant 0 : index
    %c0_1 = arith.constant 0 : index
    %0 = vector.load %arg1[%c0, %c0_0, %c0_1] : memref<1x8x32xf32, #tpu.memory_space<vmem>>, vector<1x8x32xf32>
    %1 = vector.shape_cast %0 : vector<1x8x32xf32> to vector<8x32xf32>
    %c0_2 = arith.constant 0 : index
    %c0_3 = arith.constant 0 : index
    %c0_4 = arith.constant 0 : index
    %c0_5 = arith.constant 0 : index
    %2 = vector.load %arg2[%c0_2, %c0_3, %c0_4, %c0_5] : memref<1x1x8x8xf32, #tpu.memory_space<vmem>>, vector<1x1x8x8xf32>
    %3 = vector.shape_cast %2 : vector<1x1x8x8xf32> to vector<8x8xf32>
    %cst = arith.constant 1.000000e+00 : f32
    %4 = vector.broadcast %cst : f32 to vector<8x8xf32>
    %5 = arith.subf %4, %3 : vector<8x8xf32>
    %cst_6 = arith.constant -1.000000e+09 : f32
    %6 = vector.broadcast %cst_6 : f32 to vector<8x8xf32>
    %7 = arith.mulf %5, %6 : vector<8x8xf32>
    %c0_7 = arith.constant 0 : index
    %c0_8 = arith.constant 0 : index
    %8 = vector.load %arg3[%c0_7, %c0_8] : memref<1x32xf32, #tpu.memory_space<vmem>>, vector<1x32xf32>
    %c0_9 = arith.constant 0 : index
    %c0_10 = arith.constant 0 : index
    %9 = vector.load %arg4[%c0_9, %c0_10] : memref<1x32xf32, #tpu.memory_space<vmem>>, vector<1x32xf32>
    %cst_11 = arith.constant dense<0.000000e+00> : vector<8xf32>
    %10 = vector.multi_reduction <add>, %1, %cst_11 [1] : vector<8x32xf32> to vector<8xf32>
    %11 = vector.shape_cast %10 : vector<8xf32> to vector<8x1xf32>
    %cst_12 = arith.constant 3.200000e+01 : f32
    %12 = vector.broadcast %cst_12 : f32 to vector<8x1xf32>
    %13 = arith.divf %11, %12 : vector<8x1xf32>
    %14 = vector.broadcast %13 : vector<8x1xf32> to vector<8x32xf32>
    %15 = arith.subf %1, %14 : vector<8x32xf32>
    %16 = arith.mulf %15, %15 : vector<8x32xf32>
    %cst_13 = arith.constant dense<0.000000e+00> : vector<8xf32>
    %17 = vector.multi_reduction <add>, %16, %cst_13 [1] : vector<8x32xf32> to vector<8xf32>
    %18 = vector.shape_cast %17 : vector<8xf32> to vector<8x1xf32>
    %cst_14 = arith.constant 3.100000e+01 : f32
    %19 = vector.broadcast %cst_14 : f32 to vector<8x1xf32>
    %20 = arith.divf %18, %19 : vector<8x1xf32>
    %21 = math.sqrt %20 : vector<8x1xf32>
    %22 = vector.broadcast %8 : vector<1x32xf32> to vector<8x32xf32>
    %23 = arith.mulf %22, %15 : vector<8x32xf32>
    %cst_15 = arith.constant 9.99999997E-7 : f32
    %24 = vector.broadcast %cst_15 : f32 to vector<8x1xf32>
    %25 = arith.addf %21, %24 : vector<8x1xf32>
    %26 = vector.broadcast %25 : vector<8x1xf32> to vector<8x32xf32>
    %27 = arith.divf %23, %26 : vector<8x32xf32>
    %28 = vector.broadcast %9 : vector<1x32xf32> to vector<8x32xf32>
    %29 = arith.addf %27, %28 : vector<8x32xf32>
    %30 = arith.truncf %29 : vector<8x32xf32> to vector<8x32xbf16>
    %c0_16 = arith.constant 0 : index
    %c0_17 = arith.constant 0 : index
    %31 = vector.load %arg5[%c0_16, %c0_17] : memref<32x96xbf16, #tpu.memory_space<vmem>>, vector<32x96xbf16>
    %cst_18 = arith.constant dense<0.000000e+00> : vector<8x96xf32>
    %32 = tpu.matmul %30, %31, %cst_18 {dimension_numbers = #tpu.dot_dimension_numbers<[1], [0], [0], [1], [0, 0, 1, 1], [], []>} : vector<8x32xbf16>, vector<32x96xbf16>, vector<8x96xf32> -> vector<8x96xf32>
    %c0_19 = arith.constant 0 : index
    %c0_20 = arith.constant 0 : index
    %33 = vector.load %arg6[%c0_19, %c0_20] : memref<1x96xf32, #tpu.memory_space<vmem>>, vector<1x96xf32>
    %34 = vector.broadcast %33 : vector<1x96xf32> to vector<8x96xf32>
    %35 = arith.addf %32, %34 : vector<8x96xf32>
    %36 = vector.extract_strided_slice %35 {offsets = [0, 0], sizes = [8, 32], strides = [1, 1]} : vector<8x96xf32> to vector<8x32xf32>
    %37 = vector.extract_strided_slice %35 {offsets = [0, 32], sizes = [8, 32], strides = [1, 1]} : vector<8x96xf32> to vector<8x32xf32>
    %38 = vector.extract_strided_slice %35 {offsets = [0, 64], sizes = [8, 32], strides = [1, 1]} : vector<8x96xf32> to vector<8x32xf32>
    %cst_21 = arith.constant 0.000000e+00 : f32
    %39 = vector.broadcast %cst_21 : f32 to vector<8x32xf32>
    %40 = vector.extract_strided_slice %36 {offsets = [0, 0], sizes = [8, 8], strides = [1, 1]} : vector<8x32xf32> to vector<8x8xf32>
    %cst_22 = arith.constant 0.353553385 : f32
    %41 = vector.broadcast %cst_22 : f32 to vector<8x8xf32>
    %42 = arith.mulf %40, %41 : vector<8x8xf32>
    %43 = arith.truncf %42 : vector<8x8xf32> to vector<8x8xbf16>
    %44 = vector.extract_strided_slice %37 {offsets = [0, 0], sizes = [8, 8], strides = [1, 1]} : vector<8x32xf32> to vector<8x8xf32>
    %45 = arith.truncf %44 : vector<8x8xf32> to vector<8x8xbf16>
    %46 = vector.extract_strided_slice %38 {offsets = [0, 0], sizes = [8, 8], strides = [1, 1]} : vector<8x32xf32> to vector<8x8xf32>
    %47 = arith.truncf %46 : vector<8x8xf32> to vector<8x8xbf16>
    %cst_23 = arith.constant dense<0.000000e+00> : vector<8x8xf32>
    %48 = tpu.matmul %43, %45, %cst_23 {dimension_numbers = #tpu.dot_dimension_numbers<[1], [1], [0], [0], [0, 0, 1, 0], [], []>} : vector<8x8xbf16>, vector<8x8xbf16>, vector<8x8xf32> -> vector<8x8xf32>
    %49 = arith.addf %48, %7 : vector<8x8xf32>
    %cst_24 = arith.constant dense<0xFF800000> : vector<8xf32>
    %50 = vector.multi_reduction <maximumf>, %49, %cst_24 [1] : vector<8x8xf32> to vector<8xf32>
    %51 = vector.shape_cast %50 : vector<8xf32> to vector<8x1xf32>
    %52 = vector.broadcast %51 : vector<8x1xf32> to vector<8x8xf32>
    %53 = arith.subf %49, %52 : vector<8x8xf32>
    %54 = math.exp %53 : vector<8x8xf32>
    %cst_25 = arith.constant dense<0.000000e+00> : vector<8xf32>
    %55 = vector.multi_reduction <add>, %54, %cst_25 [1] : vector<8x8xf32> to vector<8xf32>
    %56 = vector.shape_cast %55 : vector<8xf32> to vector<8x1xf32>
    %57 = tpu.reciprocal %56 {approx = true} : vector<8x1xf32> -> vector<8x1xf32>
    %58 = vector.broadcast %57 : vector<8x1xf32> to vector<8x8xf32>
    %59 = arith.mulf %54, %58 : vector<8x8xf32>
    %60 = arith.truncf %59 : vector<8x8xf32> to vector<8x8xbf16>
    %cst_26 = arith.constant dense<0.000000e+00> : vector<8x8xf32>
    %61 = tpu.matmul %60, %47, %cst_26 {dimension_numbers = #tpu.dot_dimension_numbers<[1], [0], [0], [1], [0, 0, 1, 1], [], []>} : vector<8x8xbf16>, vector<8x8xbf16>, vector<8x8xf32> -> vector<8x8xf32>
    %62 = arith.truncf %61 : vector<8x8xf32> to vector<8x8xbf16>
    %c0_27 = arith.constant 0 : index
    %c0_28 = arith.constant 0 : index
    %c0_29 = arith.constant 0 : index
    %63 = vector.load %arg7[%c0_27, %c0_28, %c0_29] : memref<4x8x32xbf16, #tpu.memory_space<vmem>>, vector<1x8x32xbf16>
    %64 = vector.shape_cast %63 : vector<1x8x32xbf16> to vector<8x32xbf16>
    %cst_30 = arith.constant dense<0.000000e+00> : vector<8x32xf32>
    %65 = tpu.matmul %62, %64, %cst_30 {dimension_numbers = #tpu.dot_dimension_numbers<[1], [0], [0], [1], [0, 0, 1, 1], [], []>} : vector<8x8xbf16>, vector<8x32xbf16>, vector<8x32xf32> -> vector<8x32xf32>
    %66 = arith.addf %39, %65 : vector<8x32xf32>
    %67 = vector.extract_strided_slice %36 {offsets = [0, 8], sizes = [8, 8], strides = [1, 1]} : vector<8x32xf32> to vector<8x8xf32>
    %cst_31 = arith.constant 0.353553385 : f32
    %68 = vector.broadcast %cst_31 : f32 to vector<8x8xf32>
    %69 = arith.mulf %67, %68 : vector<8x8xf32>
    %70 = arith.truncf %69 : vector<8x8xf32> to vector<8x8xbf16>
    %71 = vector.extract_strided_slice %37 {offsets = [0, 8], sizes = [8, 8], strides = [1, 1]} : vector<8x32xf32> to vector<8x8xf32>
    %72 = arith.truncf %71 : vector<8x8xf32> to vector<8x8xbf16>
    %73 = vector.extract_strided_slice %38 {offsets = [0, 8], sizes = [8, 8], strides = [1, 1]} : vector<8x32xf32> to vector<8x8xf32>
    %74 = arith.truncf %73 : vector<8x8xf32> to vector<8x8xbf16>
    %cst_32 = arith.constant dense<0.000000e+00> : vector<8x8xf32>
    %75 = tpu.matmul %70, %72, %cst_32 {dimension_numbers = #tpu.dot_dimension_numbers<[1], [1], [0], [0], [0, 0, 1, 0], [], []>} : vector<8x8xbf16>, vector<8x8xbf16>, vector<8x8xf32> -> vector<8x8xf32>
    %76 = arith.addf %75, %7 : vector<8x8xf32>
    %cst_33 = arith.constant dense<0xFF800000> : vector<8xf32>
    %77 = vector.multi_reduction <maximumf>, %76, %cst_33 [1] : vector<8x8xf32> to vector<8xf32>
    %78 = vector.shape_cast %77 : vector<8xf32> to vector<8x1xf32>
    %79 = vector.broadcast %78 : vector<8x1xf32> to vector<8x8xf32>
    %80 = arith.subf %76, %79 : vector<8x8xf32>
    %81 = math.exp %80 : vector<8x8xf32>
    %cst_34 = arith.constant dense<0.000000e+00> : vector<8xf32>
    %82 = vector.multi_reduction <add>, %81, %cst_34 [1] : vector<8x8xf32> to vector<8xf32>
    %83 = vector.shape_cast %82 : vector<8xf32> to vector<8x1xf32>
    %84 = tpu.reciprocal %83 {approx = true} : vector<8x1xf32> -> vector<8x1xf32>
    %85 = vector.broadcast %84 : vector<8x1xf32> to vector<8x8xf32>
    %86 = arith.mulf %81, %85 : vector<8x8xf32>
    %87 = arith.truncf %86 : vector<8x8xf32> to vector<8x8xbf16>
    %cst_35 = arith.constant dense<0.000000e+00> : vector<8x8xf32>
    %88 = tpu.matmul %87, %74, %cst_35 {dimension_numbers = #tpu.dot_dimension_numbers<[1], [0], [0], [1], [0, 0, 1, 1], [], []>} : vector<8x8xbf16>, vector<8x8xbf16>, vector<8x8xf32> -> vector<8x8xf32>
    %89 = arith.truncf %88 : vector<8x8xf32> to vector<8x8xbf16>
    %c1 = arith.constant 1 : index
    %c0_36 = arith.constant 0 : index
    %c0_37 = arith.constant 0 : index
    %90 = vector.load %arg7[%c1, %c0_36, %c0_37] : memref<4x8x32xbf16, #tpu.memory_space<vmem>>, vector<1x8x32xbf16>
    %91 = vector.shape_cast %90 : vector<1x8x32xbf16> to vector<8x32xbf16>
    %cst_38 = arith.constant dense<0.000000e+00> : vector<8x32xf32>
    %92 = tpu.matmul %89, %91, %cst_38 {dimension_numbers = #tpu.dot_dimension_numbers<[1], [0], [0], [1], [0, 0, 1, 1], [], []>} : vector<8x8xbf16>, vector<8x32xbf16>, vector<8x32xf32> -> vector<8x32xf32>
    %93 = arith.addf %66, %92 : vector<8x32xf32>
    %94 = vector.extract_strided_slice %36 {offsets = [0, 16], sizes = [8, 8], strides = [1, 1]} : vector<8x32xf32> to vector<8x8xf32>
    %cst_39 = arith.constant 0.353553385 : f32
    %95 = vector.broadcast %cst_39 : f32 to vector<8x8xf32>
    %96 = arith.mulf %94, %95 : vector<8x8xf32>
    %97 = arith.truncf %96 : vector<8x8xf32> to vector<8x8xbf16>
    %98 = vector.extract_strided_slice %37 {offsets = [0, 16], sizes = [8, 8], strides = [1, 1]} : vector<8x32xf32> to vector<8x8xf32>
    %99 = arith.truncf %98 : vector<8x8xf32> to vector<8x8xbf16>
    %100 = vector.extract_strided_slice %38 {offsets = [0, 16], sizes = [8, 8], strides = [1, 1]} : vector<8x32xf32> to vector<8x8xf32>
    %101 = arith.truncf %100 : vector<8x8xf32> to vector<8x8xbf16>
    %cst_40 = arith.constant dense<0.000000e+00> : vector<8x8xf32>
    %102 = tpu.matmul %97, %99, %cst_40 {dimension_numbers = #tpu.dot_dimension_numbers<[1], [1], [0], [0], [0, 0, 1, 0], [], []>} : vector<8x8xbf16>, vector<8x8xbf16>, vector<8x8xf32> -> vector<8x8xf32>
    %103 = arith.addf %102, %7 : vector<8x8xf32>
    %cst_41 = arith.constant dense<0xFF800000> : vector<8xf32>
    %104 = vector.multi_reduction <maximumf>, %103, %cst_41 [1] : vector<8x8xf32> to vector<8xf32>
    %105 = vector.shape_cast %104 : vector<8xf32> to vector<8x1xf32>
    %106 = vector.broadcast %105 : vector<8x1xf32> to vector<8x8xf32>
    %107 = arith.subf %103, %106 : vector<8x8xf32>
    %108 = math.exp %107 : vector<8x8xf32>
    %cst_42 = arith.constant dense<0.000000e+00> : vector<8xf32>
    %109 = vector.multi_reduction <add>, %108, %cst_42 [1] : vector<8x8xf32> to vector<8xf32>
    %110 = vector.shape_cast %109 : vector<8xf32> to vector<8x1xf32>
    %111 = tpu.reciprocal %110 {approx = true} : vector<8x1xf32> -> vector<8x1xf32>
    %112 = vector.broadcast %111 : vector<8x1xf32> to vector<8x8xf32>
    %113 = arith.mulf %108, %112 : vector<8x8xf32>
    %114 = arith.truncf %113 : vector<8x8xf32> to vector<8x8xbf16>
    %cst_43 = arith.constant dense<0.000000e+00> : vector<8x8xf32>
    %115 = tpu.matmul %114, %101, %cst_43 {dimension_numbers = #tpu.dot_dimension_numbers<[1], [0], [0], [1], [0, 0, 1, 1], [], []>} : vector<8x8xbf16>, vector<8x8xbf16>, vector<8x8xf32> -> vector<8x8xf32>
    %116 = arith.truncf %115 : vector<8x8xf32> to vector<8x8xbf16>
    %c2 = arith.constant 2 : index
    %c0_44 = arith.constant 0 : index
    %c0_45 = arith.constant 0 : index
    %117 = vector.load %arg7[%c2, %c0_44, %c0_45] : memref<4x8x32xbf16, #tpu.memory_space<vmem>>, vector<1x8x32xbf16>
    %118 = vector.shape_cast %117 : vector<1x8x32xbf16> to vector<8x32xbf16>
    %cst_46 = arith.constant dense<0.000000e+00> : vector<8x32xf32>
    %119 = tpu.matmul %116, %118, %cst_46 {dimension_numbers = #tpu.dot_dimension_numbers<[1], [0], [0], [1], [0, 0, 1, 1], [], []>} : vector<8x8xbf16>, vector<8x32xbf16>, vector<8x32xf32> -> vector<8x32xf32>
    %120 = arith.addf %93, %119 : vector<8x32xf32>
    %121 = vector.extract_strided_slice %36 {offsets = [0, 24], sizes = [8, 8], strides = [1, 1]} : vector<8x32xf32> to vector<8x8xf32>
    %cst_47 = arith.constant 0.353553385 : f32
    %122 = vector.broadcast %cst_47 : f32 to vector<8x8xf32>
    %123 = arith.mulf %121, %122 : vector<8x8xf32>
    %124 = arith.truncf %123 : vector<8x8xf32> to vector<8x8xbf16>
    %125 = vector.extract_strided_slice %37 {offsets = [0, 24], sizes = [8, 8], strides = [1, 1]} : vector<8x32xf32> to vector<8x8xf32>
    %126 = arith.truncf %125 : vector<8x8xf32> to vector<8x8xbf16>
    %127 = vector.extract_strided_slice %38 {offsets = [0, 24], sizes = [8, 8], strides = [1, 1]} : vector<8x32xf32> to vector<8x8xf32>
    %128 = arith.truncf %127 : vector<8x8xf32> to vector<8x8xbf16>
    %cst_48 = arith.constant dense<0.000000e+00> : vector<8x8xf32>
    %129 = tpu.matmul %124, %126, %cst_48 {dimension_numbers = #tpu.dot_dimension_numbers<[1], [1], [0], [0], [0, 0, 1, 0], [], []>} : vector<8x8xbf16>, vector<8x8xbf16>, vector<8x8xf32> -> vector<8x8xf32>
    %130 = arith.addf %129, %7 : vector<8x8xf32>
    %cst_49 = arith.constant dense<0xFF800000> : vector<8xf32>
    %131 = vector.multi_reduction <maximumf>, %130, %cst_49 [1] : vector<8x8xf32> to vector<8xf32>
    %132 = vector.shape_cast %131 : vector<8xf32> to vector<8x1xf32>
    %133 = vector.broadcast %132 : vector<8x1xf32> to vector<8x8xf32>
    %134 = arith.subf %130, %133 : vector<8x8xf32>
    %135 = math.exp %134 : vector<8x8xf32>
    %cst_50 = arith.constant dense<0.000000e+00> : vector<8xf32>
    %136 = vector.multi_reduction <add>, %135, %cst_50 [1] : vector<8x8xf32> to vector<8xf32>
    %137 = vector.shape_cast %136 : vector<8xf32> to vector<8x1xf32>
    %138 = tpu.reciprocal %137 {approx = true} : vector<8x1xf32> -> vector<8x1xf32>
    %139 = vector.broadcast %138 : vector<8x1xf32> to vector<8x8xf32>
    %140 = arith.mulf %135, %139 : vector<8x8xf32>
    %141 = arith.truncf %140 : vector<8x8xf32> to vector<8x8xbf16>
    %cst_51 = arith.constant dense<0.000000e+00> : vector<8x8xf32>
    %142 = tpu.matmul %141, %128, %cst_51 {dimension_numbers = #tpu.dot_dimension_numbers<[1], [0], [0], [1], [0, 0, 1, 1], [], []>} : vector<8x8xbf16>, vector<8x8xbf16>, vector<8x8xf32> -> vector<8x8xf32>
    %143 = arith.truncf %142 : vector<8x8xf32> to vector<8x8xbf16>
    %c3 = arith.constant 3 : index
    %c0_52 = arith.constant 0 : index
    %c0_53 = arith.constant 0 : index
    %144 = vector.load %arg7[%c3, %c0_52, %c0_53] : memref<4x8x32xbf16, #tpu.memory_space<vmem>>, vector<1x8x32xbf16>
    %145 = vector.shape_cast %144 : vector<1x8x32xbf16> to vector<8x32xbf16>
    %cst_54 = arith.constant dense<0.000000e+00> : vector<8x32xf32>
    %146 = tpu.matmul %143, %145, %cst_54 {dimension_numbers = #tpu.dot_dimension_numbers<[1], [0], [0], [1], [0, 0, 1, 1], [], []>} : vector<8x8xbf16>, vector<8x32xbf16>, vector<8x32xf32> -> vector<8x32xf32>
    %147 = arith.addf %120, %146 : vector<8x32xf32>
    %148 = arith.addf %1, %147 : vector<8x32xf32>
    %c0_55 = arith.constant 0 : index
    %c0_56 = arith.constant 0 : index
    %149 = vector.load %arg8[%c0_55, %c0_56] : memref<1x32xf32, #tpu.memory_space<vmem>>, vector<1x32xf32>
    %150 = vector.broadcast %149 : vector<1x32xf32> to vector<8x32xf32>
    %151 = arith.addf %148, %150 : vector<8x32xf32>
    %c0_57 = arith.constant 0 : index
    %c0_58 = arith.constant 0 : index
    %152 = vector.load %arg9[%c0_57, %c0_58] : memref<1x32xf32, #tpu.memory_space<vmem>>, vector<1x32xf32>
    %c0_59 = arith.constant 0 : index
    %c0_60 = arith.constant 0 : index
    %153 = vector.load %arg10[%c0_59, %c0_60] : memref<1x32xf32, #tpu.memory_space<vmem>>, vector<1x32xf32>
    %cst_61 = arith.constant dense<0.000000e+00> : vector<8xf32>
    %154 = vector.multi_reduction <add>, %151, %cst_61 [1] : vector<8x32xf32> to vector<8xf32>
    %155 = vector.shape_cast %154 : vector<8xf32> to vector<8x1xf32>
    %cst_62 = arith.constant 3.200000e+01 : f32
    %156 = vector.broadcast %cst_62 : f32 to vector<8x1xf32>
    %157 = arith.divf %155, %156 : vector<8x1xf32>
    %158 = vector.broadcast %157 : vector<8x1xf32> to vector<8x32xf32>
    %159 = arith.subf %151, %158 : vector<8x32xf32>
    %160 = arith.mulf %159, %159 : vector<8x32xf32>
    %cst_63 = arith.constant dense<0.000000e+00> : vector<8xf32>
    %161 = vector.multi_reduction <add>, %160, %cst_63 [1] : vector<8x32xf32> to vector<8xf32>
    %162 = vector.shape_cast %161 : vector<8xf32> to vector<8x1xf32>
    %cst_64 = arith.constant 3.100000e+01 : f32
    %163 = vector.broadcast %cst_64 : f32 to vector<8x1xf32>
    %164 = arith.divf %162, %163 : vector<8x1xf32>
    %165 = math.sqrt %164 : vector<8x1xf32>
    %166 = vector.broadcast %152 : vector<1x32xf32> to vector<8x32xf32>
    %167 = arith.mulf %166, %159 : vector<8x32xf32>
    %cst_65 = arith.constant 9.99999997E-7 : f32
    %168 = vector.broadcast %cst_65 : f32 to vector<8x1xf32>
    %169 = arith.addf %165, %168 : vector<8x1xf32>
    %170 = vector.broadcast %169 : vector<8x1xf32> to vector<8x32xf32>
    %171 = arith.divf %167, %170 : vector<8x32xf32>
    %172 = vector.broadcast %153 : vector<1x32xf32> to vector<8x32xf32>
    %173 = arith.addf %171, %172 : vector<8x32xf32>
    %174 = arith.truncf %173 : vector<8x32xf32> to vector<8x32xbf16>
    %c0_66 = arith.constant 0 : index
    %c0_67 = arith.constant 0 : index
    %175 = vector.load %arg11[%c0_66, %c0_67] : memref<32x64xbf16, #tpu.memory_space<vmem>>, vector<32x64xbf16>
    %cst_68 = arith.constant dense<0.000000e+00> : vector<8x64xf32>
    %176 = tpu.matmul %174, %175, %cst_68 {dimension_numbers = #tpu.dot_dimension_numbers<[1], [0], [0], [1], [0, 0, 1, 1], [], []>} : vector<8x32xbf16>, vector<32x64xbf16>, vector<8x64xf32> -> vector<8x64xf32>
    %c0_69 = arith.constant 0 : index
    %c0_70 = arith.constant 0 : index
    %177 = vector.load %arg12[%c0_69, %c0_70] : memref<1x64xf32, #tpu.memory_space<vmem>>, vector<1x64xf32>
    %178 = vector.broadcast %177 : vector<1x64xf32> to vector<8x64xf32>
    %179 = arith.addf %176, %178 : vector<8x64xf32>
    %cst_71 = arith.constant 0.000000e+00 : f32
    %180 = vector.broadcast %cst_71 : f32 to vector<8x64xf32>
    %181 = arith.maximumf %179, %180 : vector<8x64xf32>
    %182 = arith.truncf %181 : vector<8x64xf32> to vector<8x64xbf16>
    %c0_72 = arith.constant 0 : index
    %c0_73 = arith.constant 0 : index
    %183 = vector.load %arg13[%c0_72, %c0_73] : memref<64x32xbf16, #tpu.memory_space<vmem>>, vector<64x32xbf16>
    %cst_74 = arith.constant dense<0.000000e+00> : vector<8x32xf32>
    %184 = tpu.matmul %182, %183, %cst_74 {dimension_numbers = #tpu.dot_dimension_numbers<[1], [0], [0], [1], [0, 0, 1, 1], [], []>} : vector<8x64xbf16>, vector<64x32xbf16>, vector<8x32xf32> -> vector<8x32xf32>
    %c0_75 = arith.constant 0 : index
    %c0_76 = arith.constant 0 : index
    %185 = vector.load %arg14[%c0_75, %c0_76] : memref<1x32xf32, #tpu.memory_space<vmem>>, vector<1x32xf32>
    %186 = vector.broadcast %185 : vector<1x32xf32> to vector<8x32xf32>
    %187 = arith.addf %184, %186 : vector<8x32xf32>
    %188 = arith.addf %151, %187 : vector<8x32xf32>
    %c0_77 = arith.constant 0 : index
    %c0_78 = arith.constant 0 : index
    %c0_79 = arith.constant 0 : index
    %189 = vector.load %arg15[%c0_77, %c0_78, %c0_79] : memref<1x8x32xf32, #tpu.memory_space<vmem>>, vector<1x8x32xf32>
    %190 = vector.shape_cast %189 : vector<1x8x32xf32> to vector<8x32xf32>
    %191 = vector.shape_cast %188 : vector<8x32xf32> to vector<1x8x32xf32>
    tpu.vector_store %arg15[%c0_77, %c0_78, %c0_79], %191 {strides = array<i32>} : memref<1x8x32xf32, #tpu.memory_space<vmem>>, vector<1x8x32xf32>,
    return
  }
  func.func @transform_0(%arg0: i32) -> (i32, i32, i32) {
    %c0_i32 = arith.constant 0 : i32
    %c0_i32_0 = arith.constant 0 : i32
    %c0_i32_1 = arith.constant 0 : i32
    return %arg0, %c0_i32, %c0_i32_0 : i32, i32, i32
  }
  func.func @transform_1(%arg0: i32) -> (i32, i32, i32, i32) {
    %c0_i32 = arith.constant 0 : i32
    %c0_i32_0 = arith.constant 0 : i32
    %c0_i32_1 = arith.constant 0 : i32
    %c0_i32_2 = arith.constant 0 : i32
    return %arg0, %c0_i32, %c0_i32_0, %c0_i32_1 : i32, i32, i32, i32
  }
  func.func @transform_2(%arg0: i32) -> (i32, i32) {
    %c0_i32 = arith.constant 0 : i32
    %c0_i32_0 = arith.constant 0 : i32
    %c0_i32_1 = arith.constant 0 : i32
    return %c0_i32, %c0_i32_0 : i32, i32
  }
  func.func @transform_3(%arg0: i32) -> (i32, i32) {
    %c0_i32 = arith.constant 0 : i32
    %c0_i32_0 = arith.constant 0 : i32
    %c0_i32_1 = arith.constant 0 : i32
    return %c0_i32, %c0_i32_0 : i32, i32
  }
  func.func @transform_4(%arg0: i32) -> (i32, i32) {
    %c0_i32 = arith.constant 0 : i32
    %c0_i32_0 = arith.constant 0 : i32
    %c0_i32_1 = arith.constant 0 : i32
    return %c0_i32, %c0_i32_0 : i32, i32
  }
  func.func @transform_5(%arg0: i32) -> (i32, i32) {
    %c0_i32 = arith.constant 0 : i32
    %c0_i32_0 = arith.constant 0 : i32
    %c0_i32_1 = arith.constant 0 : i32
    return %c0_i32, %c0_i32_0 : i32, i32
  }
  func.func @transform_6(%arg0: i32) -> (i32, i32, i32) {
    %c0_i32 = arith.constant 0 : i32
    %c0_i32_0 = arith.constant 0 : i32
    %c0_i32_1 = arith.constant 0 : i32
    %c0_i32_2 = arith.constant 0 : i32
    return %c0_i32, %c0_i32_0, %c0_i32_1 : i32, i32, i32
  }
  func.func @transform_7(%arg0: i32) -> (i32, i32) {
    %c0_i32 = arith.constant 0 : i32
    %c0_i32_0 = arith.constant 0 : i32
    %c0_i32_1 = arith.constant 0 : i32
    return %c0_i32, %c0_i32_0 : i32, i32
  }
  func.func @transform_8(%arg0: i32) -> (i32, i32) {
    %c0_i32 = arith.constant 0 : i32
    %c0_i32_0 = arith.constant 0 : i32
    %c0_i32_1 = arith.constant 0 : i32
    return %c0_i32, %c0_i32_0 : i32, i32
  }
  func.func @transform_9(%arg0: i32) -> (i32, i32) {
    %c0_i32 = arith.constant 0 : i32
    %c0_i32_0 = arith.constant 0 : i32
    %c0_i32_1 = arith.constant 0 : i32
    return %c0_i32, %c0_i32_0 : i32, i32
  }
  func.func @transform_10(%arg0: i32) -> (i32, i32) {
    %c0_i32 = arith.constant 0 : i32
    %c0_i32_0 = arith.constant 0 : i32
    %c0_i32_1 = arith.constant 0 : i32
    return %c0_i32, %c0_i32_0 : i32, i32
  }
  func.func @transform_11(%arg0: i32) -> (i32, i32) {
    %c0_i32 = arith.constant 0 : i32
    %c0_i32_0 = arith.constant 0 : i32
    %c0_i32_1 = arith.constant 0 : i32
    return %c0_i32, %c0_i32_0 : i32, i32
  }
  func.func @transform_12(%arg0: i32) -> (i32, i32) {
    %c0_i32 = arith.constant 0 : i32
    %c0_i32_0 = arith.constant 0 : i32
    %c0_i32_1 = arith.constant 0 : i32
    return %c0_i32, %c0_i32_0 : i32, i32
  }
  func.func @transform_13(%arg0: i32) -> (i32, i32) {
    %c0_i32 = arith.constant 0 : i32
    %c0_i32_0 = arith.constant 0 : i32
    %c0_i32_1 = arith.constant 0 : i32
    return %c0_i32, %c0_i32_0 : i32, i32
  }
  func.func @transform_14(%arg0: i32) -> (i32, i32, i32) {
    %c0_i32 = arith.constant 0 : i32
    %c0_i32_0 = arith.constant 0 : i32
    %c0_i32_1 = arith.constant 0 : i32
    return %arg0, %c0_i32, %c0_i32_0 : i32, i32, i32
  }
}

module attributes {stable_mosaic.version = 11 : i64} {
  func.func @_last_layer_kernel(%arg0: i32, %arg1: memref<1x8x32xf32, #tpu.memory_space<vmem>>, %arg2: memref<1x1x8x8xf32, #tpu.memory_space<vmem>>, %arg3: memref<1x32xf32, #tpu.memory_space<vmem>>, %arg4: memref<1x32xf32, #tpu.memory_space<vmem>>, %arg5: memref<32x96xbf16, #tpu.memory_space<vmem>>, %arg6: memref<1x96xf32, #tpu.memory_space<vmem>>, %arg7: memref<4x8x32xbf16, #tpu.memory_space<vmem>>, %arg8: memref<1x32xf32, #tpu.memory_space<vmem>>, %arg9: memref<1x32xf32, #tpu.memory_space<vmem>>, %arg10: memref<1x32xf32, #tpu.memory_space<vmem>>, %arg11: memref<32x64xbf16, #tpu.memory_space<vmem>>, %arg12: memref<1x64xf32, #tpu.memory_space<vmem>>, %arg13: memref<64x32xbf16, #tpu.memory_space<vmem>>, %arg14: memref<1x32xf32, #tpu.memory_space<vmem>>, %arg15: memref<1x32xf32, #tpu.memory_space<vmem>>, %arg16: memref<1x32xf32, #tpu.memory_space<vmem>>, %arg17: memref<1x8x32xf32, #tpu.memory_space<vmem>>, %arg18: memref<1x4x8x8xf32, #tpu.memory_space<vmem>>) attributes {dimension_semantics = [#tpu.dimension_semantics<parallel>], iteration_bounds = array<i64: 2>, scalar_prefetch = 0 : i64, scratch_operands = 0 : i64, tpu.core_type = #tpu.core_type<tc>, window_params = [{transform_indices = @transform_0, window_bounds = array<i64: 1, 8, 32>}, {transform_indices = @transform_1, window_bounds = array<i64: 1, 1, 8, 8>}, {pipeline_mode = #tpu.pipeline_mode<synchronous>, transform_indices = @transform_2, window_bounds = array<i64: 1, 32>}, {pipeline_mode = #tpu.pipeline_mode<synchronous>, transform_indices = @transform_3, window_bounds = array<i64: 1, 32>}, {pipeline_mode = #tpu.pipeline_mode<synchronous>, transform_indices = @transform_4, window_bounds = array<i64: 32, 96>}, {pipeline_mode = #tpu.pipeline_mode<synchronous>, transform_indices = @transform_5, window_bounds = array<i64: 1, 96>}, {pipeline_mode = #tpu.pipeline_mode<synchronous>, transform_indices = @transform_6, window_bounds = array<i64: 4, 8, 32>}, {pipeline_mode = #tpu.pipeline_mode<synchronous>, transform_indices = @transform_7, window_bounds = array<i64: 1, 32>}, {pipeline_mode = #tpu.pipeline_mode<synchronous>, transform_indices = @transform_8, window_bounds = array<i64: 1, 32>}, {pipeline_mode = #tpu.pipeline_mode<synchronous>, transform_indices = @transform_9, window_bounds = array<i64: 1, 32>}, {pipeline_mode = #tpu.pipeline_mode<synchronous>, transform_indices = @transform_10, window_bounds = array<i64: 32, 64>}, {pipeline_mode = #tpu.pipeline_mode<synchronous>, transform_indices = @transform_11, window_bounds = array<i64: 1, 64>}, {pipeline_mode = #tpu.pipeline_mode<synchronous>, transform_indices = @transform_12, window_bounds = array<i64: 64, 32>}, {pipeline_mode = #tpu.pipeline_mode<synchronous>, transform_indices = @transform_13, window_bounds = array<i64: 1, 32>}, {pipeline_mode = #tpu.pipeline_mode<synchronous>, transform_indices = @transform_14, window_bounds = array<i64: 1, 32>}, {pipeline_mode = #tpu.pipeline_mode<synchronous>, transform_indices = @transform_15, window_bounds = array<i64: 1, 32>}, {transform_indices = @transform_16, window_bounds = array<i64: 1, 8, 32>}, {transform_indices = @transform_17, window_bounds = array<i64: 1, 4, 8, 8>}]} {
    %c0 = arith.constant 0 : index
    %c0_0 = arith.constant 0 : index
    %c0_1 = arith.constant 0 : index
    %0 = vector.load %arg1[%c0, %c0_0, %c0_1] : memref<1x8x32xf32, #tpu.memory_space<vmem>>, vector<1x8x32xf32>
    %1 = vector.shape_cast %0 : vector<1x8x32xf32> to vector<8x32xf32>
    %c0_2 = arith.constant 0 : index
    %c0_3 = arith.constant 0 : index
    %c0_4 = arith.constant 0 : index
    %c0_5 = arith.constant 0 : index
    %2 = vector.load %arg2[%c0_2, %c0_3, %c0_4, %c0_5] : memref<1x1x8x8xf32, #tpu.memory_space<vmem>>, vector<1x1x8x8xf32>
    %3 = vector.shape_cast %2 : vector<1x1x8x8xf32> to vector<8x8xf32>
    %cst = arith.constant 1.000000e+00 : f32
    %4 = vector.broadcast %cst : f32 to vector<8x8xf32>
    %5 = arith.subf %4, %3 : vector<8x8xf32>
    %cst_6 = arith.constant -1.000000e+09 : f32
    %6 = vector.broadcast %cst_6 : f32 to vector<8x8xf32>
    %7 = arith.mulf %5, %6 : vector<8x8xf32>
    %c0_7 = arith.constant 0 : index
    %c0_8 = arith.constant 0 : index
    %8 = vector.load %arg3[%c0_7, %c0_8] : memref<1x32xf32, #tpu.memory_space<vmem>>, vector<1x32xf32>
    %c0_9 = arith.constant 0 : index
    %c0_10 = arith.constant 0 : index
    %9 = vector.load %arg4[%c0_9, %c0_10] : memref<1x32xf32, #tpu.memory_space<vmem>>, vector<1x32xf32>
    %cst_11 = arith.constant dense<0.000000e+00> : vector<8xf32>
    %10 = vector.multi_reduction <add>, %1, %cst_11 [1] : vector<8x32xf32> to vector<8xf32>
    %11 = vector.shape_cast %10 : vector<8xf32> to vector<8x1xf32>
    %cst_12 = arith.constant 3.200000e+01 : f32
    %12 = vector.broadcast %cst_12 : f32 to vector<8x1xf32>
    %13 = arith.divf %11, %12 : vector<8x1xf32>
    %14 = vector.broadcast %13 : vector<8x1xf32> to vector<8x32xf32>
    %15 = arith.subf %1, %14 : vector<8x32xf32>
    %16 = arith.mulf %15, %15 : vector<8x32xf32>
    %cst_13 = arith.constant dense<0.000000e+00> : vector<8xf32>
    %17 = vector.multi_reduction <add>, %16, %cst_13 [1] : vector<8x32xf32> to vector<8xf32>
    %18 = vector.shape_cast %17 : vector<8xf32> to vector<8x1xf32>
    %cst_14 = arith.constant 3.100000e+01 : f32
    %19 = vector.broadcast %cst_14 : f32 to vector<8x1xf32>
    %20 = arith.divf %18, %19 : vector<8x1xf32>
    %21 = math.sqrt %20 : vector<8x1xf32>
    %22 = vector.broadcast %8 : vector<1x32xf32> to vector<8x32xf32>
    %23 = arith.mulf %22, %15 : vector<8x32xf32>
    %cst_15 = arith.constant 9.99999997E-7 : f32
    %24 = vector.broadcast %cst_15 : f32 to vector<8x1xf32>
    %25 = arith.addf %21, %24 : vector<8x1xf32>
    %26 = vector.broadcast %25 : vector<8x1xf32> to vector<8x32xf32>
    %27 = arith.divf %23, %26 : vector<8x32xf32>
    %28 = vector.broadcast %9 : vector<1x32xf32> to vector<8x32xf32>
    %29 = arith.addf %27, %28 : vector<8x32xf32>
    %30 = arith.truncf %29 : vector<8x32xf32> to vector<8x32xbf16>
    %c0_16 = arith.constant 0 : index
    %c0_17 = arith.constant 0 : index
    %31 = vector.load %arg5[%c0_16, %c0_17] : memref<32x96xbf16, #tpu.memory_space<vmem>>, vector<32x96xbf16>
    %cst_18 = arith.constant dense<0.000000e+00> : vector<8x96xf32>
    %32 = tpu.matmul %30, %31, %cst_18 {dimension_numbers = #tpu.dot_dimension_numbers<[1], [0], [0], [1], [0, 0, 1, 1], [], []>} : vector<8x32xbf16>, vector<32x96xbf16>, vector<8x96xf32> -> vector<8x96xf32>
    %c0_19 = arith.constant 0 : index
    %c0_20 = arith.constant 0 : index
    %33 = vector.load %arg6[%c0_19, %c0_20] : memref<1x96xf32, #tpu.memory_space<vmem>>, vector<1x96xf32>
    %34 = vector.broadcast %33 : vector<1x96xf32> to vector<8x96xf32>
    %35 = arith.addf %32, %34 : vector<8x96xf32>
    %36 = vector.extract_strided_slice %35 {offsets = [0, 0], sizes = [8, 32], strides = [1, 1]} : vector<8x96xf32> to vector<8x32xf32>
    %37 = vector.extract_strided_slice %35 {offsets = [0, 32], sizes = [8, 32], strides = [1, 1]} : vector<8x96xf32> to vector<8x32xf32>
    %38 = vector.extract_strided_slice %35 {offsets = [0, 64], sizes = [8, 32], strides = [1, 1]} : vector<8x96xf32> to vector<8x32xf32>
    %cst_21 = arith.constant 0.000000e+00 : f32
    %39 = vector.broadcast %cst_21 : f32 to vector<8x32xf32>
    %40 = vector.extract_strided_slice %36 {offsets = [0, 0], sizes = [8, 8], strides = [1, 1]} : vector<8x32xf32> to vector<8x8xf32>
    %cst_22 = arith.constant 0.353553385 : f32
    %41 = vector.broadcast %cst_22 : f32 to vector<8x8xf32>
    %42 = arith.mulf %40, %41 : vector<8x8xf32>
    %43 = arith.truncf %42 : vector<8x8xf32> to vector<8x8xbf16>
    %44 = vector.extract_strided_slice %37 {offsets = [0, 0], sizes = [8, 8], strides = [1, 1]} : vector<8x32xf32> to vector<8x8xf32>
    %45 = arith.truncf %44 : vector<8x8xf32> to vector<8x8xbf16>
    %46 = vector.extract_strided_slice %38 {offsets = [0, 0], sizes = [8, 8], strides = [1, 1]} : vector<8x32xf32> to vector<8x8xf32>
    %47 = arith.truncf %46 : vector<8x8xf32> to vector<8x8xbf16>
    %cst_23 = arith.constant dense<0.000000e+00> : vector<8x8xf32>
    %48 = tpu.matmul %43, %45, %cst_23 {dimension_numbers = #tpu.dot_dimension_numbers<[1], [1], [0], [0], [0, 0, 1, 0], [], []>} : vector<8x8xbf16>, vector<8x8xbf16>, vector<8x8xf32> -> vector<8x8xf32>
    %49 = arith.addf %48, %7 : vector<8x8xf32>
    %cst_24 = arith.constant dense<0xFF800000> : vector<8xf32>
    %50 = vector.multi_reduction <maximumf>, %49, %cst_24 [1] : vector<8x8xf32> to vector<8xf32>
    %51 = vector.shape_cast %50 : vector<8xf32> to vector<8x1xf32>
    %52 = vector.broadcast %51 : vector<8x1xf32> to vector<8x8xf32>
    %53 = arith.subf %49, %52 : vector<8x8xf32>
    %54 = math.exp %53 : vector<8x8xf32>
    %cst_25 = arith.constant dense<0.000000e+00> : vector<8xf32>
    %55 = vector.multi_reduction <add>, %54, %cst_25 [1] : vector<8x8xf32> to vector<8xf32>
    %56 = vector.shape_cast %55 : vector<8xf32> to vector<8x1xf32>
    %57 = tpu.reciprocal %56 {approx = true} : vector<8x1xf32> -> vector<8x1xf32>
    %58 = vector.broadcast %57 : vector<8x1xf32> to vector<8x8xf32>
    %59 = arith.mulf %54, %58 : vector<8x8xf32>
    %60 = arith.truncf %59 : vector<8x8xf32> to vector<8x8xbf16>
    %cst_26 = arith.constant dense<0.000000e+00> : vector<8x8xf32>
    %61 = tpu.matmul %60, %47, %cst_26 {dimension_numbers = #tpu.dot_dimension_numbers<[1], [0], [0], [1], [0, 0, 1, 1], [], []>} : vector<8x8xbf16>, vector<8x8xbf16>, vector<8x8xf32> -> vector<8x8xf32>
    %62 = arith.truncf %61 : vector<8x8xf32> to vector<8x8xbf16>
    %c0_27 = arith.constant 0 : index
    %c0_28 = arith.constant 0 : index
    %c0_29 = arith.constant 0 : index
    %63 = vector.load %arg7[%c0_27, %c0_28, %c0_29] : memref<4x8x32xbf16, #tpu.memory_space<vmem>>, vector<1x8x32xbf16>
    %64 = vector.shape_cast %63 : vector<1x8x32xbf16> to vector<8x32xbf16>
    %cst_30 = arith.constant dense<0.000000e+00> : vector<8x32xf32>
    %65 = tpu.matmul %62, %64, %cst_30 {dimension_numbers = #tpu.dot_dimension_numbers<[1], [0], [0], [1], [0, 0, 1, 1], [], []>} : vector<8x8xbf16>, vector<8x32xbf16>, vector<8x32xf32> -> vector<8x32xf32>
    %66 = arith.addf %39, %65 : vector<8x32xf32>
    %67 = vector.extract_strided_slice %36 {offsets = [0, 8], sizes = [8, 8], strides = [1, 1]} : vector<8x32xf32> to vector<8x8xf32>
    %cst_31 = arith.constant 0.353553385 : f32
    %68 = vector.broadcast %cst_31 : f32 to vector<8x8xf32>
    %69 = arith.mulf %67, %68 : vector<8x8xf32>
    %70 = arith.truncf %69 : vector<8x8xf32> to vector<8x8xbf16>
    %71 = vector.extract_strided_slice %37 {offsets = [0, 8], sizes = [8, 8], strides = [1, 1]} : vector<8x32xf32> to vector<8x8xf32>
    %72 = arith.truncf %71 : vector<8x8xf32> to vector<8x8xbf16>
    %73 = vector.extract_strided_slice %38 {offsets = [0, 8], sizes = [8, 8], strides = [1, 1]} : vector<8x32xf32> to vector<8x8xf32>
    %74 = arith.truncf %73 : vector<8x8xf32> to vector<8x8xbf16>
    %cst_32 = arith.constant dense<0.000000e+00> : vector<8x8xf32>
    %75 = tpu.matmul %70, %72, %cst_32 {dimension_numbers = #tpu.dot_dimension_numbers<[1], [1], [0], [0], [0, 0, 1, 0], [], []>} : vector<8x8xbf16>, vector<8x8xbf16>, vector<8x8xf32> -> vector<8x8xf32>
    %76 = arith.addf %75, %7 : vector<8x8xf32>
    %cst_33 = arith.constant dense<0xFF800000> : vector<8xf32>
    %77 = vector.multi_reduction <maximumf>, %76, %cst_33 [1] : vector<8x8xf32> to vector<8xf32>
    %78 = vector.shape_cast %77 : vector<8xf32> to vector<8x1xf32>
    %79 = vector.broadcast %78 : vector<8x1xf32> to vector<8x8xf32>
    %80 = arith.subf %76, %79 : vector<8x8xf32>
    %81 = math.exp %80 : vector<8x8xf32>
    %cst_34 = arith.constant dense<0.000000e+00> : vector<8xf32>
    %82 = vector.multi_reduction <add>, %81, %cst_34 [1] : vector<8x8xf32> to vector<8xf32>
    %83 = vector.shape_cast %82 : vector<8xf32> to vector<8x1xf32>
    %84 = tpu.reciprocal %83 {approx = true} : vector<8x1xf32> -> vector<8x1xf32>
    %85 = vector.broadcast %84 : vector<8x1xf32> to vector<8x8xf32>
    %86 = arith.mulf %81, %85 : vector<8x8xf32>
    %87 = arith.truncf %86 : vector<8x8xf32> to vector<8x8xbf16>
    %cst_35 = arith.constant dense<0.000000e+00> : vector<8x8xf32>
    %88 = tpu.matmul %87, %74, %cst_35 {dimension_numbers = #tpu.dot_dimension_numbers<[1], [0], [0], [1], [0, 0, 1, 1], [], []>} : vector<8x8xbf16>, vector<8x8xbf16>, vector<8x8xf32> -> vector<8x8xf32>
    %89 = arith.truncf %88 : vector<8x8xf32> to vector<8x8xbf16>
    %c1 = arith.constant 1 : index
    %c0_36 = arith.constant 0 : index
    %c0_37 = arith.constant 0 : index
    %90 = vector.load %arg7[%c1, %c0_36, %c0_37] : memref<4x8x32xbf16, #tpu.memory_space<vmem>>, vector<1x8x32xbf16>
    %91 = vector.shape_cast %90 : vector<1x8x32xbf16> to vector<8x32xbf16>
    %cst_38 = arith.constant dense<0.000000e+00> : vector<8x32xf32>
    %92 = tpu.matmul %89, %91, %cst_38 {dimension_numbers = #tpu.dot_dimension_numbers<[1], [0], [0], [1], [0, 0, 1, 1], [], []>} : vector<8x8xbf16>, vector<8x32xbf16>, vector<8x32xf32> -> vector<8x32xf32>
    %93 = arith.addf %66, %92 : vector<8x32xf32>
    %94 = vector.extract_strided_slice %36 {offsets = [0, 16], sizes = [8, 8], strides = [1, 1]} : vector<8x32xf32> to vector<8x8xf32>
    %cst_39 = arith.constant 0.353553385 : f32
    %95 = vector.broadcast %cst_39 : f32 to vector<8x8xf32>
    %96 = arith.mulf %94, %95 : vector<8x8xf32>
    %97 = arith.truncf %96 : vector<8x8xf32> to vector<8x8xbf16>
    %98 = vector.extract_strided_slice %37 {offsets = [0, 16], sizes = [8, 8], strides = [1, 1]} : vector<8x32xf32> to vector<8x8xf32>
    %99 = arith.truncf %98 : vector<8x8xf32> to vector<8x8xbf16>
    %100 = vector.extract_strided_slice %38 {offsets = [0, 16], sizes = [8, 8], strides = [1, 1]} : vector<8x32xf32> to vector<8x8xf32>
    %101 = arith.truncf %100 : vector<8x8xf32> to vector<8x8xbf16>
    %cst_40 = arith.constant dense<0.000000e+00> : vector<8x8xf32>
    %102 = tpu.matmul %97, %99, %cst_40 {dimension_numbers = #tpu.dot_dimension_numbers<[1], [1], [0], [0], [0, 0, 1, 0], [], []>} : vector<8x8xbf16>, vector<8x8xbf16>, vector<8x8xf32> -> vector<8x8xf32>
    %103 = arith.addf %102, %7 : vector<8x8xf32>
    %cst_41 = arith.constant dense<0xFF800000> : vector<8xf32>
    %104 = vector.multi_reduction <maximumf>, %103, %cst_41 [1] : vector<8x8xf32> to vector<8xf32>
    %105 = vector.shape_cast %104 : vector<8xf32> to vector<8x1xf32>
    %106 = vector.broadcast %105 : vector<8x1xf32> to vector<8x8xf32>
    %107 = arith.subf %103, %106 : vector<8x8xf32>
    %108 = math.exp %107 : vector<8x8xf32>
    %cst_42 = arith.constant dense<0.000000e+00> : vector<8xf32>
    %109 = vector.multi_reduction <add>, %108, %cst_42 [1] : vector<8x8xf32> to vector<8xf32>
    %110 = vector.shape_cast %109 : vector<8xf32> to vector<8x1xf32>
    %111 = tpu.reciprocal %110 {approx = true} : vector<8x1xf32> -> vector<8x1xf32>
    %112 = vector.broadcast %111 : vector<8x1xf32> to vector<8x8xf32>
    %113 = arith.mulf %108, %112 : vector<8x8xf32>
    %114 = arith.truncf %113 : vector<8x8xf32> to vector<8x8xbf16>
    %cst_43 = arith.constant dense<0.000000e+00> : vector<8x8xf32>
    %115 = tpu.matmul %114, %101, %cst_43 {dimension_numbers = #tpu.dot_dimension_numbers<[1], [0], [0], [1], [0, 0, 1, 1], [], []>} : vector<8x8xbf16>, vector<8x8xbf16>, vector<8x8xf32> -> vector<8x8xf32>
    %116 = arith.truncf %115 : vector<8x8xf32> to vector<8x8xbf16>
    %c2 = arith.constant 2 : index
    %c0_44 = arith.constant 0 : index
    %c0_45 = arith.constant 0 : index
    %117 = vector.load %arg7[%c2, %c0_44, %c0_45] : memref<4x8x32xbf16, #tpu.memory_space<vmem>>, vector<1x8x32xbf16>
    %118 = vector.shape_cast %117 : vector<1x8x32xbf16> to vector<8x32xbf16>
    %cst_46 = arith.constant dense<0.000000e+00> : vector<8x32xf32>
    %119 = tpu.matmul %116, %118, %cst_46 {dimension_numbers = #tpu.dot_dimension_numbers<[1], [0], [0], [1], [0, 0, 1, 1], [], []>} : vector<8x8xbf16>, vector<8x32xbf16>, vector<8x32xf32> -> vector<8x32xf32>
    %120 = arith.addf %93, %119 : vector<8x32xf32>
    %121 = vector.extract_strided_slice %36 {offsets = [0, 24], sizes = [8, 8], strides = [1, 1]} : vector<8x32xf32> to vector<8x8xf32>
    %cst_47 = arith.constant 0.353553385 : f32
    %122 = vector.broadcast %cst_47 : f32 to vector<8x8xf32>
    %123 = arith.mulf %121, %122 : vector<8x8xf32>
    %124 = arith.truncf %123 : vector<8x8xf32> to vector<8x8xbf16>
    %125 = vector.extract_strided_slice %37 {offsets = [0, 24], sizes = [8, 8], strides = [1, 1]} : vector<8x32xf32> to vector<8x8xf32>
    %126 = arith.truncf %125 : vector<8x8xf32> to vector<8x8xbf16>
    %127 = vector.extract_strided_slice %38 {offsets = [0, 24], sizes = [8, 8], strides = [1, 1]} : vector<8x32xf32> to vector<8x8xf32>
    %128 = arith.truncf %127 : vector<8x8xf32> to vector<8x8xbf16>
    %cst_48 = arith.constant dense<0.000000e+00> : vector<8x8xf32>
    %129 = tpu.matmul %124, %126, %cst_48 {dimension_numbers = #tpu.dot_dimension_numbers<[1], [1], [0], [0], [0, 0, 1, 0], [], []>} : vector<8x8xbf16>, vector<8x8xbf16>, vector<8x8xf32> -> vector<8x8xf32>
    %130 = arith.addf %129, %7 : vector<8x8xf32>
    %cst_49 = arith.constant dense<0xFF800000> : vector<8xf32>
    %131 = vector.multi_reduction <maximumf>, %130, %cst_49 [1] : vector<8x8xf32> to vector<8xf32>
    %132 = vector.shape_cast %131 : vector<8xf32> to vector<8x1xf32>
    %133 = vector.broadcast %132 : vector<8x1xf32> to vector<8x8xf32>
    %134 = arith.subf %130, %133 : vector<8x8xf32>
    %135 = math.exp %134 : vector<8x8xf32>
    %cst_50 = arith.constant dense<0.000000e+00> : vector<8xf32>
    %136 = vector.multi_reduction <add>, %135, %cst_50 [1] : vector<8x8xf32> to vector<8xf32>
    %137 = vector.shape_cast %136 : vector<8xf32> to vector<8x1xf32>
    %138 = tpu.reciprocal %137 {approx = true} : vector<8x1xf32> -> vector<8x1xf32>
    %139 = vector.broadcast %138 : vector<8x1xf32> to vector<8x8xf32>
    %140 = arith.mulf %135, %139 : vector<8x8xf32>
    %141 = arith.truncf %140 : vector<8x8xf32> to vector<8x8xbf16>
    %cst_51 = arith.constant dense<0.000000e+00> : vector<8x8xf32>
    %142 = tpu.matmul %141, %128, %cst_51 {dimension_numbers = #tpu.dot_dimension_numbers<[1], [0], [0], [1], [0, 0, 1, 1], [], []>} : vector<8x8xbf16>, vector<8x8xbf16>, vector<8x8xf32> -> vector<8x8xf32>
    %143 = arith.truncf %142 : vector<8x8xf32> to vector<8x8xbf16>
    %c3 = arith.constant 3 : index
    %c0_52 = arith.constant 0 : index
    %c0_53 = arith.constant 0 : index
    %144 = vector.load %arg7[%c3, %c0_52, %c0_53] : memref<4x8x32xbf16, #tpu.memory_space<vmem>>, vector<1x8x32xbf16>
    %145 = vector.shape_cast %144 : vector<1x8x32xbf16> to vector<8x32xbf16>
    %cst_54 = arith.constant dense<0.000000e+00> : vector<8x32xf32>
    %146 = tpu.matmul %143, %145, %cst_54 {dimension_numbers = #tpu.dot_dimension_numbers<[1], [0], [0], [1], [0, 0, 1, 1], [], []>} : vector<8x8xbf16>, vector<8x32xbf16>, vector<8x32xf32> -> vector<8x32xf32>
    %147 = arith.addf %120, %146 : vector<8x32xf32>
    %148 = arith.addf %1, %147 : vector<8x32xf32>
    %c0_55 = arith.constant 0 : index
    %c0_56 = arith.constant 0 : index
    %149 = vector.load %arg8[%c0_55, %c0_56] : memref<1x32xf32, #tpu.memory_space<vmem>>, vector<1x32xf32>
    %150 = vector.broadcast %149 : vector<1x32xf32> to vector<8x32xf32>
    %151 = arith.addf %148, %150 : vector<8x32xf32>
    %c0_57 = arith.constant 0 : index
    %c0_58 = arith.constant 0 : index
    %152 = vector.load %arg9[%c0_57, %c0_58] : memref<1x32xf32, #tpu.memory_space<vmem>>, vector<1x32xf32>
    %c0_59 = arith.constant 0 : index
    %c0_60 = arith.constant 0 : index
    %153 = vector.load %arg10[%c0_59, %c0_60] : memref<1x32xf32, #tpu.memory_space<vmem>>, vector<1x32xf32>
    %cst_61 = arith.constant dense<0.000000e+00> : vector<8xf32>
    %154 = vector.multi_reduction <add>, %151, %cst_61 [1] : vector<8x32xf32> to vector<8xf32>
    %155 = vector.shape_cast %154 : vector<8xf32> to vector<8x1xf32>
    %cst_62 = arith.constant 3.200000e+01 : f32
    %156 = vector.broadcast %cst_62 : f32 to vector<8x1xf32>
    %157 = arith.divf %155, %156 : vector<8x1xf32>
    %158 = vector.broadcast %157 : vector<8x1xf32> to vector<8x32xf32>
    %159 = arith.subf %151, %158 : vector<8x32xf32>
    %160 = arith.mulf %159, %159 : vector<8x32xf32>
    %cst_63 = arith.constant dense<0.000000e+00> : vector<8xf32>
    %161 = vector.multi_reduction <add>, %160, %cst_63 [1] : vector<8x32xf32> to vector<8xf32>
    %162 = vector.shape_cast %161 : vector<8xf32> to vector<8x1xf32>
    %cst_64 = arith.constant 3.100000e+01 : f32
    %163 = vector.broadcast %cst_64 : f32 to vector<8x1xf32>
    %164 = arith.divf %162, %163 : vector<8x1xf32>
    %165 = math.sqrt %164 : vector<8x1xf32>
    %166 = vector.broadcast %152 : vector<1x32xf32> to vector<8x32xf32>
    %167 = arith.mulf %166, %159 : vector<8x32xf32>
    %cst_65 = arith.constant 9.99999997E-7 : f32
    %168 = vector.broadcast %cst_65 : f32 to vector<8x1xf32>
    %169 = arith.addf %165, %168 : vector<8x1xf32>
    %170 = vector.broadcast %169 : vector<8x1xf32> to vector<8x32xf32>
    %171 = arith.divf %167, %170 : vector<8x32xf32>
    %172 = vector.broadcast %153 : vector<1x32xf32> to vector<8x32xf32>
    %173 = arith.addf %171, %172 : vector<8x32xf32>
    %174 = arith.truncf %173 : vector<8x32xf32> to vector<8x32xbf16>
    %c0_66 = arith.constant 0 : index
    %c0_67 = arith.constant 0 : index
    %175 = vector.load %arg11[%c0_66, %c0_67] : memref<32x64xbf16, #tpu.memory_space<vmem>>, vector<32x64xbf16>
    %cst_68 = arith.constant dense<0.000000e+00> : vector<8x64xf32>
    %176 = tpu.matmul %174, %175, %cst_68 {dimension_numbers = #tpu.dot_dimension_numbers<[1], [0], [0], [1], [0, 0, 1, 1], [], []>} : vector<8x32xbf16>, vector<32x64xbf16>, vector<8x64xf32> -> vector<8x64xf32>
    %c0_69 = arith.constant 0 : index
    %c0_70 = arith.constant 0 : index
    %177 = vector.load %arg12[%c0_69, %c0_70] : memref<1x64xf32, #tpu.memory_space<vmem>>, vector<1x64xf32>
    %178 = vector.broadcast %177 : vector<1x64xf32> to vector<8x64xf32>
    %179 = arith.addf %176, %178 : vector<8x64xf32>
    %cst_71 = arith.constant 0.000000e+00 : f32
    %180 = vector.broadcast %cst_71 : f32 to vector<8x64xf32>
    %181 = arith.maximumf %179, %180 : vector<8x64xf32>
    %182 = arith.truncf %181 : vector<8x64xf32> to vector<8x64xbf16>
    %c0_72 = arith.constant 0 : index
    %c0_73 = arith.constant 0 : index
    %183 = vector.load %arg13[%c0_72, %c0_73] : memref<64x32xbf16, #tpu.memory_space<vmem>>, vector<64x32xbf16>
    %cst_74 = arith.constant dense<0.000000e+00> : vector<8x32xf32>
    %184 = tpu.matmul %182, %183, %cst_74 {dimension_numbers = #tpu.dot_dimension_numbers<[1], [0], [0], [1], [0, 0, 1, 1], [], []>} : vector<8x64xbf16>, vector<64x32xbf16>, vector<8x32xf32> -> vector<8x32xf32>
    %c0_75 = arith.constant 0 : index
    %c0_76 = arith.constant 0 : index
    %185 = vector.load %arg14[%c0_75, %c0_76] : memref<1x32xf32, #tpu.memory_space<vmem>>, vector<1x32xf32>
    %186 = vector.broadcast %185 : vector<1x32xf32> to vector<8x32xf32>
    %187 = arith.addf %184, %186 : vector<8x32xf32>
    %188 = arith.addf %151, %187 : vector<8x32xf32>
    %c0_77 = arith.constant 0 : index
    %c0_78 = arith.constant 0 : index
    %c0_79 = arith.constant 0 : index
    %c0_80 = arith.constant 0 : index
    %189 = vector.load %arg18[%c0_77, %c0_78, %c0_79, %c0_80] : memref<1x4x8x8xf32, #tpu.memory_space<vmem>>, vector<1x1x8x8xf32>
    %190 = vector.shape_cast %189 : vector<1x1x8x8xf32> to vector<8x8xf32>
    %191 = vector.shape_cast %59 : vector<8x8xf32> to vector<1x1x8x8xf32>
    tpu.vector_store %arg18[%c0_77, %c0_78, %c0_79, %c0_80], %191 {strides = array<i32>} : memref<1x4x8x8xf32, #tpu.memory_space<vmem>>, vector<1x1x8x8xf32>,
    %c0_81 = arith.constant 0 : index
    %c1_82 = arith.constant 1 : index
    %c0_83 = arith.constant 0 : index
    %c0_84 = arith.constant 0 : index
    %192 = vector.load %arg18[%c0_81, %c1_82, %c0_83, %c0_84] : memref<1x4x8x8xf32, #tpu.memory_space<vmem>>, vector<1x1x8x8xf32>
    %193 = vector.shape_cast %192 : vector<1x1x8x8xf32> to vector<8x8xf32>
    %194 = vector.shape_cast %86 : vector<8x8xf32> to vector<1x1x8x8xf32>
    tpu.vector_store %arg18[%c0_81, %c1_82, %c0_83, %c0_84], %194 {strides = array<i32>} : memref<1x4x8x8xf32, #tpu.memory_space<vmem>>, vector<1x1x8x8xf32>,
    %c0_85 = arith.constant 0 : index
    %c2_86 = arith.constant 2 : index
    %c0_87 = arith.constant 0 : index
    %c0_88 = arith.constant 0 : index
    %195 = vector.load %arg18[%c0_85, %c2_86, %c0_87, %c0_88] : memref<1x4x8x8xf32, #tpu.memory_space<vmem>>, vector<1x1x8x8xf32>
    %196 = vector.shape_cast %195 : vector<1x1x8x8xf32> to vector<8x8xf32>
    %197 = vector.shape_cast %113 : vector<8x8xf32> to vector<1x1x8x8xf32>
    tpu.vector_store %arg18[%c0_85, %c2_86, %c0_87, %c0_88], %197 {strides = array<i32>} : memref<1x4x8x8xf32, #tpu.memory_space<vmem>>, vector<1x1x8x8xf32>,
    %c0_89 = arith.constant 0 : index
    %c3_90 = arith.constant 3 : index
    %c0_91 = arith.constant 0 : index
    %c0_92 = arith.constant 0 : index
    %198 = vector.load %arg18[%c0_89, %c3_90, %c0_91, %c0_92] : memref<1x4x8x8xf32, #tpu.memory_space<vmem>>, vector<1x1x8x8xf32>
    %199 = vector.shape_cast %198 : vector<1x1x8x8xf32> to vector<8x8xf32>
    %200 = vector.shape_cast %140 : vector<8x8xf32> to vector<1x1x8x8xf32>
    tpu.vector_store %arg18[%c0_89, %c3_90, %c0_91, %c0_92], %200 {strides = array<i32>} : memref<1x4x8x8xf32, #tpu.memory_space<vmem>>, vector<1x1x8x8xf32>,
    %c0_93 = arith.constant 0 : index
    %c0_94 = arith.constant 0 : index
    %201 = vector.load %arg15[%c0_93, %c0_94] : memref<1x32xf32, #tpu.memory_space<vmem>>, vector<1x32xf32>
    %c0_95 = arith.constant 0 : index
    %c0_96 = arith.constant 0 : index
    %202 = vector.load %arg16[%c0_95, %c0_96] : memref<1x32xf32, #tpu.memory_space<vmem>>, vector<1x32xf32>
    %cst_97 = arith.constant dense<0.000000e+00> : vector<8xf32>
    %203 = vector.multi_reduction <add>, %188, %cst_97 [1] : vector<8x32xf32> to vector<8xf32>
    %204 = vector.shape_cast %203 : vector<8xf32> to vector<8x1xf32>
    %cst_98 = arith.constant 3.200000e+01 : f32
    %205 = vector.broadcast %cst_98 : f32 to vector<8x1xf32>
    %206 = arith.divf %204, %205 : vector<8x1xf32>
    %207 = vector.broadcast %206 : vector<8x1xf32> to vector<8x32xf32>
    %208 = arith.subf %188, %207 : vector<8x32xf32>
    %209 = arith.mulf %208, %208 : vector<8x32xf32>
    %cst_99 = arith.constant dense<0.000000e+00> : vector<8xf32>
    %210 = vector.multi_reduction <add>, %209, %cst_99 [1] : vector<8x32xf32> to vector<8xf32>
    %211 = vector.shape_cast %210 : vector<8xf32> to vector<8x1xf32>
    %cst_100 = arith.constant 3.100000e+01 : f32
    %212 = vector.broadcast %cst_100 : f32 to vector<8x1xf32>
    %213 = arith.divf %211, %212 : vector<8x1xf32>
    %214 = math.sqrt %213 : vector<8x1xf32>
    %215 = vector.broadcast %201 : vector<1x32xf32> to vector<8x32xf32>
    %216 = arith.mulf %215, %208 : vector<8x32xf32>
    %cst_101 = arith.constant 9.99999997E-7 : f32
    %217 = vector.broadcast %cst_101 : f32 to vector<8x1xf32>
    %218 = arith.addf %214, %217 : vector<8x1xf32>
    %219 = vector.broadcast %218 : vector<8x1xf32> to vector<8x32xf32>
    %220 = arith.divf %216, %219 : vector<8x32xf32>
    %221 = vector.broadcast %202 : vector<1x32xf32> to vector<8x32xf32>
    %222 = arith.addf %220, %221 : vector<8x32xf32>
    %c0_102 = arith.constant 0 : index
    %c0_103 = arith.constant 0 : index
    %c0_104 = arith.constant 0 : index
    %223 = vector.load %arg17[%c0_102, %c0_103, %c0_104] : memref<1x8x32xf32, #tpu.memory_space<vmem>>, vector<1x8x32xf32>
    %224 = vector.shape_cast %223 : vector<1x8x32xf32> to vector<8x32xf32>
    %225 = vector.shape_cast %222 : vector<8x32xf32> to vector<1x8x32xf32>
    tpu.vector_store %arg17[%c0_102, %c0_103, %c0_104], %225 {strides = array<i32>} : memref<1x8x32xf32, #tpu.memory_space<vmem>>, vector<1x8x32xf32>,
    return
  }
  func.func @transform_0(%arg0: i32) -> (i32, i32, i32) {
    %c0_i32 = arith.constant 0 : i32
    %c0_i32_0 = arith.constant 0 : i32
    %c0_i32_1 = arith.constant 0 : i32
    return %arg0, %c0_i32, %c0_i32_0 : i32, i32, i32
  }
  func.func @transform_1(%arg0: i32) -> (i32, i32, i32, i32) {
    %c0_i32 = arith.constant 0 : i32
    %c0_i32_0 = arith.constant 0 : i32
    %c0_i32_1 = arith.constant 0 : i32
    %c0_i32_2 = arith.constant 0 : i32
    return %arg0, %c0_i32, %c0_i32_0, %c0_i32_1 : i32, i32, i32, i32
  }
  func.func @transform_2(%arg0: i32) -> (i32, i32) {
    %c0_i32 = arith.constant 0 : i32
    %c0_i32_0 = arith.constant 0 : i32
    %c0_i32_1 = arith.constant 0 : i32
    return %c0_i32, %c0_i32_0 : i32, i32
  }
  func.func @transform_3(%arg0: i32) -> (i32, i32) {
    %c0_i32 = arith.constant 0 : i32
    %c0_i32_0 = arith.constant 0 : i32
    %c0_i32_1 = arith.constant 0 : i32
    return %c0_i32, %c0_i32_0 : i32, i32
  }
  func.func @transform_4(%arg0: i32) -> (i32, i32) {
    %c0_i32 = arith.constant 0 : i32
    %c0_i32_0 = arith.constant 0 : i32
    %c0_i32_1 = arith.constant 0 : i32
    return %c0_i32, %c0_i32_0 : i32, i32
  }
  func.func @transform_5(%arg0: i32) -> (i32, i32) {
    %c0_i32 = arith.constant 0 : i32
    %c0_i32_0 = arith.constant 0 : i32
    %c0_i32_1 = arith.constant 0 : i32
    return %c0_i32, %c0_i32_0 : i32, i32
  }
  func.func @transform_6(%arg0: i32) -> (i32, i32, i32) {
    %c0_i32 = arith.constant 0 : i32
    %c0_i32_0 = arith.constant 0 : i32
    %c0_i32_1 = arith.constant 0 : i32
    %c0_i32_2 = arith.constant 0 : i32
    return %c0_i32, %c0_i32_0, %c0_i32_1 : i32, i32, i32
  }
  func.func @transform_7(%arg0: i32) -> (i32, i32) {
    %c0_i32 = arith.constant 0 : i32
    %c0_i32_0 = arith.constant 0 : i32
    %c0_i32_1 = arith.constant 0 : i32
    return %c0_i32, %c0_i32_0 : i32, i32
  }
  func.func @transform_8(%arg0: i32) -> (i32, i32) {
    %c0_i32 = arith.constant 0 : i32
    %c0_i32_0 = arith.constant 0 : i32
    %c0_i32_1 = arith.constant 0 : i32
    return %c0_i32, %c0_i32_0 : i32, i32
  }
  func.func @transform_9(%arg0: i32) -> (i32, i32) {
    %c0_i32 = arith.constant 0 : i32
    %c0_i32_0 = arith.constant 0 : i32
    %c0_i32_1 = arith.constant 0 : i32
    return %c0_i32, %c0_i32_0 : i32, i32
  }
  func.func @transform_10(%arg0: i32) -> (i32, i32) {
    %c0_i32 = arith.constant 0 : i32
    %c0_i32_0 = arith.constant 0 : i32
    %c0_i32_1 = arith.constant 0 : i32
    return %c0_i32, %c0_i32_0 : i32, i32
  }
  func.func @transform_11(%arg0: i32) -> (i32, i32) {
    %c0_i32 = arith.constant 0 : i32
    %c0_i32_0 = arith.constant 0 : i32
    %c0_i32_1 = arith.constant 0 : i32
    return %c0_i32, %c0_i32_0 : i32, i32
  }
  func.func @transform_12(%arg0: i32) -> (i32, i32) {
    %c0_i32 = arith.constant 0 : i32
    %c0_i32_0 = arith.constant 0 : i32
    %c0_i32_1 = arith.constant 0 : i32
    return %c0_i32, %c0_i32_0 : i32, i32
  }
  func.func @transform_13(%arg0: i32) -> (i32, i32) {
    %c0_i32 = arith.constant 0 : i32
    %c0_i32_0 = arith.constant 0 : i32
    %c0_i32_1 = arith.constant 0 : i32
    return %c0_i32, %c0_i32_0 : i32, i32
  }
  func.func @transform_14(%arg0: i32) -> (i32, i32) {
    %c0_i32 = arith.constant 0 : i32
    %c0_i32_0 = arith.constant 0 : i32
    %c0_i32_1 = arith.constant 0 : i32
    return %c0_i32, %c0_i32_0 : i32, i32
  }
  func.func @transform_15(%arg0: i32) -> (i32, i32) {
    %c0_i32 = arith.constant 0 : i32
    %c0_i32_0 = arith.constant 0 : i32
    %c0_i32_1 = arith.constant 0 : i32
    return %c0_i32, %c0_i32_0 : i32, i32
  }
  func.func @transform_16(%arg0: i32) -> (i32, i32, i32) {
    %c0_i32 = arith.constant 0 : i32
    %c0_i32_0 = arith.constant 0 : i32
    %c0_i32_1 = arith.constant 0 : i32
    return %arg0, %c0_i32, %c0_i32_0 : i32, i32, i32
  }
  func.func @transform_17(%arg0: i32) -> (i32, i32, i32, i32) {
    %c0_i32 = arith.constant 0 : i32
    %c0_i32_0 = arith.constant 0 : i32
    %c0_i32_1 = arith.constant 0 : i32
    %c0_i32_2 = arith.constant 0 : i32
    return %arg0, %c0_i32, %c0_i32_0, %c0_i32_1 : i32, i32, i32, i32
  }
}

</mosaic_0001>

<llo_original>
// kernel: encoder_forward.3
$region0: #{encoder_forward.3}
  #allocation0 [shape = 'u32[]', space=smem, size = 0x4, offset = 0x4, fixed_abs, tag = 'smem constant byte address 0x4 - core index']
  #allocation1 [shape = 'u32[144,128]{1,0:T(1,128)}', space=vmem, size = 0x12000, scoped, tag = 'internal scratch']
  %s0 = inlined_call_operand.vmem [shape: f32[2,8,32], index: 0, kind: input, shape index: {}]
  %s1 = inlined_call_operand.vmem [shape: f32[2,1,8,8], index: 1, kind: input, shape index: {}]
  %s2 = inlined_call_operand.vmem [shape: f32[1,32], index: 2, kind: input, shape index: {}]
  %s3 = inlined_call_operand.vmem [shape: f32[1,32], index: 3, kind: input, shape index: {}]
  %s4 = inlined_call_operand.vmem [shape: bf16[32,96], index: 4, kind: input, shape index: {}]
  %s5 = inlined_call_operand.vmem [shape: f32[1,96], index: 5, kind: input, shape index: {}]
  %s6 = inlined_call_operand.vmem [shape: bf16[4,8,32], index: 6, kind: input, shape index: {}]
  %s7 = inlined_call_operand.vmem [shape: f32[1,32], index: 7, kind: input, shape index: {}]
  %s8 = inlined_call_operand.vmem [shape: f32[1,32], index: 8, kind: input, shape index: {}]
  %s9 = inlined_call_operand.vmem [shape: f32[1,32], index: 9, kind: input, shape index: {}]
  %s10 = inlined_call_operand.vmem [shape: bf16[32,64], index: 10, kind: input, shape index: {}]
  %s11 = inlined_call_operand.vmem [shape: f32[1,64], index: 11, kind: input, shape index: {}]
  %s12 = inlined_call_operand.vmem [shape: bf16[64,32], index: 12, kind: input, shape index: {}]
  %s13 = inlined_call_operand.vmem [shape: f32[1,32], index: 13, kind: input, shape index: {}]
  %s14 = inlined_call_operand.vmem [shape: f32[1,32], index: 14, kind: input, shape index: {}]
  %s15 = inlined_call_operand.vmem [shape: f32[1,32], index: 15, kind: input, shape index: {}]
  %s16 = inlined_call_operand.hbm [shape: f32[2,8,32], index: 16, kind: output, shape index: {0}]
  %s17 = inlined_call_operand.hbm [shape: f32[2,4,8,8], index: 17, kind: output, shape index: {1}]
  %18 = xla_tuple %s16, %s17
  %s19 = sld [smem:[#allocation0]]
  $region105: #{encoder_forward.3} parent=0
    _
  %s21 = ssub.s32 1, %s19
  %s22 = scalar_select 0, %s21, %s19
  $region1: #{encoder_forward.3} parent=0
    #allocation2 [shape = 'u8[8192]{0}', space=vmem, size = 0x2000, scoped, tag = 'output window, operand 0']
    #allocation3 [shape = 's32[2]{0}', space=sflag, size = 0x8, scoped, tag = 'scoped memory for encoder_forward.3']
    #allocation4 [shape = 'u8[32768]{0}', space=vmem, size = 0x8000, scoped, tag = 'output window, operand 1']
    #allocation5 [shape = 's32[2]{0}', space=sflag, size = 0x8, scoped, tag = 'scoped memory for encoder_forward.3']
    %23 = vsyncpa [#allocation3], 0
    %s24 = scalar_lea.sflag [#allocation3], 1
    %25 = vsyncpa %s24, 0
    %26 = vsyncpa [#allocation5], 0
    %s27 = scalar_lea.sflag [#allocation5], 1
    %28 = vsyncpa %s27, 0
    loop: start=0, step=1, limit=4
    $region2: #{encoder_forward.3} parent=1 // loop_pre_header
      _
    $region3: #{encoder_forward.3} parent=1 // loop_header
      %s30 = sphi 0, %s34
      %p31 = scmp.ge.s32.totalorder %s30, 4
      %s40 = sphi 0, %s42
      %s43 = sphi 0, %s40
      %s44 = sphi 0, %s43
      %s60 = sphi 0, %s44
      %s66 = sphi 0, %s68
      %s69 = sphi 0, %s66
      %s70 = sphi 0, %s69
      %s86 = sphi 0, %s70
      %s90 = sphi 0, %s90
      %s92 = sphi 0, %s90
      %s93 = sphi 0, %s92
      %s107 = sphi 0, %s93
      %s111 = sphi 0, %s111
      %s113 = sphi 0, %s111
      %s114 = sphi 0, %s113
      %s128 = sphi 0, %s114
      %s132 = sphi 0, %s132
      %s134 = sphi 0, %s132
      %s135 = sphi 0, %s134
      %s149 = sphi 0, %s135
      %s153 = sphi 0, %s153
      %s155 = sphi 0, %s153
      %s156 = sphi 0, %s155
      %s170 = sphi 0, %s156
      %s174 = sphi 0, %s174
      %s176 = sphi 0, %s174
      %s177 = sphi 0, %s176
      %s191 = sphi 0, %s177
      %s195 = sphi 0, %s195
      %s197 = sphi 0, %s195
      %s198 = sphi 0, %s197
      %s212 = sphi 0, %s198
      %s216 = sphi 0, %s216
      %s218 = sphi 0, %s216
      %s219 = sphi 0, %s218
      %s233 = sphi 0, %s219
      %s237 = sphi 0, %s237
      %s239 = sphi 0, %s237
      %s240 = sphi 0, %s239
      %s254 = sphi 0, %s240
      %s258 = sphi 0, %s258
      %s260 = sphi 0, %s258
      %s261 = sphi 0, %s260
      %s275 = sphi 0, %s261
      %s279 = sphi 0, %s279
      %s281 = sphi 0, %s279
      %s282 = sphi 0, %s281
      %s296 = sphi 0, %s282
      %s300 = sphi 0, %s300
      %s302 = sphi 0, %s300
      %s303 = sphi 0, %s302
      %s317 = sphi 0, %s303
      %s321 = sphi 0, %s321
      %s323 = sphi 0, %s321
      %s324 = sphi 0, %s323
      %s338 = sphi 0, %s324
      %s342 = sphi 0, %s342
      %s344 = sphi 0, %s342
      %s345 = sphi 0, %s344
      %s359 = sphi 0, %s345
      %s363 = sphi 0, %s363
      %s365 = sphi 0, %s363
      %s366 = sphi 0, %s365
      %s380 = sphi 0, %s366
      %s386 = sphi 0, %s388
      %s389 = sphi 0, %s386
      %s390 = sphi 0, %s389
      %s406 = sphi 0, %s390
      %s412 = sphi 0, %s414
      %s415 = sphi 0, %s412
      %s416 = sphi 0, %s415
      %s432 = sphi 0, %s416
    $region4: #{encoder_forward.3} parent=1 // loop_header_branch
      %33 = sbr.rel (%p31) target = $region8
    $region5: #{encoder_forward.3} parent=1 // loop_body
      %s35 = ssub.s32 %s30, 1
      %s36 = ssub.s32 %s30, 2
      %s37 = sadd.s32 %s30, 1
      %s38 = ssub.s32 %s30, %s37
      %p39 = scmp.eq.s32.totalorder %s38, 0
      %s41 = sadd.s32 %s40, 1
      %s42 = scalar_select %p39, %s40, %s41
      %p45 = pneg %p39
      %p46 = scmp.eq.s32.totalorder %s30, 1
      %p47 = por %p45, %p46
      %p48 = scmp.ne.s32.totalorder %s40, %s43
      %p49 = scmp.eq.s32.totalorder %s30, 0
      %p50 = por %p48, %p49
      %p51 = scmp.ne.s32.totalorder %s40, %s43
      %p52 = scmp.eq.s32.totalorder %s35, 1
      %p53 = por %p51, %p52
      %p54 = scmp.ne.s32.totalorder %s43, %s44
      %p55 = scmp.eq.s32.totalorder %s35, 0
      %p56 = por %p54, %p55
      %p57 = scmp.ne.s32.totalorder %s43, %s44
      %p58 = scmp.eq.s32.totalorder %s36, 1
      %p59 = por %p57, %p58
      %p61 = scmp.ne.s32.totalorder %s44, %s60
      %p62 = scmp.eq.s32.totalorder %s36, 0
      %p63 = por %p61, %p62
      %s64 = ssub.s32 %s30, %s37
      %p65 = scmp.eq.s32.totalorder %s64, 0
      %s67 = sadd.s32 %s66, 1
      %s68 = scalar_select %p65, %s66, %s67
      %p71 = pneg %p65
      %p72 = scmp.eq.s32.totalorder %s30, 1
      %p73 = por %p71, %p72
      %p74 = scmp.ne.s32.totalorder %s66, %s69
      %p75 = scmp.eq.s32.totalorder %s30, 0
      %p76 = por %p74, %p75
      %p77 = scmp.ne.s32.totalorder %s66, %s69
      %p78 = scmp.eq.s32.totalorder %s35, 1
      %p79 = por %p77, %p78
      %p80 = scmp.ne.s32.totalorder %s69, %s70
      %p81 = scmp.eq.s32.totalorder %s35, 0
      %p82 = por %p80, %p81
      %p83 = scmp.ne.s32.totalorder %s69, %s70
      %p84 = scmp.eq.s32.totalorder %s36, 1
      %p85 = por %p83, %p84
      %p87 = scmp.ne.s32.totalorder %s70, %s86
      %p88 = scmp.eq.s32.totalorder %s36, 0
      %p89 = por %p87, %p88
      %s91 = sadd.s32 %s90, 1
      %p94 = scmp.eq.s32.totalorder %s30, 1
      %p95 = scmp.ne.s32.totalorder %s90, %s92
      %p96 = scmp.eq.s32.totalorder %s30, 0
      %p97 = por %p95, %p96
      %p98 = scmp.ne.s32.totalorder %s90, %s92
      %p99 = scmp.eq.s32.totalorder %s35, 1
      %p100 = por %p98, %p99
      %p101 = scmp.ne.s32.totalorder %s92, %s93
      %p102 = scmp.eq.s32.totalorder %s35, 0
      %p103 = por %p101, %p102
      %p104 = scmp.ne.s32.totalorder %s92, %s93
      %p105 = scmp.eq.s32.totalorder %s36, 1
      %p106 = por %p104, %p105
      %p108 = scmp.ne.s32.totalorder %s93, %s107
      %p109 = scmp.eq.s32.totalorder %s36, 0
      %p110 = por %p108, %p109
      %s112 = sadd.s32 %s111, 1
      %p115 = scmp.eq.s32.totalorder %s30, 1
      %p116 = scmp.ne.s32.totalorder %s111, %s113
      %p117 = scmp.eq.s32.totalorder %s30, 0
      %p118 = por %p116, %p117
      %p119 = scmp.ne.s32.totalorder %s111, %s113
      %p120 = scmp.eq.s32.totalorder %s35, 1
      %p121 = por %p119, %p120
      %p122 = scmp.ne.s32.totalorder %s113, %s114
      %p123 = scmp.eq.s32.totalorder %s35, 0
      %p124 = por %p122, %p123
      %p125 = scmp.ne.s32.totalorder %s113, %s114
      %p126 = scmp.eq.s32.totalorder %s36, 1
      %p127 = por %p125, %p126
      %p129 = scmp.ne.s32.totalorder %s114, %s128
      %p130 = scmp.eq.s32.totalorder %s36, 0
      %p131 = por %p129, %p130
      %s133 = sadd.s32 %s132, 1
      %p136 = scmp.eq.s32.totalorder %s30, 1
      %p137 = scmp.ne.s32.totalorder %s132, %s134
      %p138 = scmp.eq.s32.totalorder %s30, 0
      %p139 = por %p137, %p138
      %p140 = scmp.ne.s32.totalorder %s132, %s134
      %p141 = scmp.eq.s32.totalorder %s35, 1
      %p142 = por %p140, %p141
      %p143 = scmp.ne.s32.totalorder %s134, %s135
      %p144 = scmp.eq.s32.totalorder %s35, 0
      %p145 = por %p143, %p144
      %p146 = scmp.ne.s32.totalorder %s134, %s135
      %p147 = scmp.eq.s32.totalorder %s36, 1
      %p148 = por %p146, %p147
      %p150 = scmp.ne.s32.totalorder %s135, %s149
      %p151 = scmp.eq.s32.totalorder %s36, 0
      %p152 = por %p150, %p151
      %s154 = sadd.s32 %s153, 1
      %p157 = scmp.eq.s32.totalorder %s30, 1
      %p158 = scmp.ne.s32.totalorder %s153, %s155
      %p159 = scmp.eq.s32.totalorder %s30, 0
      %p160 = por %p158, %p159
      %p161 = scmp.ne.s32.totalorder %s153, %s155
      %p162 = scmp.eq.s32.totalorder %s35, 1
      %p163 = por %p161, %p162
      %p164 = scmp.ne.s32.totalorder %s155, %s156
      %p165 = scmp.eq.s32.totalorder %s35, 0
      %p166 = por %p164, %p165
      %p167 = scmp.ne.s32.totalorder %s155, %s156
      %p168 = scmp.eq.s32.totalorder %s36, 1
      %p169 = por %p167, %p168
      %p171 = scmp.ne.s32.totalorder %s156, %s170
      %p172 = scmp.eq.s32.totalorder %s36, 0
      %p173 = por %p171, %p172
      %s175 = sadd.s32 %s174, 1
      %p178 = scmp.eq.s32.totalorder %s30, 1
      %p179 = scmp.ne.s32.totalorder %s174, %s176
      %p180 = scmp.eq.s32.totalorder %s30, 0
      %p181 = por %p179, %p180
      %p182 = scmp.ne.s32.totalorder %s174, %s176
      %p183 = scmp.eq.s32.totalorder %s35, 1
      %p184 = por %p182, %p183
      %p185 = scmp.ne.s32.totalorder %s176, %s177
      %p186 = scmp.eq.s32.totalorder %s35, 0
      %p187 = por %p185, %p186
      %p188 = scmp.ne.s32.totalorder %s176, %s177
      %p189 = scmp.eq.s32.totalorder %s36, 1
      %p190 = por %p188, %p189
      %p192 = scmp.ne.s32.totalorder %s177, %s191
      %p193 = scmp.eq.s32.totalorder %s36, 0
      %p194 = por %p192, %p193
      %s196 = sadd.s32 %s195, 1
      %p199 = scmp.eq.s32.totalorder %s30, 1
      %p200 = scmp.ne.s32.totalorder %s195, %s197
      %p201 = scmp.eq.s32.totalorder %s30, 0
      %p202 = por %p200, %p201
      %p203 = scmp.ne.s32.totalorder %s195, %s197
      %p204 = scmp.eq.s32.totalorder %s35, 1
      %p205 = por %p203, %p204
      %p206 = scmp.ne.s32.totalorder %s197, %s198
      %p207 = scmp.eq.s32.totalorder %s35, 0
      %p208 = por %p206, %p207
      %p209 = scmp.ne.s32.totalorder %s197, %s198
      %p210 = scmp.eq.s32.totalorder %s36, 1
      %p211 = por %p209, %p210
      %p213 = scmp.ne.s32.totalorder %s198, %s212
      %p214 = scmp.eq.s32.totalorder %s36, 0
      %p215 = por %p213, %p214
      %s217 = sadd.s32 %s216, 1
      %p220 = scmp.eq.s32.totalorder %s30, 1
      %p221 = scmp.ne.s32.totalorder %s216, %s218
      %p222 = scmp.eq.s32.totalorder %s30, 0
      %p223 = por %p221, %p222
      %p224 = scmp.ne.s32.totalorder %s216, %s218
      %p225 = scmp.eq.s32.totalorder %s35, 1
      %p226 = por %p224, %p225
      %p227 = scmp.ne.s32.totalorder %s218, %s219
      %p228 = scmp.eq.s32.totalorder %s35, 0
      %p229 = por %p227, %p228
      %p230 = scmp.ne.s32.totalorder %s218, %s219
      %p231 = scmp.eq.s32.totalorder %s36, 1
      %p232 = por %p230, %p231
      %p234 = scmp.ne.s32.totalorder %s219, %s233
      %p235 = scmp.eq.s32.totalorder %s36, 0
      %p236 = por %p234, %p235
      %s238 = sadd.s32 %s237, 1
      %p241 = scmp.eq.s32.totalorder %s30, 1
      %p242 = scmp.ne.s32.totalorder %s237, %s239
      %p243 = scmp.eq.s32.totalorder %s30, 0
      %p244 = por %p242, %p243
      %p245 = scmp.ne.s32.totalorder %s237, %s239
      %p246 = scmp.eq.s32.totalorder %s35, 1
      %p247 = por %p245, %p246
      %p248 = scmp.ne.s32.totalorder %s239, %s240
      %p249 = scmp.eq.s32.totalorder %s35, 0
      %p250 = por %p248, %p249
      %p251 = scmp.ne.s32.totalorder %s239, %s240
      %p252 = scmp.eq.s32.totalorder %s36, 1
      %p253 = por %p251, %p252
      %p255 = scmp.ne.s32.totalorder %s240, %s254
      %p256 = scmp.eq.s32.totalorder %s36, 0
      %p257 = por %p255, %p256
      %s259 = sadd.s32 %s258, 1
      %p262 = scmp.eq.s32.totalorder %s30, 1
      %p263 = scmp.ne.s32.totalorder %s258, %s260
      %p264 = scmp.eq.s32.totalorder %s30, 0
      %p265 = por %p263, %p264
      %p266 = scmp.ne.s32.totalorder %s258, %s260
      %p267 = scmp.eq.s32.totalorder %s35, 1
      %p268 = por %p266, %p267
      %p269 = scmp.ne.s32.totalorder %s260, %s261
      %p270 = scmp.eq.s32.totalorder %s35, 0
      %p271 = por %p269, %p270
      %p272 = scmp.ne.s32.totalorder %s260, %s261
      %p273 = scmp.eq.s32.totalorder %s36, 1
      %p274 = por %p272, %p273
      %p276 = scmp.ne.s32.totalorder %s261, %s275
      %p277 = scmp.eq.s32.totalorder %s36, 0
      %p278 = por %p276, %p277
      %s280 = sadd.s32 %s279, 1
      %p283 = scmp.eq.s32.totalorder %s30, 1
      %p284 = scmp.ne.s32.totalorder %s279, %s281
      %p285 = scmp.eq.s32.totalorder %s30, 0
      %p286 = por %p284, %p285
      %p287 = scmp.ne.s32.totalorder %s279, %s281
      %p288 = scmp.eq.s32.totalorder %s35, 1
      %p289 = por %p287, %p288
      %p290 = scmp.ne.s32.totalorder %s281, %s282
      %p291 = scmp.eq.s32.totalorder %s35, 0
      %p292 = por %p290, %p291
      %p293 = scmp.ne.s32.totalorder %s281, %s282
      %p294 = scmp.eq.s32.totalorder %s36, 1
      %p295 = por %p293, %p294
      %p297 = scmp.ne.s32.totalorder %s282, %s296
      %p298 = scmp.eq.s32.totalorder %s36, 0
      %p299 = por %p297, %p298
      %s301 = sadd.s32 %s300, 1
      %p304 = scmp.eq.s32.totalorder %s30, 1
      %p305 = scmp.ne.s32.totalorder %s300, %s302
      %p306 = scmp.eq.s32.totalorder %s30, 0
      %p307 = por %p305, %p306
      %p308 = scmp.ne.s32.totalorder %s300, %s302
      %p309 = scmp.eq.s32.totalorder %s35, 1
      %p310 = por %p308, %p309
      %p311 = scmp.ne.s32.totalorder %s302, %s303
      %p312 = scmp.eq.s32.totalorder %s35, 0
      %p313 = por %p311, %p312
      %p314 = scmp.ne.s32.totalorder %s302, %s303
      %p315 = scmp.eq.s32.totalorder %s36, 1
      %p316 = por %p314, %p315
      %p318 = scmp.ne.s32.totalorder %s303, %s317
      %p319 = scmp.eq.s32.totalorder %s36, 0
      %p320 = por %p318, %p319
      %s322 = sadd.s32 %s321, 1
      %p325 = scmp.eq.s32.totalorder %s30, 1
      %p326 = scmp.ne.s32.totalorder %s321, %s323
      %p327 = scmp.eq.s32.totalorder %s30, 0
      %p328 = por %p326, %p327
      %p329 = scmp.ne.s32.totalorder %s321, %s323
      %p330 = scmp.eq.s32.totalorder %s35, 1
      %p331 = por %p329, %p330
      %p332 = scmp.ne.s32.totalorder %s323, %s324
      %p333 = scmp.eq.s32.totalorder %s35, 0
      %p334 = por %p332, %p333
      %p335 = scmp.ne.s32.totalorder %s323, %s324
      %p336 = scmp.eq.s32.totalorder %s36, 1
      %p337 = por %p335, %p336
      %p339 = scmp.ne.s32.totalorder %s324, %s338
      %p340 = scmp.eq.s32.totalorder %s36, 0
      %p341 = por %p339, %p340
      %s343 = sadd.s32 %s342, 1
      %p346 = scmp.eq.s32.totalorder %s30, 1
      %p347 = scmp.ne.s32.totalorder %s342, %s344
      %p348 = scmp.eq.s32.totalorder %s30, 0
      %p349 = por %p347, %p348
      %p350 = scmp.ne.s32.totalorder %s342, %s344
      %p351 = scmp.eq.s32.totalorder %s35, 1
      %p352 = por %p350, %p351
      %p353 = scmp.ne.s32.totalorder %s344, %s345
      %p354 = scmp.eq.s32.totalorder %s35, 0
      %p355 = por %p353, %p354
      %p356 = scmp.ne.s32.totalorder %s344, %s345
      %p357 = scmp.eq.s32.totalorder %s36, 1
      %p358 = por %p356, %p357
      %p360 = scmp.ne.s32.totalorder %s345, %s359
      %p361 = scmp.eq.s32.totalorder %s36, 0
      %p362 = por %p360, %p361
      %s364 = sadd.s32 %s363, 1
      %p367 = scmp.eq.s32.totalorder %s30, 1
      %p368 = scmp.ne.s32.totalorder %s363, %s365
      %p369 = scmp.eq.s32.totalorder %s30, 0
      %p370 = por %p368, %p369
      %p371 = scmp.ne.s32.totalorder %s363, %s365
      %p372 = scmp.eq.s32.totalorder %s35, 1
      %p373 = por %p371, %p372
      %p374 = scmp.ne.s32.totalorder %s365, %s366
      %p375 = scmp.eq.s32.totalorder %s35, 0
      %p376 = por %p374, %p375
      %p377 = scmp.ne.s32.totalorder %s365, %s366
      %p378 = scmp.eq.s32.totalorder %s36, 1
      %p379 = por %p377, %p378
      %p381 = scmp.ne.s32.totalorder %s366, %s380
      %p382 = scmp.eq.s32.totalorder %s36, 0
      %p383 = por %p381, %p382
      %s384 = ssub.s32 %s30, %s37
      %p385 = scmp.eq.s32.totalorder %s384, 0
      %s387 = sadd.s32 %s386, 1
      %s388 = scalar_select %p385, %s386, %s387
      %p391 = pneg %p385
      %p392 = scmp.eq.s32.totalorder %s30, 1
      %p393 = por %p391, %p392
      %p394 = scmp.ne.s32.totalorder %s386, %s389
      %p395 = scmp.eq.s32.totalorder %s30, 0
      %p396 = por %p394, %p395
      %p397 = scmp.ne.s32.totalorder %s386, %s389
      %p398 = scmp.eq.s32.totalorder %s35, 1
      %p399 = por %p397, %p398
      %p400 = scmp.ne.s32.totalorder %s389, %s390
      %p401 = scmp.eq.s32.totalorder %s35, 0
      %p402 = por %p400, %p401
      %p403 = scmp.ne.s32.totalorder %s389, %s390
      %p404 = scmp.eq.s32.totalorder %s36, 1
      %p405 = por %p403, %p404
      %p407 = scmp.ne.s32.totalorder %s390, %s406
      %p408 = scmp.eq.s32.totalorder %s36, 0
      %p409 = por %p407, %p408
      %s410 = ssub.s32 %s30, %s37
      %p411 = scmp.eq.s32.totalorder %s410, 0
      %s413 = sadd.s32 %s412, 1
      %s414 = scalar_select %p411, %s412, %s413
      %p417 = pneg %p411
      %p418 = scmp.eq.s32.totalorder %s30, 1
      %p419 = por %p417, %p418
      %p420 = scmp.ne.s32.totalorder %s412, %s415
      %p421 = scmp.eq.s32.totalorder %s30, 0
      %p422 = por %p420, %p421
      %p423 = scmp.ne.s32.totalorder %s412, %s415
      %p424 = scmp.eq.s32.totalorder %s35, 1
      %p425 = por %p423, %p424
      %p426 = scmp.ne.s32.totalorder %s415, %s416
      %p427 = scmp.eq.s32.totalorder %s35, 0
      %p428 = por %p426, %p427
      %p429 = scmp.ne.s32.totalorder %s415, %s416
      %p430 = scmp.eq.s32.totalorder %s36, 1
      %p431 = por %p429, %p430
      %p433 = scmp.ne.s32.totalorder %s416, %s432
      %p434 = scmp.eq.s32.totalorder %s36, 0
      %p435 = por %p433, %p434
      %p436 = scmp.le.s32.totalorder 1, %s30
      %p437 = scmp.lt.s32.totalorder %s30, 3
      %p438 = pnand %p436, %p437
      %p439 = pneg %p438
      // Predicated region
      $region9: #{encoder_forward.3} parent=5 // pred_check
        _
      $region10: #{encoder_forward.3} parent=5 // pred_check_branch
        %441 = sbr.rel (%p438) target = $region12
      $region11: #{encoder_forward.3} parent=5 // pred_region
        %s442 = ssub.s32 %s30, 1
        // Predicated region
        $region13: #{encoder_forward.3} parent=11 // pred_check
          %p443 = pneg %p103
        $region14: #{encoder_forward.3} parent=11 // pred_check_branch
          %445 = sbr.rel (%p443) target = $region16
        $region15: #{encoder_forward.3} parent=11 // pred_region
          _
        $region16: #{encoder_forward.3} parent=11 // pred_fallthru
          _
        // Predicated region
        $region17: #{encoder_forward.3} parent=11 // pred_check
          %p446 = pneg %p124
        $region18: #{encoder_forward.3} parent=11 // pred_check_branch
          %448 = sbr.rel (%p446) target = $region20
        $region19: #{encoder_forward.3} parent=11 // pred_region
          _
        $region20: #{encoder_forward.3} parent=11 // pred_fallthru
          _
        // Predicated region
        $region21: #{encoder_forward.3} parent=11 // pred_check
          %p449 = pneg %p145
        $region22: #{encoder_forward.3} parent=11 // pred_check_branch
          %451 = sbr.rel (%p449) target = $region24
        $region23: #{encoder_forward.3} parent=11 // pred_region
          _
        $region24: #{encoder_forward.3} parent=11 // pred_fallthru
          _
        // Predicated region
        $region25: #{encoder_forward.3} parent=11 // pred_check
          %p452 = pneg %p166
        $region26: #{encoder_forward.3} parent=11 // pred_check_branch
          %454 = sbr.rel (%p452) target = $region28
        $region27: #{encoder_forward.3} parent=11 // pred_region
          _
        $region28: #{encoder_forward.3} parent=11 // pred_fallthru
          _
        // Predicated region
        $region29: #{encoder_forward.3} parent=11 // pred_check
          %p455 = pneg %p187
        $region30: #{encoder_forward.3} parent=11 // pred_check_branch
          %457 = sbr.rel (%p455) target = $region32
        $region31: #{encoder_forward.3} parent=11 // pred_region
          _
        $region32: #{encoder_forward.3} parent=11 // pred_fallthru
          _
        // Predicated region
        $region33: #{encoder_forward.3} parent=11 // pred_check
          %p458 = pneg %p208
        $region34: #{encoder_forward.3} parent=11 // pred_check_branch
          %460 = sbr.rel (%p458) target = $region36
        $region35: #{encoder_forward.3} parent=11 // pred_region
          _
        $region36: #{encoder_forward.3} parent=11 // pred_fallthru
          _
        // Predicated region
        $region37: #{encoder_forward.3} parent=11 // pred_check
          %p461 = pneg %p229
        $region38: #{encoder_forward.3} parent=11 // pred_check_branch
          %463 = sbr.rel (%p461) target = $region40
        $region39: #{encoder_forward.3} parent=11 // pred_region
          _
        $region40: #{encoder_forward.3} parent=11 // pred_fallthru
          _
        // Predicated region
        $region41: #{encoder_forward.3} parent=11 // pred_check
          %p464 = pneg %p250
        $region42: #{encoder_forward.3} parent=11 // pred_check_branch
          %466 = sbr.rel (%p464) target = $region44
        $region43: #{encoder_forward.3} parent=11 // pred_region
          _
        $region44: #{encoder_forward.3} parent=11 // pred_fallthru
          _
        // Predicated region
        $region45: #{encoder_forward.3} parent=11 // pred_check
          %p467 = pneg %p271
        $region46: #{encoder_forward.3} parent=11 // pred_check_branch
          %469 = sbr.rel (%p467) target = $region48
        $region47: #{encoder_forward.3} parent=11 // pred_region
          _
        $region48: #{encoder_forward.3} parent=11 // pred_fallthru
          _
        // Predicated region
        $region49: #{encoder_forward.3} parent=11 // pred_check
          %p470 = pneg %p292
        $region50: #{encoder_forward.3} parent=11 // pred_check_branch
          %472 = sbr.rel (%p470) target = $region52
        $region51: #{encoder_forward.3} parent=11 // pred_region
          _
        $region52: #{encoder_forward.3} parent=11 // pred_fallthru
          _
        // Predicated region
        $region53: #{encoder_forward.3} parent=11 // pred_check
          %p473 = pneg %p313
        $region54: #{encoder_forward.3} parent=11 // pred_check_branch
          %475 = sbr.rel (%p473) target = $region56
        $region55: #{encoder_forward.3} parent=11 // pred_region
          _
        $region56: #{encoder_forward.3} parent=11 // pred_fallthru
          _
        // Predicated region
        $region57: #{encoder_forward.3} parent=11 // pred_check
          %p476 = pneg %p334
        $region58: #{encoder_forward.3} parent=11 // pred_check_branch
          %478 = sbr.rel (%p476) target = $region60
        $region59: #{encoder_forward.3} parent=11 // pred_region
          _
        $region60: #{encoder_forward.3} parent=11 // pred_fallthru
          _
        // Predicated region
        $region61: #{encoder_forward.3} parent=11 // pred_check
          %p479 = pneg %p355
        $region62: #{encoder_forward.3} parent=11 // pred_check_branch
          %481 = sbr.rel (%p479) target = $region64
        $region63: #{encoder_forward.3} parent=11 // pred_region
          _
        $region64: #{encoder_forward.3} parent=11 // pred_fallthru
          _
        // Predicated region
        $region65: #{encoder_forward.3} parent=11 // pred_check
          %p482 = pneg %p376
        $region66: #{encoder_forward.3} parent=11 // pred_check_branch
          %484 = sbr.rel (%p482) target = $region68
        $region67: #{encoder_forward.3} parent=11 // pred_region
          _
        $region68: #{encoder_forward.3} parent=11 // pred_fallthru
          _
      $region12: #{encoder_forward.3} parent=5 // pred_fallthru
        _
      %p485 = scmp.lt.s32.totalorder %s30, 2
      // Predicated region
      $region69: #{encoder_forward.3} parent=5 // pred_check
        %p486 = pneg %p485
      $region70: #{encoder_forward.3} parent=5 // pred_check_branch
        %488 = sbr.rel (%p486) target = $region72
      $region71: #{encoder_forward.3} parent=5 // pred_region
        // Predicated region
        $region73: #{encoder_forward.3} parent=71 // pred_check
          %p489 = pneg %p50
        $region74: #{encoder_forward.3} parent=71 // pred_check_branch
          %491 = sbr.rel (%p489) target = $region76
        $region75: #{encoder_forward.3} parent=71 // pred_region
          %p492 = scmp.lt.s32.totalorder %s30, 1
          %s493 = scalar_select %p492, %s30, 1
          %s494 = smul.addr %s493, 8
          %s495 = scalar_lea.vmem %s0, %s494
        $region76: #{encoder_forward.3} parent=71 // pred_fallthru
          _
        // Predicated region
        $region77: #{encoder_forward.3} parent=71 // pred_check
          %p496 = pneg %p76
        $region78: #{encoder_forward.3} parent=71 // pred_check_branch
          %498 = sbr.rel (%p496) target = $region80
        $region79: #{encoder_forward.3} parent=71 // pred_region
          %p499 = scmp.lt.s32.totalorder %s30, 1
          %s500 = scalar_select %p499, %s30, 1
          %s501 = smul.addr %s500, 8
          %s502 = scalar_lea.vmem %s1, %s501
        $region80: #{encoder_forward.3} parent=71 // pred_fallthru
          _
      $region72: #{encoder_forward.3} parent=5 // pred_fallthru
        _
      %p503 = scmp.le.s32.totalorder 1, %s30
      %p504 = scmp.lt.s32.totalorder %s30, 3
      %p505 = pnand %p503, %p504
      %p506 = pneg %p505
      // Predicated region
      $region81: #{encoder_forward.3} parent=5 // pred_check
        _
      $region82: #{encoder_forward.3} parent=5 // pred_check_branch
        %508 = sbr.rel (%p505) target = $region84
      $region83: #{encoder_forward.3} parent=5 // pred_region
        %s509 = ssub.s32 %s30, 1
        %p510 = scmp.lt.s32.totalorder %s35, 1
        %s511 = scalar_select %p510, %s35, 1
        %s512 = smul.addr %s511, 8
        %s513 = scalar_lea.vmem %s0, %s512
        %p514 = pneg %p56
        %p515 = pneg %p53
        %p516 = scmp.lt.s32.totalorder %s35, 1
        %s517 = scalar_select %p516, %s35, 1
        %s518 = smul.addr %s517, 8
        %s519 = scalar_lea.vmem %s1, %s518
        %p520 = pneg %p82
        %p521 = pneg %p79
        %p522 = pneg %p103
        %p523 = pneg %p100
        %p524 = pneg %p124
        %p525 = pneg %p121
        %p526 = pneg %p145
        %p527 = pneg %p142
        %p528 = pneg %p166
        %p529 = pneg %p163
        %p530 = pneg %p187
        %p531 = pneg %p184
        %p532 = pneg %p208
        %p533 = pneg %p205
        %p534 = pneg %p229
        %p535 = pneg %p226
        %p536 = pneg %p250
        %p537 = pneg %p247
        %p538 = pneg %p271
        %p539 = pneg %p268
        %p540 = pneg %p292
        %p541 = pneg %p289
        %p542 = pneg %p313
        %p543 = pneg %p310
        %p544 = pneg %p334
        %p545 = pneg %p331
        %p546 = pneg %p355
        %p547 = pneg %p352
        %p548 = pneg %p376
        %p549 = pneg %p373
        %p550 = pneg %p402
        %p551 = pneg %p399
        %s552 = sand.u32 %s389, 1
        %s553 = scalar_lea.sflag [#allocation3], %s552
        %s554 = sand.u32 %s389, 1
        %s555 = smul.addr %s554, 8
        %s556 = scalar_lea.vmem [#allocation2], %s555
        %p557 = pneg %p428
        %p558 = pneg %p425
        %s559 = sand.u32 %s415, 1
        %s560 = scalar_lea.sflag [#allocation5], %s559
        %s561 = sand.u32 %s415, 1
        %s562 = smul.addr %s561, 32
        %s563 = scalar_lea.vmem [#allocation4], %s562
        %p564 = scmp.lt.s32.totalorder %s35, 1
        %s565 = scalar_select %p564, %s35, 1
        %s566 = smul.addr %s565, 8
        %s567 = scalar_lea.vmem %s0, %s566
        %p568 = scmp.lt.s32.totalorder %s35, 1
        %s569 = scalar_select %p568, %s35, 1
        %s570 = smul.addr %s569, 8
        %s571 = scalar_lea.vmem %s1, %s570
        %v573 = vld [vmem:[%s567] sm:$0xff]
        %v574 = vld [vmem:[%s571] sm:$0xff]
        %v575 = vsub.f32 1.0, %v574
        %v576 = vmul.f32 %v575, -1e+09
        %v577 = vld [vmem:[%s2] sm:$0x1]
        %v578 = vld [vmem:[%s3] sm:$0x1]
        %vm579 = vcmask 261120
        %v580 = vsel %vm579, %v573, 0.0
        %581 = vadd.xlane.f32.xlu0 %v580
        %v582 = vpop.xlane.xlu0 %581
        %v583 = vrcp.pop 32.0
        %v584 = vmul.f32 %v582, %v583
        %v585 = vsub.f32 %v573, %v584
        %v586 = vmul.f32 %v585, %v585
        %v587 = vsel %vm579, %v586, 0.0
        %588 = vadd.xlane.f32.xlu0 %v587
        %v589 = vpop.xlane.xlu0 %588
        %v590 = vrcp.pop 31.0
        %v591 = vmul.f32 %v589, %v590
        %v592 = vrsqrt.pop %v591
        %v593 = vmul.f32 %v591, %v592
        %vm594 = vcmp.eq.f32.partialorder %v591, inf
        %v595 = vsel %vm594, %v591, %v593
        %vm596 = vcmp.eq.f32.partialorder %v591, 0.0
        %v597 = vand.u32 %v591, 2147483648
        %v598 = vsel %vm596, %v597, %v595
        %v600 = vlaneseq
        %v601 = vshrl.u32 %v600, 7
        %v602 = vsub.s32 0, %v601
        %v603 = vrot.slane %v577, %v602
        %v605 = vmul.f32 %v603, %v585
        %v606 = vadd.f32 %v598, 1e-06
        %v607 = vrcp.pop %v606
        %v608 = vmul.f32 %v605, %v607
        %v610 = vlaneseq
        %v611 = vshrl.u32 %v610, 7
        %v612 = vsub.s32 0, %v611
        %v613 = vrot.slane %v578, %v612
        %v615 = vadd.f32 %v608, %v613
        %v616 = vpack.c.bf16 %v615, %v615
        %v617 = vld [vmem:[%s4] sm:$0xf]
        %v618 = vld [vmem:[%s4 + $0x4] sm:$0xf]
        %v619 = vld [vmem:[%s4 + $0x8] sm:$0xf]
        %v620 = vld [vmem:[%s4 + $0xc] sm:$0xf]
        %v621 = vld [vmem:[%s5] sm:$0x1]
        %v623 = vlaneseq
        %v624 = vshrl.u32 %v623, 7
        %v625 = vsub.s32 0, %v624
        %v626 = vrot.slane %v621, %v625
        %v632 = vunpack.c.l.b16 %v617
        %v633 = vunpack.c.l.b16 %v618
        %v634 = vunpack.c.l.b16 %v619
        %v635 = vunpack.c.l.b16 %v620
        %v636 = vpack.c.b16 %v633, %v632
        %v637 = vpack.c.b16 %v635, %v634
        %v641 = vsel %vm579, %v616, 0
        %643 = vmatprep.subr.bf16.mxu0 0
        %644 = vmatpush1.bf16.msra.mxu0 0
        %645 = vmatprep.subr.bf16.mxu0 0
        %646 = vmatpush1.bf16.msra.mxu0 0
        %647 = vmatprep.subr.bf16.mxu0 0
        %648 = vmatpush1.bf16.msra.mxu0 0
        %649 = vmatprep.subr.bf16.mxu0 0
        %650 = vmatpush1.bf16.msra.mxu0 0
        %651 = vmatprep.subr.bf16.mxu0 0
        %652 = vmatpush1.bf16.msra.mxu0 0
        %653 = vmatprep.subr.bf16.mxu0 0
        %654 = vmatpush1.bf16.msra.mxu0 0
        %655 = vmatprep.subr.bf16.mxu0 0
        %656 = vmatpush1.bf16.msra.mxu0 %v637
        %657 = vmatprep.subr.bf16.mxu0 0
        %658 = vmatpush1.bf16.msra.mxu0 %v636
        %659 = vmatprep.subr.bf16.mxu0 0
        %660 = vmatpush2.bf16.msra.mxu0 0
        %661 = vmatprep.subr.bf16.mxu0 0
        %662 = vmatpush2.bf16.msra.mxu0 0
        %663 = vmatprep.subr.bf16.mxu0 0
        %664 = vmatpush2.bf16.msra.mxu0 0
        %665 = vmatprep.subr.bf16.mxu0 0
        %666 = vmatpush2.bf16.msra.mxu0 0
        %667 = vmatprep.subr.bf16.mxu0 0
        %668 = vmatpush2.bf16.msra.mxu0 0
        %669 = vmatprep.subr.bf16.mxu0 0
        %670 = vmatpush2.bf16.msra.mxu0 0
        %671 = vmatprep.subr.bf16.mxu0 0
        %672 = vmatpush2.bf16.msra.mxu0 0
        %673 = vmatprep.subr.bf16.mxu0 0
        %674 = vmatpush2.bf16.msra.mxu0 0
        %675 = vmatprep.mubr.bf16.mxu0 0
        %676 = vmatmul.mubr.bf16.gmra.mxu0 %v641
        %v677 = vpop.f32.mrf.mxu0
        %v678 = vadd.f32 %v626, %v677
        %v679 = vpop.f32.mrf.mxu0
        %v680 = vpop.f32.mrf.mxu0
        %v681 = vpop.f32.mrf.mxu0
        %682 = vdwg.mxu0
        %v683 = vmul.f32 %v678, 0.35355338
        %v684 = vpack.c.bf16 %v683, %v683
        %v685 = vpack.c.bf16 %v678, %v678
        %687 = vrot.lane.b32.xlu0 %v685, 96
        %v688 = vpop.permute.xlu0 %687
        %vm689 = vcmask 64512
        %v691 = vsel %vm689, %v684, 0
        %v694 = vsel %vm689, %v688, 0
        %696 = vmatprep.subr.bf16.mxu0 0
        %697 = vmatpush1.bf16.xpose.msra.mxu0 0
        %698 = vmatprep.subr.bf16.mxu0 0
        %699 = vmatpush1.bf16.xpose.msra.mxu0 0
        %700 = vmatprep.subr.bf16.mxu0 0
        %701 = vmatpush1.bf16.xpose.msra.mxu0 0
        %702 = vmatprep.subr.bf16.mxu0 0
        %703 = vmatpush1.bf16.xpose.msra.mxu0 0
        %704 = vmatprep.subr.bf16.mxu0 0
        %705 = vmatpush1.bf16.xpose.msra.mxu0 0
        %706 = vmatprep.subr.bf16.mxu0 0
        %707 = vmatpush1.bf16.xpose.msra.mxu0 0
        %708 = vmatprep.subr.bf16.mxu0 0
        %709 = vmatpush1.bf16.xpose.msra.mxu0 0
        %710 = vmatprep.subr.bf16.mxu0 0
        %711 = vmatpush1.bf16.xpose.msra.mxu0 %v694
        %712 = vmatprep.subr.bf16.mxu0 0
        %713 = vmatpush2.bf16.xpose.msra.mxu0 0
        %714 = vmatprep.subr.bf16.mxu0 0
        %715 = vmatpush2.bf16.xpose.msra.mxu0 0
        %716 = vmatprep.subr.bf16.mxu0 0
        %717 = vmatpush2.bf16.xpose.msra.mxu0 0
        %718 = vmatprep.subr.bf16.mxu0 0
        %719 = vmatpush2.bf16.xpose.msra.mxu0 0
        %720 = vmatprep.subr.bf16.mxu0 0
        %721 = vmatpush2.bf16.xpose.msra.mxu0 0
        %722 = vmatprep.subr.bf16.mxu0 0
        %723 = vmatpush2.bf16.xpose.msra.mxu0 0
        %724 = vmatprep.subr.bf16.mxu0 0
        %725 = vmatpush2.bf16.xpose.msra.mxu0 0
        %726 = vmatprep.subr.bf16.mxu0 0
        %727 = vmatpush2.bf16.xpose.msra.mxu0 0
        %728 = vmatprep.mubr.bf16.mxu0 0
        %729 = vmatmul.mubr.bf16.gmra.mxu0 %v691
        %v730 = vpop.f32.mrf.mxu0
        %v731 = vadd.f32 %v576, %v730
        %v732 = vpop.f32.mrf.mxu0
        %v733 = vpop.f32.mrf.mxu0
        %v734 = vpop.f32.mrf.mxu0
        %735 = vdwg.mxu0
        %v736 = vsel %vm689, %v731, -inf
        %737 = vmax.xlane.f32.xlu0 %v736
        %v738 = vpop.xlane.xlu0 %737
        %v739 = vsub.f32 %v731, %v738
        %v740 = vmul.f32 %v739, 1.442695
        %v741 = vpow.pop %v740
        %v742 = vsel %vm689, %v741, 0.0
        %743 = vadd.xlane.f32.xlu0 %v742
        %v744 = vpop.xlane.xlu0 %743
        %v745 = vrcp.pop %v744
        %v746 = vmul.f32 %v741, %v745
        %v747 = vpack.c.bf16 %v746, %v746
        %748 = vrot.lane.b32.xlu0 %v685, 64
        %v749 = vpop.permute.xlu0 %748
        %v751 = vsel %vm689, %v747, 0
        %vm753 = vcmask 1043456
        %v755 = vsel %vm753, %v749, 0
        %757 = vmatprep.subr.bf16.mxu0 0
        %758 = vmatpush1.bf16.msra.mxu0 0
        %759 = vmatprep.subr.bf16.mxu0 0
        %760 = vmatpush1.bf16.msra.mxu0 0
        %761 = vmatprep.subr.bf16.mxu0 0
        %762 = vmatpush1.bf16.msra.mxu0 0
        %763 = vmatprep.subr.bf16.mxu0 0
        %764 = vmatpush1.bf16.msra.mxu0 0
        %765 = vmatprep.subr.bf16.mxu0 0
        %766 = vmatpush1.bf16.msra.mxu0 0
        %767 = vmatprep.subr.bf16.mxu0 0
        %768 = vmatpush1.bf16.msra.mxu0 0
        %769 = vmatprep.subr.bf16.mxu0 0
        %770 = vmatpush1.bf16.msra.mxu0 0
        %771 = vmatprep.subr.bf16.mxu0 0
        %772 = vmatpush1.bf16.msra.mxu0 %v755
        %773 = vmatprep.subr.bf16.mxu0 0
        %774 = vmatpush2.bf16.msra.mxu0 0
        %775 = vmatprep.subr.bf16.mxu0 0
        %776 = vmatpush2.bf16.msra.mxu0 0
        %777 = vmatprep.subr.bf16.mxu0 0
        %778 = vmatpush2.bf16.msra.mxu0 0
        %779 = vmatprep.subr.bf16.mxu0 0
        %780 = vmatpush2.bf16.msra.mxu0 0
        %781 = vmatprep.subr.bf16.mxu0 0
        %782 = vmatpush2.bf16.msra.mxu0 0
        %783 = vmatprep.subr.bf16.mxu0 0
        %784 = vmatpush2.bf16.msra.mxu0 0
        %785 = vmatprep.subr.bf16.mxu0 0
        %786 = vmatpush2.bf16.msra.mxu0 0
        %787 = vmatprep.subr.bf16.mxu0 0
        %788 = vmatpush2.bf16.msra.mxu0 0
        %789 = vmatprep.mubr.bf16.mxu0 0
        %790 = vmatmul.mubr.bf16.gmra.mxu0 %v751
        %v791 = vpop.f32.mrf.mxu0
        %v792 = vadd.f32 0.0, %v791
        %v793 = vpop.f32.mrf.mxu0
        %v794 = vpop.f32.mrf.mxu0
        %v795 = vpop.f32.mrf.mxu0
        %796 = vdwg.mxu0
        %v797 = vpack.c.bf16 %v792, %v792
        %v798 = vld [vmem:[%s6] sm:$0xf]
        %800 = vrot.lane.b32.xlu0 %v684, 120
        %v801 = vpop.permute.xlu0 %800
        %802 = vrot.lane.b32.xlu0 %v685, 88
        %v803 = vpop.permute.xlu0 %802
        %v805 = vsel %vm689, %v801, 0
        %v808 = vsel %vm689, %v803, 0
        %810 = vmatprep.subr.bf16.mxu0 0
        %811 = vmatpush1.bf16.xpose.msra.mxu0 0
        %812 = vmatprep.subr.bf16.mxu0 0
        %813 = vmatpush1.bf16.xpose.msra.mxu0 0
        %814 = vmatprep.subr.bf16.mxu0 0
        %815 = vmatpush1.bf16.xpose.msra.mxu0 0
        %816 = vmatprep.subr.bf16.mxu0 0
        %817 = vmatpush1.bf16.xpose.msra.mxu0 0
        %818 = vmatprep.subr.bf16.mxu0 0
        %819 = vmatpush1.bf16.xpose.msra.mxu0 0
        %820 = vmatprep.subr.bf16.mxu0 0
        %821 = vmatpush1.bf16.xpose.msra.mxu0 0
        %822 = vmatprep.subr.bf16.mxu0 0
        %823 = vmatpush1.bf16.xpose.msra.mxu0 0
        %824 = vmatprep.subr.bf16.mxu0 0
        %825 = vmatpush1.bf16.xpose.msra.mxu0 %v808
        %826 = vmatprep.subr.bf16.mxu0 0
        %827 = vmatpush2.bf16.xpose.msra.mxu0 0
        %828 = vmatprep.subr.bf16.mxu0 0
        %829 = vmatpush2.bf16.xpose.msra.mxu0 0
        %830 = vmatprep.subr.bf16.mxu0 0
        %831 = vmatpush2.bf16.xpose.msra.mxu0 0
        %832 = vmatprep.subr.bf16.mxu0 0
        %833 = vmatpush2.bf16.xpose.msra.mxu0 0
        %834 = vmatprep.subr.bf16.mxu0 0
        %835 = vmatpush2.bf16.xpose.msra.mxu0 0
        %836 = vmatprep.subr.bf16.mxu0 0
        %837 = vmatpush2.bf16.xpose.msra.mxu0 0
        %838 = vmatprep.subr.bf16.mxu0 0
        %839 = vmatpush2.bf16.xpose.msra.mxu0 0
        %840 = vmatprep.subr.bf16.mxu0 0
        %841 = vmatpush2.bf16.xpose.msra.mxu0 0
        %842 = vmatprep.mubr.bf16.mxu0 0
        %843 = vmatmul.mubr.bf16.gmra.mxu0 %v805
        %v844 = vpop.f32.mrf.mxu0
        %v845 = vadd.f32 %v576, %v844
        %v846 = vpop.f32.mrf.mxu0
        %v847 = vpop.f32.mrf.mxu0
        %v848 = vpop.f32.mrf.mxu0
        %849 = vdwg.mxu0
        %v850 = vsel %vm689, %v845, -inf
        %851 = vmax.xlane.f32.xlu0 %v850
        %v852 = vpop.xlane.xlu0 %851
        %v853 = vsub.f32 %v845, %v852
        %v854 = vmul.f32 %v853, 1.442695
        %v855 = vpow.pop %v854
        %v856 = vsel %vm689, %v855, 0.0
        %857 = vadd.xlane.f32.xlu0 %v856
        %v858 = vpop.xlane.xlu0 %857
        %v859 = vrcp.pop %v858
        %v860 = vmul.f32 %v855, %v859
        %v861 = vpack.c.bf16 %v860, %v860
        %862 = vrot.lane.b32.xlu0 %v685, 56
        %v863 = vpop.permute.xlu0 %862
        %v865 = vsel %vm689, %v861, 0
        %v868 = vsel %vm753, %v863, 0
        %870 = vmatprep.subr.bf16.mxu0 0
        %871 = vmatpush1.bf16.msra.mxu0 0
        %872 = vmatprep.subr.bf16.mxu0 0
        %873 = vmatpush1.bf16.msra.mxu0 0
        %874 = vmatprep.subr.bf16.mxu0 0
        %875 = vmatpush1.bf16.msra.mxu0 0
        %876 = vmatprep.subr.bf16.mxu0 0
        %877 = vmatpush1.bf16.msra.mxu0 0
        %878 = vmatprep.subr.bf16.mxu0 0
        %879 = vmatpush1.bf16.msra.mxu0 0
        %880 = vmatprep.subr.bf16.mxu0 0
        %881 = vmatpush1.bf16.msra.mxu0 0
        %882 = vmatprep.subr.bf16.mxu0 0
        %883 = vmatpush1.bf16.msra.mxu0 0
        %884 = vmatprep.subr.bf16.mxu0 0
        %885 = vmatpush1.bf16.msra.mxu0 %v868
        %886 = vmatprep.subr.bf16.mxu0 0
        %887 = vmatpush2.bf16.msra.mxu0 0
        %888 = vmatprep.subr.bf16.mxu0 0
        %889 = vmatpush2.bf16.msra.mxu0 0
        %890 = vmatprep.subr.bf16.mxu0 0
        %891 = vmatpush2.bf16.msra.mxu0 0
        %892 = vmatprep.subr.bf16.mxu0 0
        %893 = vmatpush2.bf16.msra.mxu0 0
        %894 = vmatprep.subr.bf16.mxu0 0
        %895 = vmatpush2.bf16.msra.mxu0 0
        %896 = vmatprep.subr.bf16.mxu0 0
        %897 = vmatpush2.bf16.msra.mxu0 0
        %898 = vmatprep.subr.bf16.mxu0 0
        %899 = vmatpush2.bf16.msra.mxu0 0
        %900 = vmatprep.subr.bf16.mxu0 0
        %901 = vmatpush2.bf16.msra.mxu0 0
        %902 = vmatprep.mubr.bf16.mxu0 0
        %903 = vmatmul.mubr.bf16.gmra.mxu0 %v865
        %v904 = vpop.f32.mrf.mxu0
        %v905 = vadd.f32 0.0, %v904
        %v906 = vpop.f32.mrf.mxu0
        %v907 = vpop.f32.mrf.mxu0
        %v908 = vpop.f32.mrf.mxu0
        %909 = vdwg.mxu0
        %v910 = vpack.c.bf16 %v905, %v905
        %s911 = scalar_lea.vmem %s6, 4
        %v912 = vld [vmem:[%s911] sm:$0xf]
        %v914 = vsel %vm689, %v910, 0
        %v917 = vsel %vm753, %v912, 0
        %919 = vmatprep.subr.bf16.mxu0 0
        %920 = vmatpush1.bf16.msra.mxu0 0
        %921 = vmatprep.subr.bf16.mxu0 0
        %922 = vmatpush1.bf16.msra.mxu0 0
        %923 = vmatprep.subr.bf16.mxu0 0
        %924 = vmatpush1.bf16.msra.mxu0 0
        %925 = vmatprep.subr.bf16.mxu0 0
        %926 = vmatpush1.bf16.msra.mxu0 0
        %927 = vmatprep.subr.bf16.mxu0 0
        %928 = vmatpush1.bf16.msra.mxu0 0
        %929 = vmatprep.subr.bf16.mxu0 0
        %930 = vmatpush1.bf16.msra.mxu0 0
        %931 = vmatprep.subr.bf16.mxu0 0
        %932 = vmatpush1.bf16.msra.mxu0 0
        %933 = vmatprep.subr.bf16.mxu0 0
        %934 = vmatpush1.bf16.msra.mxu0 %v917
        %935 = vmatprep.subr.bf16.mxu0 0
        %936 = vmatpush2.bf16.msra.mxu0 0
        %937 = vmatprep.subr.bf16.mxu0 0
        %938 = vmatpush2.bf16.msra.mxu0 0
        %939 = vmatprep.subr.bf16.mxu0 0
        %940 = vmatpush2.bf16.msra.mxu0 0
        %941 = vmatprep.subr.bf16.mxu0 0
        %942 = vmatpush2.bf16.msra.mxu0 0
        %943 = vmatprep.subr.bf16.mxu0 0
        %944 = vmatpush2.bf16.msra.mxu0 0
        %945 = vmatprep.subr.bf16.mxu0 0
        %946 = vmatpush2.bf16.msra.mxu0 0
        %947 = vmatprep.subr.bf16.mxu0 0
        %948 = vmatpush2.bf16.msra.mxu0 0
        %949 = vmatprep.subr.bf16.mxu0 0
        %950 = vmatpush2.bf16.msra.mxu0 0
        %951 = vmatprep.mubr.bf16.mxu0 0
        %952 = vmatmul.mubr.bf16.gmra.mxu0 %v914
        %v953 = vpop.f32.mrf.mxu0
        %v954 = vadd.f32 0.0, %v953
        %v955 = vpop.f32.mrf.mxu0
        %v956 = vpop.f32.mrf.mxu0
        %v957 = vpop.f32.mrf.mxu0
        %958 = vdwg.mxu0
        %v960 = vsel %vm689, %v797, 0
        %v963 = vsel %vm753, %v798, 0
        %965 = vmatprep.subr.bf16.mxu0 0
        %966 = vmatpush1.bf16.msra.mxu0 0
        %967 = vmatprep.subr.bf16.mxu0 0
        %968 = vmatpush1.bf16.msra.mxu0 0
        %969 = vmatprep.subr.bf16.mxu0 0
        %970 = vmatpush1.bf16.msra.mxu0 0
        %971 = vmatprep.subr.bf16.mxu0 0
        %972 = vmatpush1.bf16.msra.mxu0 0
        %973 = vmatprep.subr.bf16.mxu0 0
        %974 = vmatpush1.bf16.msra.mxu0 0
        %975 = vmatprep.subr.bf16.mxu0 0
        %976 = vmatpush1.bf16.msra.mxu0 0
        %977 = vmatprep.subr.bf16.mxu0 0
        %978 = vmatpush1.bf16.msra.mxu0 0
        %979 = vmatprep.subr.bf16.mxu0 0
        %980 = vmatpush1.bf16.msra.mxu0 %v963
        %981 = vmatprep.subr.bf16.mxu0 0
        %982 = vmatpush2.bf16.msra.mxu0 0
        %983 = vmatprep.subr.bf16.mxu0 0
        %984 = vmatpush2.bf16.msra.mxu0 0
        %985 = vmatprep.subr.bf16.mxu0 0
        %986 = vmatpush2.bf16.msra.mxu0 0
        %987 = vmatprep.subr.bf16.mxu0 0
        %988 = vmatpush2.bf16.msra.mxu0 0
        %989 = vmatprep.subr.bf16.mxu0 0
        %990 = vmatpush2.bf16.msra.mxu0 0
        %991 = vmatprep.subr.bf16.mxu0 0
        %992 = vmatpush2.bf16.msra.mxu0 0
        %993 = vmatprep.subr.bf16.mxu0 0
        %994 = vmatpush2.bf16.msra.mxu0 0
        %995 = vmatprep.subr.bf16.mxu0 0
        %996 = vmatpush2.bf16.msra.mxu0 0
        %997 = vmatprep.mubr.bf16.mxu0 0
        %998 = vmatmul.mubr.bf16.gmra.mxu0 %v960
        %v999 = vpop.f32.mrf.mxu0
        %v1000 = vadd.f32 %v954, %v999
        %v1001 = vpop.f32.mrf.mxu0
        %v1002 = vpop.f32.mrf.mxu0
        %v1003 = vpop.f32.mrf.mxu0
        %1004 = vdwg.mxu0
        %1005 = vrot.lane.b32.xlu0 %v684, 112
        %v1006 = vpop.permute.xlu0 %1005
        %1007 = vrot.lane.b32.xlu0 %v685, 80
        %v1008 = vpop.permute.xlu0 %1007
        %v1010 = vsel %vm689, %v1006, 0
        %v1013 = vsel %vm689, %v1008, 0
        %1015 = vmatprep.subr.bf16.mxu0 0
        %1016 = vmatpush1.bf16.xpose.msra.mxu0 0
        %1017 = vmatprep.subr.bf16.mxu0 0
        %1018 = vmatpush1.bf16.xpose.msra.mxu0 0
        %1019 = vmatprep.subr.bf16.mxu0 0
        %1020 = vmatpush1.bf16.xpose.msra.mxu0 0
        %1021 = vmatprep.subr.bf16.mxu0 0
        %1022 = vmatpush1.bf16.xpose.msra.mxu0 0
        %1023 = vmatprep.subr.bf16.mxu0 0
        %1024 = vmatpush1.bf16.xpose.msra.mxu0 0
        %1025 = vmatprep.subr.bf16.mxu0 0
        %1026 = vmatpush1.bf16.xpose.msra.mxu0 0
        %1027 = vmatprep.subr.bf16.mxu0 0
        %1028 = vmatpush1.bf16.xpose.msra.mxu0 0
        %1029 = vmatprep.subr.bf16.mxu0 0
        %1030 = vmatpush1.bf16.xpose.msra.mxu0 %v1013
        %1031 = vmatprep.subr.bf16.mxu0 0
        %1032 = vmatpush2.bf16.xpose.msra.mxu0 0
        %1033 = vmatprep.subr.bf16.mxu0 0
        %1034 = vmatpush2.bf16.xpose.msra.mxu0 0
        %1035 = vmatprep.subr.bf16.mxu0 0
        %1036 = vmatpush2.bf16.xpose.msra.mxu0 0
        %1037 = vmatprep.subr.bf16.mxu0 0
        %1038 = vmatpush2.bf16.xpose.msra.mxu0 0
        %1039 = vmatprep.subr.bf16.mxu0 0
        %1040 = vmatpush2.bf16.xpose.msra.mxu0 0
        %1041 = vmatprep.subr.bf16.mxu0 0
        %1042 = vmatpush2.bf16.xpose.msra.mxu0 0
        %1043 = vmatprep.subr.bf16.mxu0 0
        %1044 = vmatpush2.bf16.xpose.msra.mxu0 0
        %1045 = vmatprep.subr.bf16.mxu0 0
        %1046 = vmatpush2.bf16.xpose.msra.mxu0 0
        %1047 = vmatprep.mubr.bf16.mxu0 0
        %1048 = vmatmul.mubr.bf16.gmra.mxu0 %v1010
        %v1049 = vpop.f32.mrf.mxu0
        %v1050 = vadd.f32 %v576, %v1049
        %v1051 = vpop.f32.mrf.mxu0
        %v1052 = vpop.f32.mrf.mxu0
        %v1053 = vpop.f32.mrf.mxu0
        %1054 = vdwg.mxu0
        %v1055 = vsel %vm689, %v1050, -inf
        %1056 = vmax.xlane.f32.xlu0 %v1055
        %v1057 = vpop.xlane.xlu0 %1056
        %v1058 = vsub.f32 %v1050, %v1057
        %v1059 = vmul.f32 %v1058, 1.442695
        %v1060 = vpow.pop %v1059
        %v1061 = vsel %vm689, %v1060, 0.0
        %1062 = vadd.xlane.f32.xlu0 %v1061
        %v1063 = vpop.xlane.xlu0 %1062
        %v1064 = vrcp.pop %v1063
        %v1065 = vmul.f32 %v1060, %v1064
        %v1066 = vpack.c.bf16 %v1065, %v1065
        %1067 = vrot.lane.b32.xlu0 %v685, 48
        %v1068 = vpop.permute.xlu0 %1067
        %v1070 = vsel %vm689, %v1066, 0
        %v1073 = vsel %vm753, %v1068, 0
        %1075 = vmatprep.subr.bf16.mxu0 0
        %1076 = vmatpush1.bf16.msra.mxu0 0
        %1077 = vmatprep.subr.bf16.mxu0 0
        %1078 = vmatpush1.bf16.msra.mxu0 0
        %1079 = vmatprep.subr.bf16.mxu0 0
        %1080 = vmatpush1.bf16.msra.mxu0 0
        %1081 = vmatprep.subr.bf16.mxu0 0
        %1082 = vmatpush1.bf16.msra.mxu0 0
        %1083 = vmatprep.subr.bf16.mxu0 0
        %1084 = vmatpush1.bf16.msra.mxu0 0
        %1085 = vmatprep.subr.bf16.mxu0 0
        %1086 = vmatpush1.bf16.msra.mxu0 0
        %1087 = vmatprep.subr.bf16.mxu0 0
        %1088 = vmatpush1.bf16.msra.mxu0 0
        %1089 = vmatprep.subr.bf16.mxu0 0
        %1090 = vmatpush1.bf16.msra.mxu0 %v1073
        %1091 = vmatprep.subr.bf16.mxu0 0
        %1092 = vmatpush2.bf16.msra.mxu0 0
        %1093 = vmatprep.subr.bf16.mxu0 0
        %1094 = vmatpush2.bf16.msra.mxu0 0
        %1095 = vmatprep.subr.bf16.mxu0 0
        %1096 = vmatpush2.bf16.msra.mxu0 0
        %1097 = vmatprep.subr.bf16.mxu0 0
        %1098 = vmatpush2.bf16.msra.mxu0 0
        %1099 = vmatprep.subr.bf16.mxu0 0
        %1100 = vmatpush2.bf16.msra.mxu0 0
        %1101 = vmatprep.subr.bf16.mxu0 0
        %1102 = vmatpush2.bf16.msra.mxu0 0
        %1103 = vmatprep.subr.bf16.mxu0 0
        %1104 = vmatpush2.bf16.msra.mxu0 0
        %1105 = vmatprep.subr.bf16.mxu0 0
        %1106 = vmatpush2.bf16.msra.mxu0 0
        %1107 = vmatprep.mubr.bf16.mxu0 0
        %1108 = vmatmul.mubr.bf16.gmra.mxu0 %v1070
        %v1109 = vpop.f32.mrf.mxu0
        %v1110 = vadd.f32 0.0, %v1109
        %v1111 = vpop.f32.mrf.mxu0
        %v1112 = vpop.f32.mrf.mxu0
        %v1113 = vpop.f32.mrf.mxu0
        %1114 = vdwg.mxu0
        %v1115 = vpack.c.bf16 %v1110, %v1110
        %s1116 = scalar_lea.vmem %s6, 8
        %v1117 = vld [vmem:[%s1116] sm:$0xf]
        %v1119 = vsel %vm689, %v1115, 0
        %v1122 = vsel %vm753, %v1117, 0
        %1124 = vmatprep.subr.bf16.mxu0 0
        %1125 = vmatpush1.bf16.msra.mxu0 0
        %1126 = vmatprep.subr.bf16.mxu0 0
        %1127 = vmatpush1.bf16.msra.mxu0 0
        %1128 = vmatprep.subr.bf16.mxu0 0
        %1129 = vmatpush1.bf16.msra.mxu0 0
        %1130 = vmatprep.subr.bf16.mxu0 0
        %1131 = vmatpush1.bf16.msra.mxu0 0
        %1132 = vmatprep.subr.bf16.mxu0 0
        %1133 = vmatpush1.bf16.msra.mxu0 0
        %1134 = vmatprep.subr.bf16.mxu0 0
        %1135 = vmatpush1.bf16.msra.mxu0 0
        %1136 = vmatprep.subr.bf16.mxu0 0
        %1137 = vmatpush1.bf16.msra.mxu0 0
        %1138 = vmatprep.subr.bf16.mxu0 0
        %1139 = vmatpush1.bf16.msra.mxu0 %v1122
        %1140 = vmatprep.subr.bf16.mxu0 0
        %1141 = vmatpush2.bf16.msra.mxu0 0
        %1142 = vmatprep.subr.bf16.mxu0 0
        %1143 = vmatpush2.bf16.msra.mxu0 0
        %1144 = vmatprep.subr.bf16.mxu0 0
        %1145 = vmatpush2.bf16.msra.mxu0 0
        %1146 = vmatprep.subr.bf16.mxu0 0
        %1147 = vmatpush2.bf16.msra.mxu0 0
        %1148 = vmatprep.subr.bf16.mxu0 0
        %1149 = vmatpush2.bf16.msra.mxu0 0
        %1150 = vmatprep.subr.bf16.mxu0 0
        %1151 = vmatpush2.bf16.msra.mxu0 0
        %1152 = vmatprep.subr.bf16.mxu0 0
        %1153 = vmatpush2.bf16.msra.mxu0 0
        %1154 = vmatprep.subr.bf16.mxu0 0
        %1155 = vmatpush2.bf16.msra.mxu0 0
        %1156 = vmatprep.mubr.bf16.mxu0 0
        %1157 = vmatmul.mubr.bf16.gmra.mxu0 %v1119
        %v1158 = vpop.f32.mrf.mxu0
        %v1159 = vadd.f32 0.0, %v1158
        %v1160 = vpop.f32.mrf.mxu0
        %v1161 = vpop.f32.mrf.mxu0
        %v1162 = vpop.f32.mrf.mxu0
        %1163 = vdwg.mxu0
        %v1164 = vadd.f32 %v1000, %v1159
        %1165 = vrot.lane.b32.xlu0 %v684, 104
        %v1166 = vpop.permute.xlu0 %1165
        %1167 = vrot.lane.b32.xlu0 %v685, 72
        %v1168 = vpop.permute.xlu0 %1167
        %v1170 = vsel %vm689, %v1166, 0
        %v1173 = vsel %vm689, %v1168, 0
        %1175 = vmatprep.subr.bf16.mxu0 0
        %1176 = vmatpush1.bf16.xpose.msra.mxu0 0
        %1177 = vmatprep.subr.bf16.mxu0 0
        %1178 = vmatpush1.bf16.xpose.msra.mxu0 0
        %1179 = vmatprep.subr.bf16.mxu0 0
        %1180 = vmatpush1.bf16.xpose.msra.mxu0 0
        %1181 = vmatprep.subr.bf16.mxu0 0
        %1182 = vmatpush1.bf16.xpose.msra.mxu0 0
        %1183 = vmatprep.subr.bf16.mxu0 0
        %1184 = vmatpush1.bf16.xpose.msra.mxu0 0
        %1185 = vmatprep.subr.bf16.mxu0 0
        %1186 = vmatpush1.bf16.xpose.msra.mxu0 0
        %1187 = vmatprep.subr.bf16.mxu0 0
        %1188 = vmatpush1.bf16.xpose.msra.mxu0 0
        %1189 = vmatprep.subr.bf16.mxu0 0
        %1190 = vmatpush1.bf16.xpose.msra.mxu0 %v1173
        %1191 = vmatprep.subr.bf16.mxu0 0
        %1192 = vmatpush2.bf16.xpose.msra.mxu0 0
        %1193 = vmatprep.subr.bf16.mxu0 0
        %1194 = vmatpush2.bf16.xpose.msra.mxu0 0
        %1195 = vmatprep.subr.bf16.mxu0 0
        %1196 = vmatpush2.bf16.xpose.msra.mxu0 0
        %1197 = vmatprep.subr.bf16.mxu0 0
        %1198 = vmatpush2.bf16.xpose.msra.mxu0 0
        %1199 = vmatprep.subr.bf16.mxu0 0
        %1200 = vmatpush2.bf16.xpose.msra.mxu0 0
        %1201 = vmatprep.subr.bf16.mxu0 0
        %1202 = vmatpush2.bf16.xpose.msra.mxu0 0
        %1203 = vmatprep.subr.bf16.mxu0 0
        %1204 = vmatpush2.bf16.xpose.msra.mxu0 0
        %1205 = vmatprep.subr.bf16.mxu0 0
        %1206 = vmatpush2.bf16.xpose.msra.mxu0 0
        %1207 = vmatprep.mubr.bf16.mxu0 0
        %1208 = vmatmul.mubr.bf16.gmra.mxu0 %v1170
        %v1209 = vpop.f32.mrf.mxu0
        %v1210 = vadd.f32 %v576, %v1209
        %v1211 = vpop.f32.mrf.mxu0
        %v1212 = vpop.f32.mrf.mxu0
        %v1213 = vpop.f32.mrf.mxu0
        %1214 = vdwg.mxu0
        %v1215 = vsel %vm689, %v1210, -inf
        %1216 = vmax.xlane.f32.xlu0 %v1215
        %v1217 = vpop.xlane.xlu0 %1216
        %v1218 = vsub.f32 %v1210, %v1217
        %v1219 = vmul.f32 %v1218, 1.442695
        %v1220 = vpow.pop %v1219
        %v1221 = vsel %vm689, %v1220, 0.0
        %1222 = vadd.xlane.f32.xlu0 %v1221
        %v1223 = vpop.xlane.xlu0 %1222
        %v1224 = vrcp.pop %v1223
        %v1225 = vmul.f32 %v1220, %v1224
        %v1226 = vpack.c.bf16 %v1225, %v1225
        %1227 = vrot.lane.b32.xlu0 %v685, 40
        %v1228 = vpop.permute.xlu0 %1227
        %v1230 = vsel %vm689, %v1226, 0
        %v1233 = vsel %vm753, %v1228, 0
        %1235 = vmatprep.subr.bf16.mxu0 0
        %1236 = vmatpush1.bf16.msra.mxu0 0
        %1237 = vmatprep.subr.bf16.mxu0 0
        %1238 = vmatpush1.bf16.msra.mxu0 0
        %1239 = vmatprep.subr.bf16.mxu0 0
        %1240 = vmatpush1.bf16.msra.mxu0 0
        %1241 = vmatprep.subr.bf16.mxu0 0
        %1242 = vmatpush1.bf16.msra.mxu0 0
        %1243 = vmatprep.subr.bf16.mxu0 0
        %1244 = vmatpush1.bf16.msra.mxu0 0
        %1245 = vmatprep.subr.bf16.mxu0 0
        %1246 = vmatpush1.bf16.msra.mxu0 0
        %1247 = vmatprep.subr.bf16.mxu0 0
        %1248 = vmatpush1.bf16.msra.mxu0 0
        %1249 = vmatprep.subr.bf16.mxu0 0
        %1250 = vmatpush1.bf16.msra.mxu0 %v1233
        %1251 = vmatprep.subr.bf16.mxu0 0
        %1252 = vmatpush2.bf16.msra.mxu0 0
        %1253 = vmatprep.subr.bf16.mxu0 0
        %1254 = vmatpush2.bf16.msra.mxu0 0
        %1255 = vmatprep.subr.bf16.mxu0 0
        %1256 = vmatpush2.bf16.msra.mxu0 0
        %1257 = vmatprep.subr.bf16.mxu0 0
        %1258 = vmatpush2.bf16.msra.mxu0 0
        %1259 = vmatprep.subr.bf16.mxu0 0
        %1260 = vmatpush2.bf16.msra.mxu0 0
        %1261 = vmatprep.subr.bf16.mxu0 0
        %1262 = vmatpush2.bf16.msra.mxu0 0
        %1263 = vmatprep.subr.bf16.mxu0 0
        %1264 = vmatpush2.bf16.msra.mxu0 0
        %1265 = vmatprep.subr.bf16.mxu0 0
        %1266 = vmatpush2.bf16.msra.mxu0 0
        %1267 = vmatprep.mubr.bf16.mxu0 0
        %1268 = vmatmul.mubr.bf16.gmra.mxu0 %v1230
        %v1269 = vpop.f32.mrf.mxu0
        %v1270 = vadd.f32 0.0, %v1269
        %v1271 = vpop.f32.mrf.mxu0
        %v1272 = vpop.f32.mrf.mxu0
        %v1273 = vpop.f32.mrf.mxu0
        %1274 = vdwg.mxu0
        %v1275 = vpack.c.bf16 %v1270, %v1270
        %s1276 = scalar_lea.vmem %s6, 12
        %v1277 = vld [vmem:[%s1276] sm:$0xf]
        %v1279 = vsel %vm689, %v1275, 0
        %v1282 = vsel %vm753, %v1277, 0
        %1284 = vmatprep.subr.bf16.mxu0 0
        %1285 = vmatpush1.bf16.msra.mxu0 0
        %1286 = vmatprep.subr.bf16.mxu0 0
        %1287 = vmatpush1.bf16.msra.mxu0 0
        %1288 = vmatprep.subr.bf16.mxu0 0
        %1289 = vmatpush1.bf16.msra.mxu0 0
        %1290 = vmatprep.subr.bf16.mxu0 0
        %1291 = vmatpush1.bf16.msra.mxu0 0
        %1292 = vmatprep.subr.bf16.mxu0 0
        %1293 = vmatpush1.bf16.msra.mxu0 0
        %1294 = vmatprep.subr.bf16.mxu0 0
        %1295 = vmatpush1.bf16.msra.mxu0 0
        %1296 = vmatprep.subr.bf16.mxu0 0
        %1297 = vmatpush1.bf16.msra.mxu0 0
        %1298 = vmatprep.subr.bf16.mxu0 0
        %1299 = vmatpush1.bf16.msra.mxu0 %v1282
        %1300 = vmatprep.subr.bf16.mxu0 0
        %1301 = vmatpush2.bf16.msra.mxu0 0
        %1302 = vmatprep.subr.bf16.mxu0 0
        %1303 = vmatpush2.bf16.msra.mxu0 0
        %1304 = vmatprep.subr.bf16.mxu0 0
        %1305 = vmatpush2.bf16.msra.mxu0 0
        %1306 = vmatprep.subr.bf16.mxu0 0
        %1307 = vmatpush2.bf16.msra.mxu0 0
        %1308 = vmatprep.subr.bf16.mxu0 0
        %1309 = vmatpush2.bf16.msra.mxu0 0
        %1310 = vmatprep.subr.bf16.mxu0 0
        %1311 = vmatpush2.bf16.msra.mxu0 0
        %1312 = vmatprep.subr.bf16.mxu0 0
        %1313 = vmatpush2.bf16.msra.mxu0 0
        %1314 = vmatprep.subr.bf16.mxu0 0
        %1315 = vmatpush2.bf16.msra.mxu0 0
        %1316 = vmatprep.mubr.bf16.mxu0 0
        %1317 = vmatmul.mubr.bf16.gmra.mxu0 %v1279
        %v1318 = vpop.f32.mrf.mxu0
        %v1319 = vadd.f32 0.0, %v1318
        %v1320 = vpop.f32.mrf.mxu0
        %v1321 = vpop.f32.mrf.mxu0
        %v1322 = vpop.f32.mrf.mxu0
        %1323 = vdwg.mxu0
        %v1324 = vadd.f32 %v1164, %v1319
        %v1325 = vadd.f32 %v573, %v1324
        %v1326 = vld [vmem:[%s7] sm:$0x1]
        %v1328 = vlaneseq
        %v1329 = vshrl.u32 %v1328, 7
        %v1330 = vsub.s32 0, %v1329
        %v1331 = vrot.slane %v1326, %v1330
        %v1333 = vadd.f32 %v1325, %v1331
        %v1334 = vld [vmem:[%s8] sm:$0x1]
        %v1335 = vld [vmem:[%s9] sm:$0x1]
        %v1336 = vsel %vm579, %v1333, 0.0
        %1337 = vadd.xlane.f32.xlu0 %v1336
        %v1338 = vpop.xlane.xlu0 %1337
        %v1339 = vmul.f32 %v1338, %v583
        %v1340 = vsub.f32 %v1333, %v1339
        %v1341 = vmul.f32 %v1340, %v1340
        %v1342 = vsel %vm579, %v1341, 0.0
        %1343 = vadd.xlane.f32.xlu0 %v1342
        %v1344 = vpop.xlane.xlu0 %1343
        %v1345 = vmul.f32 %v1344, %v590
        %v1346 = vrsqrt.pop %v1345
        %v1347 = vmul.f32 %v1345, %v1346
        %vm1348 = vcmp.eq.f32.partialorder %v1345, inf
        %v1349 = vsel %vm1348, %v1345, %v1347
        %vm1350 = vcmp.eq.f32.partialorder %v1345, 0.0
        %v1351 = vand.u32 %v1345, 2147483648
        %v1352 = vsel %vm1350, %v1351, %v1349
        %v1354 = vlaneseq
        %v1355 = vshrl.u32 %v1354, 7
        %v1356 = vsub.s32 0, %v1355
        %v1357 = vrot.slane %v1334, %v1356
        %v1359 = vmul.f32 %v1357, %v1340
        %v1360 = vadd.f32 %v1352, 1e-06
        %v1361 = vrcp.pop %v1360
        %v1362 = vmul.f32 %v1359, %v1361
        %v1364 = vlaneseq
        %v1365 = vshrl.u32 %v1364, 7
        %v1366 = vsub.s32 0, %v1365
        %v1367 = vrot.slane %v1335, %v1366
        %v1369 = vadd.f32 %v1362, %v1367
        %v1370 = vpack.c.bf16 %v1369, %v1369
        %v1371 = vld [vmem:[%s10] sm:$0xf]
        %v1372 = vld [vmem:[%s10 + $0x4] sm:$0xf]
        %v1373 = vld [vmem:[%s10 + $0x8] sm:$0xf]
        %v1374 = vld [vmem:[%s10 + $0xc] sm:$0xf]
        %v1375 = vld [vmem:[%s11] sm:$0x1]
        %v1377 = vlaneseq
        %v1378 = vshrl.u32 %v1377, 7
        %v1379 = vsub.s32 0, %v1378
        %v1380 = vrot.slane %v1375, %v1379
        %v1386 = vunpack.c.l.b16 %v1371
        %v1387 = vunpack.c.l.b16 %v1372
        %v1388 = vunpack.c.l.b16 %v1373
        %v1389 = vunpack.c.l.b16 %v1374
        %v1390 = vpack.c.b16 %v1387, %v1386
        %v1391 = vpack.c.b16 %v1389, %v1388
        %v1395 = vsel %vm579, %v1370, 0
        %1397 = vmatprep.subr.bf16.mxu0 0
        %1398 = vmatpush1.bf16.msra.mxu0 0
        %1399 = vmatprep.subr.bf16.mxu0 0
        %1400 = vmatpush1.bf16.msra.mxu0 0
        %1401 = vmatprep.subr.bf16.mxu0 0
        %1402 = vmatpush1.bf16.msra.mxu0 0
        %1403 = vmatprep.subr.bf16.mxu0 0
        %1404 = vmatpush1.bf16.msra.mxu0 0
        %1405 = vmatprep.subr.bf16.mxu0 0
        %1406 = vmatpush1.bf16.msra.mxu0 0
        %1407 = vmatprep.subr.bf16.mxu0 0
        %1408 = vmatpush1.bf16.msra.mxu0 0
        %1409 = vmatprep.subr.bf16.mxu0 0
        %1410 = vmatpush1.bf16.msra.mxu0 %v1391
        %1411 = vmatprep.subr.bf16.mxu0 0
        %1412 = vmatpush1.bf16.msra.mxu0 %v1390
        %1413 = vmatprep.subr.bf16.mxu0 0
        %1414 = vmatpush2.bf16.msra.mxu0 0
        %1415 = vmatprep.subr.bf16.mxu0 0
        %1416 = vmatpush2.bf16.msra.mxu0 0
        %1417 = vmatprep.subr.bf16.mxu0 0
        %1418 = vmatpush2.bf16.msra.mxu0 0
        %1419 = vmatprep.subr.bf16.mxu0 0
        %1420 = vmatpush2.bf16.msra.mxu0 0
        %1421 = vmatprep.subr.bf16.mxu0 0
        %1422 = vmatpush2.bf16.msra.mxu0 0
        %1423 = vmatprep.subr.bf16.mxu0 0
        %1424 = vmatpush2.bf16.msra.mxu0 0
        %1425 = vmatprep.subr.bf16.mxu0 0
        %1426 = vmatpush2.bf16.msra.mxu0 0
        %1427 = vmatprep.subr.bf16.mxu0 0
        %1428 = vmatpush2.bf16.msra.mxu0 0
        %1429 = vmatprep.mubr.bf16.mxu0 0
        %1430 = vmatmul.mubr.bf16.gmra.mxu0 %v1395
        %v1431 = vpop.f32.mrf.mxu0
        %v1432 = vadd.f32 %v1380, %v1431
        %v1433 = vpop.f32.mrf.mxu0
        %v1434 = vpop.f32.mrf.mxu0
        %v1435 = vpop.f32.mrf.mxu0
        %1436 = vdwg.mxu0
        %v1437 = vmax.f32 %v1432, 0.0
        %v1438 = vpack.c.bf16 %v1437, %v1437
        %v1439 = vld [vmem:[%s12] sm:$0xf]
        %v1440 = vld [vmem:[%s12 + $0x4] sm:$0xf]
        %v1441 = vld [vmem:[%s12 + $0x8] sm:$0xf]
        %v1442 = vld [vmem:[%s12 + $0xc] sm:$0xf]
        %v1443 = vld [vmem:[%s12 + $0x10] sm:$0xf]
        %v1444 = vld [vmem:[%s12 + $0x14] sm:$0xf]
        %v1445 = vld [vmem:[%s12 + $0x18] sm:$0xf]
        %v1446 = vld [vmem:[%s12 + $0x1c] sm:$0xf]
        %v1447 = vld [vmem:[%s13] sm:$0x1]
        %v1449 = vlaneseq
        %v1450 = vshrl.u32 %v1449, 7
        %v1451 = vsub.s32 0, %v1450
        %v1452 = vrot.slane %v1447, %v1451
        %v1462 = vunpack.c.l.b16 %v1439
        %v1463 = vunpack.c.l.b16 %v1440
        %v1464 = vunpack.c.l.b16 %v1441
        %v1465 = vunpack.c.l.b16 %v1442
        %v1466 = vunpack.c.l.b16 %v1443
        %v1467 = vunpack.c.l.b16 %v1444
        %v1468 = vunpack.c.l.b16 %v1445
        %v1469 = vunpack.c.l.b16 %v1446
        %v1470 = vpack.c.b16 %v1463, %v1462
        %v1471 = vpack.c.b16 %v1465, %v1464
        %v1472 = vpack.c.b16 %v1467, %v1466
        %v1473 = vpack.c.b16 %v1469, %v1468
        %vm1478 = vcmask 523264
        %v1480 = vsel %vm1478, %v1438, 0
        %1482 = vmatprep.subr.bf16.mxu0 0
        %1483 = vmatpush1.bf16.msra.mxu0 0
        %1484 = vmatprep.subr.bf16.mxu0 0
        %1485 = vmatpush1.bf16.msra.mxu0 0
        %1486 = vmatprep.subr.bf16.mxu0 0
        %1487 = vmatpush1.bf16.msra.mxu0 0
        %1488 = vmatprep.subr.bf16.mxu0 0
        %1489 = vmatpush1.bf16.msra.mxu0 0
        %1490 = vmatprep.subr.bf16.mxu0 0
        %1491 = vmatpush1.bf16.msra.mxu0 %v1473
        %1492 = vmatprep.subr.bf16.mxu0 0
        %1493 = vmatpush1.bf16.msra.mxu0 %v1472
        %1494 = vmatprep.subr.bf16.mxu0 0
        %1495 = vmatpush1.bf16.msra.mxu0 %v1471
        %1496 = vmatprep.subr.bf16.mxu0 0
        %1497 = vmatpush1.bf16.msra.mxu0 %v1470
        %1498 = vmatprep.subr.bf16.mxu0 0
        %1499 = vmatpush2.bf16.msra.mxu0 0
        %1500 = vmatprep.subr.bf16.mxu0 0
        %1501 = vmatpush2.bf16.msra.mxu0 0
        %1502 = vmatprep.subr.bf16.mxu0 0
        %1503 = vmatpush2.bf16.msra.mxu0 0
        %1504 = vmatprep.subr.bf16.mxu0 0
        %1505 = vmatpush2.bf16.msra.mxu0 0
        %1506 = vmatprep.subr.bf16.mxu0 0
        %1507 = vmatpush2.bf16.msra.mxu0 0
        %1508 = vmatprep.subr.bf16.mxu0 0
        %1509 = vmatpush2.bf16.msra.mxu0 0
        %1510 = vmatprep.subr.bf16.mxu0 0
        %1511 = vmatpush2.bf16.msra.mxu0 0
        %1512 = vmatprep.subr.bf16.mxu0 0
        %1513 = vmatpush2.bf16.msra.mxu0 0
        %1514 = vmatprep.mubr.bf16.mxu0 0
        %1515 = vmatmul.mubr.bf16.gmra.mxu0 %v1480
        %v1516 = vpop.f32.mrf.mxu0
        %v1517 = vadd.f32 %v1452, %v1516
        %v1518 = vpop.f32.mrf.mxu0
        %v1519 = vpop.f32.mrf.mxu0
        %v1520 = vpop.f32.mrf.mxu0
        %1521 = vdwg.mxu0
        %v1522 = vadd.f32 %v1333, %v1517
        %1523 = vst.msk [vmem:[%s563] sm:$0xff] %vm689, %v746
        %s1524 = scalar_lea.vmem %s563, 8 [#allocation4]
        %1525 = vst.msk [vmem:[%s1524] sm:$0xff] %vm689, %v860
        %s1526 = scalar_lea.vmem %s563, 16 [#allocation4]
        %1527 = vst.msk [vmem:[%s1526] sm:$0xff] %vm689, %v1065
        %s1528 = scalar_lea.vmem %s563, 24 [#allocation4]
        %1529 = vst.msk [vmem:[%s1528] sm:$0xff] %vm689, %v1225
        %v1530 = vld [vmem:[%s14] sm:$0x1]
        %v1531 = vld [vmem:[%s15] sm:$0x1]
        %v1532 = vsel %vm579, %v1522, 0.0
        %1533 = vadd.xlane.f32.xlu0 %v1532
        %v1534 = vpop.xlane.xlu0 %1533
        %v1535 = vmul.f32 %v1534, %v583
        %v1536 = vsub.f32 %v1522, %v1535
        %v1537 = vmul.f32 %v1536, %v1536
        %v1538 = vsel %vm579, %v1537, 0.0
        %1539 = vadd.xlane.f32.xlu0 %v1538
        %v1540 = vpop.xlane.xlu0 %1539
        %v1541 = vmul.f32 %v1540, %v590
        %v1542 = vrsqrt.pop %v1541
        %v1543 = vmul.f32 %v1541, %v1542
        %vm1544 = vcmp.eq.f32.partialorder %v1541, inf
        %v1545 = vsel %vm1544, %v1541, %v1543
        %vm1546 = vcmp.eq.f32.partialorder %v1541, 0.0
        %v1547 = vand.u32 %v1541, 2147483648
        %v1548 = vsel %vm1546, %v1547, %v1545
        %v1550 = vlaneseq
        %v1551 = vshrl.u32 %v1550, 7
        %v1552 = vsub.s32 0, %v1551
        %v1553 = vrot.slane %v1530, %v1552
        %v1555 = vmul.f32 %v1553, %v1536
        %v1556 = vadd.f32 %v1548, 1e-06
        %v1557 = vrcp.pop %v1556
        %v1558 = vmul.f32 %v1555, %v1557
        %v1560 = vlaneseq
        %v1561 = vshrl.u32 %v1560, 7
        %v1562 = vsub.s32 0, %v1561
        %v1563 = vrot.slane %v1531, %v1562
        %v1565 = vadd.f32 %v1558, %v1563
        %1566 = vst.msk [vmem:[%s556] sm:$0xff] %vm579, %v1565
        %s1567 = sand.u32 %s389, 1
        %s1568 = scalar_lea.sflag [#allocation3], %s1567
        %s1569 = sand.u32 %s389, 1
        %s1570 = smul.addr %s1569, 8
        %s1571 = scalar_lea.vmem [#allocation2], %s1570
        %s1572 = sand.u32 %s415, 1
        %s1573 = scalar_lea.sflag [#allocation5], %s1572
        %s1574 = sand.u32 %s415, 1
        %s1575 = smul.addr %s1574, 32
        %s1576 = scalar_lea.vmem [#allocation4], %s1575
        // Predicated region
        $region85: #{encoder_forward.3} parent=83 // pred_check
          %p1577 = pneg %p399
        $region86: #{encoder_forward.3} parent=83 // pred_check_branch
          %1579 = sbr.rel (%p1577) target = $region88
        $region87: #{encoder_forward.3} parent=83 // pred_region
          %s1581 = ssub.s32 128, 128
          %1582 = vsyncadd %s1568, %s1581
          %s1583 = smul.addr %s35, 128
          %s1584 = scalar_lea.hbm %s16, %s1583
          %s1586 = sshll.u32 %s1571, 4
          %s1587 = int_to_ptr.vmem [resolvable:$true] %s1586
          %1589 = dma.vmem_to_hbm [thread:$0]  %s1587, 128, %s1584, %s1568
        $region88: #{encoder_forward.3} parent=83 // pred_fallthru
          _
        // Predicated region
        $region89: #{encoder_forward.3} parent=83 // pred_check
          %p1590 = pneg %p425
        $region90: #{encoder_forward.3} parent=83 // pred_check_branch
          %1592 = sbr.rel (%p1590) target = $region92
        $region91: #{encoder_forward.3} parent=83 // pred_region
          %s1594 = ssub.s32 512, 512
          %1595 = vsyncadd %s1573, %s1594
          %s1596 = smul.addr %s35, 4
          %s1597 = smul.addr %s1596, 128
          %s1598 = scalar_lea.hbm %s17, %s1597
          %s1599 = sshll.u32 %s1576, 4
          %s1600 = int_to_ptr.vmem [resolvable:$true] %s1599
          %1605 = dma.vmem_to_hbm [thread:$0]  %s1600, 512, %s1598, %s1573, 128, 128, 8
        $region92: #{encoder_forward.3} parent=83 // pred_fallthru
          _
      $region84: #{encoder_forward.3} parent=5 // pred_fallthru
        _
      %p1606 = scmp.le.s32.totalorder 2, %s30
      // Predicated region
      $region93: #{encoder_forward.3} parent=5 // pred_check
        %p1607 = pneg %p1606
      $region94: #{encoder_forward.3} parent=5 // pred_check_branch
        %1609 = sbr.rel (%p1607) target = $region96
      $region95: #{encoder_forward.3} parent=5 // pred_region
        %s1610 = ssub.s32 %s30, 2
        // Predicated region
        $region97: #{encoder_forward.3} parent=95 // pred_check
          %p1611 = pneg %p405
        $region98: #{encoder_forward.3} parent=95 // pred_check_branch
          %1613 = sbr.rel (%p1611) target = $region100
        $region99: #{encoder_forward.3} parent=95 // pred_region
          %s1614 = sand.u32 %s390, 1
          %s1615 = scalar_lea.sflag [#allocation3], %s1614
          %s1616 = sand.u32 %s390, 1
          %s1617 = smul.addr %s1616, 8
          %s1618 = scalar_lea.vmem [#allocation2], %s1617
          %1619 = dma.done %s1615, 128
        $region100: #{encoder_forward.3} parent=95 // pred_fallthru
          _
        // Predicated region
        $region101: #{encoder_forward.3} parent=95 // pred_check
          %p1620 = pneg %p431
        $region102: #{encoder_forward.3} parent=95 // pred_check_branch
          %1622 = sbr.rel (%p1620) target = $region104
        $region103: #{encoder_forward.3} parent=95 // pred_region
          %s1623 = sand.u32 %s416, 1
          %s1624 = scalar_lea.sflag [#allocation5], %s1623
          %s1625 = sand.u32 %s416, 1
          %s1626 = smul.addr %s1625, 32
          %s1627 = scalar_lea.vmem [#allocation4], %s1626
          %1628 = dma.done %s1624, 512
        $region104: #{encoder_forward.3} parent=95 // pred_fallthru
          _
      $region96: #{encoder_forward.3} parent=5 // pred_fallthru
        _
    $region6: #{encoder_forward.3} parent=1 // loop_footer
      %s34 = sadd.s32 1, %s30
    $region7: #{encoder_forward.3} parent=1 // loop_footer_branch
      %29 = sbr.rel target = $region3
    $region8: #{encoder_forward.3} parent=1 // loop_exit
      _
    %1629 = vsyncpa [#allocation3], 1
    %s1630 = scalar_lea.sflag [#allocation3], 1
    %1631 = vsyncpa %s1630, 1
    %1632 = vsyncpa [#allocation5], 1
    %s1633 = scalar_lea.sflag [#allocation5], 1
    %1634 = vsyncpa %s1633, 1

// kernel: encoder_forward.2
$region0: #{encoder_forward.2}
  #allocation0 [shape = 'u32[]', space=smem, size = 0x4, offset = 0x4, fixed_abs, tag = 'smem constant byte address 0x4 - core index']
  #allocation1 [shape = 'u32[144,128]{1,0:T(1,128)}', space=vmem, size = 0x12000, scoped, tag = 'internal scratch']
  %s0 = inlined_call_operand.vmem [shape: f32[2,8,32], index: 0, kind: input, shape index: {}]
  %s1 = inlined_call_operand.vmem [shape: f32[2,1,8,8], index: 1, kind: input, shape index: {}]
  %s2 = inlined_call_operand.hbm [shape: f32[1,32], index: 2, kind: input, shape index: {}]
  %s3 = inlined_call_operand.hbm [shape: f32[1,32], index: 3, kind: input, shape index: {}]
  %s4 = inlined_call_operand.vmem [shape: bf16[32,96], index: 4, kind: input, shape index: {}]
  %s5 = inlined_call_operand.hbm [shape: f32[1,96], index: 5, kind: input, shape index: {}]
  %s6 = inlined_call_operand.vmem [shape: bf16[4,8,32], index: 6, kind: input, shape index: {}]
  %s7 = inlined_call_operand.hbm [shape: f32[1,32], index: 7, kind: input, shape index: {}]
  %s8 = inlined_call_operand.hbm [shape: f32[1,32], index: 8, kind: input, shape index: {}]
  %s9 = inlined_call_operand.hbm [shape: f32[1,32], index: 9, kind: input, shape index: {}]
  %s10 = inlined_call_operand.hbm [shape: bf16[32,64], index: 10, kind: input, shape index: {}]
  %s11 = inlined_call_operand.hbm [shape: f32[1,64], index: 11, kind: input, shape index: {}]
  %s12 = inlined_call_operand.vmem [shape: bf16[64,32], index: 12, kind: input, shape index: {}]
  %s13 = inlined_call_operand.hbm [shape: f32[1,32], index: 13, kind: input, shape index: {}]
  %s14 = inlined_call_operand.vmem [shape: f32[2,8,32], index: 14, kind: output, shape index: {}]
  %s15 = sld [smem:[#allocation0]]
  $region125: #{encoder_forward.2} parent=0
    _
  %s17 = ssub.s32 1, %s15
  %s18 = scalar_select 0, %s17, %s15
  $region1: #{encoder_forward.2} parent=0
    #allocation2 [shape = 'u8[512]{0}', space=vmem, size = 0x400, scoped, tag = 'input window, operand 2, single buffered']
    #allocation3 [shape = 's32[2]{0}', space=sflag, size = 0x8, scoped, tag = 'scoped memory for encoder_forward.2']
    #allocation4 [shape = 'u8[512]{0}', space=vmem, size = 0x400, scoped, tag = 'input window, operand 3, single buffered']
    #allocation5 [shape = 's32[1]{0}', space=sflag, size = 0x4, scoped, tag = 'scoped memory for encoder_forward.2']
    #allocation6 [shape = 'u8[512]{0}', space=vmem, size = 0x400, scoped, tag = 'input window, operand 5, single buffered']
    #allocation7 [shape = 'u8[512]{0}', space=vmem, size = 0x400, scoped, tag = 'input window, operand 7, single buffered']
    #allocation8 [shape = 's32[1]{0}', space=sflag, size = 0x4, scoped, tag = 'scoped memory for encoder_forward.2']
    #allocation9 [shape = 'u8[512]{0}', space=vmem, size = 0x400, scoped, tag = 'input window, operand 8, single buffered']
    #allocation10 [shape = 'u8[512]{0}', space=vmem, size = 0x400, scoped, tag = 'input window, operand 9, single buffered']
    #allocation11 [shape = 's32[1]{0}', space=sflag, size = 0x4, scoped, tag = 'scoped memory for encoder_forward.2']
    #allocation12 [shape = 'u8[8192]{0}', space=vmem, size = 0x2000, scoped, tag = 'input window, operand 10, single buffered']
    #allocation13 [shape = 'u8[512]{0}', space=vmem, size = 0x400, scoped, tag = 'input window, operand 11, single buffered']
    #allocation14 [shape = 's32[1]{0}', space=sflag, size = 0x4, scoped, tag = 'scoped memory for encoder_forward.2']
    #allocation15 [shape = 'u8[512]{0}', space=vmem, size = 0x400, scoped, tag = 'input window, operand 13, single buffered']
    %19 = vsyncpa [#allocation3], 0
    %20 = vsyncpa [#allocation5], 0
    %21 = vsyncpa [#allocation8], 0
    %22 = vsyncpa [#allocation11], 0
    %23 = vsyncpa [#allocation14], 0
    loop: start=0, step=1, limit=4
    $region2: #{encoder_forward.2} parent=1 // loop_pre_header
      _
    $region3: #{encoder_forward.2} parent=1 // loop_header
      %s25 = sphi 0, %s29
      %p26 = scmp.ge.s32.totalorder %s25, 4
      %s35 = sphi 0, %s37
      %s38 = sphi 0, %s35
      %s39 = sphi 0, %s38
      %s55 = sphi 0, %s39
      %s61 = sphi 0, %s63
      %s64 = sphi 0, %s61
      %s65 = sphi 0, %s64
      %s81 = sphi 0, %s65
      %s85 = sphi 0, %s85
      %s87 = sphi 0, %s85
      %s88 = sphi 0, %s87
      %s102 = sphi 0, %s88
      %s106 = sphi 0, %s106
      %s108 = sphi 0, %s106
      %s109 = sphi 0, %s108
      %s123 = sphi 0, %s109
      %s127 = sphi 0, %s127
      %s129 = sphi 0, %s127
      %s130 = sphi 0, %s129
      %s144 = sphi 0, %s130
      %s148 = sphi 0, %s148
      %s150 = sphi 0, %s148
      %s151 = sphi 0, %s150
      %s165 = sphi 0, %s151
      %s169 = sphi 0, %s169
      %s171 = sphi 0, %s169
      %s172 = sphi 0, %s171
      %s186 = sphi 0, %s172
      %s190 = sphi 0, %s190
      %s192 = sphi 0, %s190
      %s193 = sphi 0, %s192
      %s207 = sphi 0, %s193
      %s211 = sphi 0, %s211
      %s213 = sphi 0, %s211
      %s214 = sphi 0, %s213
      %s228 = sphi 0, %s214
      %s232 = sphi 0, %s232
      %s234 = sphi 0, %s232
      %s235 = sphi 0, %s234
      %s249 = sphi 0, %s235
      %s253 = sphi 0, %s253
      %s255 = sphi 0, %s253
      %s256 = sphi 0, %s255
      %s270 = sphi 0, %s256
      %s274 = sphi 0, %s274
      %s276 = sphi 0, %s274
      %s277 = sphi 0, %s276
      %s291 = sphi 0, %s277
      %s295 = sphi 0, %s295
      %s297 = sphi 0, %s295
      %s298 = sphi 0, %s297
      %s312 = sphi 0, %s298
      %s316 = sphi 0, %s316
      %s318 = sphi 0, %s316
      %s319 = sphi 0, %s318
      %s333 = sphi 0, %s319
      %s339 = sphi 0, %s341
      %s342 = sphi 0, %s339
      %s343 = sphi 0, %s342
      %s359 = sphi 0, %s343
    $region4: #{encoder_forward.2} parent=1 // loop_header_branch
      %28 = sbr.rel (%p26) target = $region8
    $region5: #{encoder_forward.2} parent=1 // loop_body
      %s30 = ssub.s32 %s25, 1
      %s31 = ssub.s32 %s25, 2
      %s32 = sadd.s32 %s25, 1
      %s33 = ssub.s32 %s25, %s32
      %p34 = scmp.eq.s32.totalorder %s33, 0
      %s36 = sadd.s32 %s35, 1
      %s37 = scalar_select %p34, %s35, %s36
      %p40 = pneg %p34
      %p41 = scmp.eq.s32.totalorder %s25, 1
      %p42 = por %p40, %p41
      %p43 = scmp.ne.s32.totalorder %s35, %s38
      %p44 = scmp.eq.s32.totalorder %s25, 0
      %p45 = por %p43, %p44
      %p46 = scmp.ne.s32.totalorder %s35, %s38
      %p47 = scmp.eq.s32.totalorder %s30, 1
      %p48 = por %p46, %p47
      %p49 = scmp.ne.s32.totalorder %s38, %s39
      %p50 = scmp.eq.s32.totalorder %s30, 0
      %p51 = por %p49, %p50
      %p52 = scmp.ne.s32.totalorder %s38, %s39
      %p53 = scmp.eq.s32.totalorder %s31, 1
      %p54 = por %p52, %p53
      %p56 = scmp.ne.s32.totalorder %s39, %s55
      %p57 = scmp.eq.s32.totalorder %s31, 0
      %p58 = por %p56, %p57
      %s59 = ssub.s32 %s25, %s32
      %p60 = scmp.eq.s32.totalorder %s59, 0
      %s62 = sadd.s32 %s61, 1
      %s63 = scalar_select %p60, %s61, %s62
      %p66 = pneg %p60
      %p67 = scmp.eq.s32.totalorder %s25, 1
      %p68 = por %p66, %p67
      %p69 = scmp.ne.s32.totalorder %s61, %s64
      %p70 = scmp.eq.s32.totalorder %s25, 0
      %p71 = por %p69, %p70
      %p72 = scmp.ne.s32.totalorder %s61, %s64
      %p73 = scmp.eq.s32.totalorder %s30, 1
      %p74 = por %p72, %p73
      %p75 = scmp.ne.s32.totalorder %s64, %s65
      %p76 = scmp.eq.s32.totalorder %s30, 0
      %p77 = por %p75, %p76
      %p78 = scmp.ne.s32.totalorder %s64, %s65
      %p79 = scmp.eq.s32.totalorder %s31, 1
      %p80 = por %p78, %p79
      %p82 = scmp.ne.s32.totalorder %s65, %s81
      %p83 = scmp.eq.s32.totalorder %s31, 0
      %p84 = por %p82, %p83
      %s86 = sadd.s32 %s85, 1
      %p89 = scmp.eq.s32.totalorder %s25, 1
      %p90 = scmp.ne.s32.totalorder %s85, %s87
      %p91 = scmp.eq.s32.totalorder %s25, 0
      %p92 = por %p90, %p91
      %p93 = scmp.ne.s32.totalorder %s85, %s87
      %p94 = scmp.eq.s32.totalorder %s30, 1
      %p95 = por %p93, %p94
      %p96 = scmp.ne.s32.totalorder %s87, %s88
      %p97 = scmp.eq.s32.totalorder %s30, 0
      %p98 = por %p96, %p97
      %p99 = scmp.ne.s32.totalorder %s87, %s88
      %p100 = scmp.eq.s32.totalorder %s31, 1
      %p101 = por %p99, %p100
      %p103 = scmp.ne.s32.totalorder %s88, %s102
      %p104 = scmp.eq.s32.totalorder %s31, 0
      %p105 = por %p103, %p104
      %s107 = sadd.s32 %s106, 1
      %p110 = scmp.eq.s32.totalorder %s25, 1
      %p111 = scmp.ne.s32.totalorder %s106, %s108
      %p112 = scmp.eq.s32.totalorder %s25, 0
      %p113 = por %p111, %p112
      %p114 = scmp.ne.s32.totalorder %s106, %s108
      %p115 = scmp.eq.s32.totalorder %s30, 1
      %p116 = por %p114, %p115
      %p117 = scmp.ne.s32.totalorder %s108, %s109
      %p118 = scmp.eq.s32.totalorder %s30, 0
      %p119 = por %p117, %p118
      %p120 = scmp.ne.s32.totalorder %s108, %s109
      %p121 = scmp.eq.s32.totalorder %s31, 1
      %p122 = por %p120, %p121
      %p124 = scmp.ne.s32.totalorder %s109, %s123
      %p125 = scmp.eq.s32.totalorder %s31, 0
      %p126 = por %p124, %p125
      %s128 = sadd.s32 %s127, 1
      %p131 = scmp.eq.s32.totalorder %s25, 1
      %p132 = scmp.ne.s32.totalorder %s127, %s129
      %p133 = scmp.eq.s32.totalorder %s25, 0
      %p134 = por %p132, %p133
      %p135 = scmp.ne.s32.totalorder %s127, %s129
      %p136 = scmp.eq.s32.totalorder %s30, 1
      %p137 = por %p135, %p136
      %p138 = scmp.ne.s32.totalorder %s129, %s130
      %p139 = scmp.eq.s32.totalorder %s30, 0
      %p140 = por %p138, %p139
      %p141 = scmp.ne.s32.totalorder %s129, %s130
      %p142 = scmp.eq.s32.totalorder %s31, 1
      %p143 = por %p141, %p142
      %p145 = scmp.ne.s32.totalorder %s130, %s144
      %p146 = scmp.eq.s32.totalorder %s31, 0
      %p147 = por %p145, %p146
      %s149 = sadd.s32 %s148, 1
      %p152 = scmp.eq.s32.totalorder %s25, 1
      %p153 = scmp.ne.s32.totalorder %s148, %s150
      %p154 = scmp.eq.s32.totalorder %s25, 0
      %p155 = por %p153, %p154
      %p156 = scmp.ne.s32.totalorder %s148, %s150
      %p157 = scmp.eq.s32.totalorder %s30, 1
      %p158 = por %p156, %p157
      %p159 = scmp.ne.s32.totalorder %s150, %s151
      %p160 = scmp.eq.s32.totalorder %s30, 0
      %p161 = por %p159, %p160
      %p162 = scmp.ne.s32.totalorder %s150, %s151
      %p163 = scmp.eq.s32.totalorder %s31, 1
      %p164 = por %p162, %p163
      %p166 = scmp.ne.s32.totalorder %s151, %s165
      %p167 = scmp.eq.s32.totalorder %s31, 0
      %p168 = por %p166, %p167
      %s170 = sadd.s32 %s169, 1
      %p173 = scmp.eq.s32.totalorder %s25, 1
      %p174 = scmp.ne.s32.totalorder %s169, %s171
      %p175 = scmp.eq.s32.totalorder %s25, 0
      %p176 = por %p174, %p175
      %p177 = scmp.ne.s32.totalorder %s169, %s171
      %p178 = scmp.eq.s32.totalorder %s30, 1
      %p179 = por %p177, %p178
      %p180 = scmp.ne.s32.totalorder %s171, %s172
      %p181 = scmp.eq.s32.totalorder %s30, 0
      %p182 = por %p180, %p181
      %p183 = scmp.ne.s32.totalorder %s171, %s172
      %p184 = scmp.eq.s32.totalorder %s31, 1
      %p185 = por %p183, %p184
      %p187 = scmp.ne.s32.totalorder %s172, %s186
      %p188 = scmp.eq.s32.totalorder %s31, 0
      %p189 = por %p187, %p188
      %s191 = sadd.s32 %s190, 1
      %p194 = scmp.eq.s32.totalorder %s25, 1
      %p195 = scmp.ne.s32.totalorder %s190, %s192
      %p196 = scmp.eq.s32.totalorder %s25, 0
      %p197 = por %p195, %p196
      %p198 = scmp.ne.s32.totalorder %s190, %s192
      %p199 = scmp.eq.s32.totalorder %s30, 1
      %p200 = por %p198, %p199
      %p201 = scmp.ne.s32.totalorder %s192, %s193
      %p202 = scmp.eq.s32.totalorder %s30, 0
      %p203 = por %p201, %p202
      %p204 = scmp.ne.s32.totalorder %s192, %s193
      %p205 = scmp.eq.s32.totalorder %s31, 1
      %p206 = por %p204, %p205
      %p208 = scmp.ne.s32.totalorder %s193, %s207
      %p209 = scmp.eq.s32.totalorder %s31, 0
      %p210 = por %p208, %p209
      %s212 = sadd.s32 %s211, 1
      %p215 = scmp.eq.s32.totalorder %s25, 1
      %p216 = scmp.ne.s32.totalorder %s211, %s213
      %p217 = scmp.eq.s32.totalorder %s25, 0
      %p218 = por %p216, %p217
      %p219 = scmp.ne.s32.totalorder %s211, %s213
      %p220 = scmp.eq.s32.totalorder %s30, 1
      %p221 = por %p219, %p220
      %p222 = scmp.ne.s32.totalorder %s213, %s214
      %p223 = scmp.eq.s32.totalorder %s30, 0
      %p224 = por %p222, %p223
      %p225 = scmp.ne.s32.totalorder %s213, %s214
      %p226 = scmp.eq.s32.totalorder %s31, 1
      %p227 = por %p225, %p226
      %p229 = scmp.ne.s32.totalorder %s214, %s228
      %p230 = scmp.eq.s32.totalorder %s31, 0
      %p231 = por %p229, %p230
      %s233 = sadd.s32 %s232, 1
      %p236 = scmp.eq.s32.totalorder %s25, 1
      %p237 = scmp.ne.s32.totalorder %s232, %s234
      %p238 = scmp.eq.s32.totalorder %s25, 0
      %p239 = por %p237, %p238
      %p240 = scmp.ne.s32.totalorder %s232, %s234
      %p241 = scmp.eq.s32.totalorder %s30, 1
      %p242 = por %p240, %p241
      %p243 = scmp.ne.s32.totalorder %s234, %s235
      %p244 = scmp.eq.s32.totalorder %s30, 0
      %p245 = por %p243, %p244
      %p246 = scmp.ne.s32.totalorder %s234, %s235
      %p247 = scmp.eq.s32.totalorder %s31, 1
      %p248 = por %p246, %p247
      %p250 = scmp.ne.s32.totalorder %s235, %s249
      %p251 = scmp.eq.s32.totalorder %s31, 0
      %p252 = por %p250, %p251
      %s254 = sadd.s32 %s253, 1
      %p257 = scmp.eq.s32.totalorder %s25, 1
      %p258 = scmp.ne.s32.totalorder %s253, %s255
      %p259 = scmp.eq.s32.totalorder %s25, 0
      %p260 = por %p258, %p259
      %p261 = scmp.ne.s32.totalorder %s253, %s255
      %p262 = scmp.eq.s32.totalorder %s30, 1
      %p263 = por %p261, %p262
      %p264 = scmp.ne.s32.totalorder %s255, %s256
      %p265 = scmp.eq.s32.totalorder %s30, 0
      %p266 = por %p264, %p265
      %p267 = scmp.ne.s32.totalorder %s255, %s256
      %p268 = scmp.eq.s32.totalorder %s31, 1
      %p269 = por %p267, %p268
      %p271 = scmp.ne.s32.totalorder %s256, %s270
      %p272 = scmp.eq.s32.totalorder %s31, 0
      %p273 = por %p271, %p272
      %s275 = sadd.s32 %s274, 1
      %p278 = scmp.eq.s32.totalorder %s25, 1
      %p279 = scmp.ne.s32.totalorder %s274, %s276
      %p280 = scmp.eq.s32.totalorder %s25, 0
      %p281 = por %p279, %p280
      %p282 = scmp.ne.s32.totalorder %s274, %s276
      %p283 = scmp.eq.s32.totalorder %s30, 1
      %p284 = por %p282, %p283
      %p285 = scmp.ne.s32.totalorder %s276, %s277
      %p286 = scmp.eq.s32.totalorder %s30, 0
      %p287 = por %p285, %p286
      %p288 = scmp.ne.s32.totalorder %s276, %s277
      %p289 = scmp.eq.s32.totalorder %s31, 1
      %p290 = por %p288, %p289
      %p292 = scmp.ne.s32.totalorder %s277, %s291
      %p293 = scmp.eq.s32.totalorder %s31, 0
      %p294 = por %p292, %p293
      %s296 = sadd.s32 %s295, 1
      %p299 = scmp.eq.s32.totalorder %s25, 1
      %p300 = scmp.ne.s32.totalorder %s295, %s297
      %p301 = scmp.eq.s32.totalorder %s25, 0
      %p302 = por %p300, %p301
      %p303 = scmp.ne.s32.totalorder %s295, %s297
      %p304 = scmp.eq.s32.totalorder %s30, 1
      %p305 = por %p303, %p304
      %p306 = scmp.ne.s32.totalorder %s297, %s298
      %p307 = scmp.eq.s32.totalorder %s30, 0
      %p308 = por %p306, %p307
      %p309 = scmp.ne.s32.totalorder %s297, %s298
      %p310 = scmp.eq.s32.totalorder %s31, 1
      %p311 = por %p309, %p310
      %p313 = scmp.ne.s32.totalorder %s298, %s312
      %p314 = scmp.eq.s32.totalorder %s31, 0
      %p315 = por %p313, %p314
      %s317 = sadd.s32 %s316, 1
      %p320 = scmp.eq.s32.totalorder %s25, 1
      %p321 = scmp.ne.s32.totalorder %s316, %s318
      %p322 = scmp.eq.s32.totalorder %s25, 0
      %p323 = por %p321, %p322
      %p324 = scmp.ne.s32.totalorder %s316, %s318
      %p325 = scmp.eq.s32.totalorder %s30, 1
      %p326 = por %p324, %p325
      %p327 = scmp.ne.s32.totalorder %s318, %s319
      %p328 = scmp.eq.s32.totalorder %s30, 0
      %p329 = por %p327, %p328
      %p330 = scmp.ne.s32.totalorder %s318, %s319
      %p331 = scmp.eq.s32.totalorder %s31, 1
      %p332 = por %p330, %p331
      %p334 = scmp.ne.s32.totalorder %s319, %s333
      %p335 = scmp.eq.s32.totalorder %s31, 0
      %p336 = por %p334, %p335
      %s337 = ssub.s32 %s25, %s32
      %p338 = scmp.eq.s32.totalorder %s337, 0
      %s340 = sadd.s32 %s339, 1
      %s341 = scalar_select %p338, %s339, %s340
      %p344 = pneg %p338
      %p345 = scmp.eq.s32.totalorder %s25, 1
      %p346 = por %p344, %p345
      %p347 = scmp.ne.s32.totalorder %s339, %s342
      %p348 = scmp.eq.s32.totalorder %s25, 0
      %p349 = por %p347, %p348
      %p350 = scmp.ne.s32.totalorder %s339, %s342
      %p351 = scmp.eq.s32.totalorder %s30, 1
      %p352 = por %p350, %p351
      %p353 = scmp.ne.s32.totalorder %s342, %s343
      %p354 = scmp.eq.s32.totalorder %s30, 0
      %p355 = por %p353, %p354
      %p356 = scmp.ne.s32.totalorder %s342, %s343
      %p357 = scmp.eq.s32.totalorder %s31, 1
      %p358 = por %p356, %p357
      %p360 = scmp.ne.s32.totalorder %s343, %s359
      %p361 = scmp.eq.s32.totalorder %s31, 0
      %p362 = por %p360, %p361
      %p363 = scmp.le.s32.totalorder 1, %s25
      %p364 = scmp.lt.s32.totalorder %s25, 3
      %p365 = pnand %p363, %p364
      %p366 = pneg %p365
      // Predicated region
      $region9: #{encoder_forward.2} parent=5 // pred_check
        _
      $region10: #{encoder_forward.2} parent=5 // pred_check_branch
        %368 = sbr.rel (%p365) target = $region12
      $region11: #{encoder_forward.2} parent=5 // pred_region
        %s369 = ssub.s32 %s25, 1
        // Predicated region
        $region13: #{encoder_forward.2} parent=11 // pred_check
          %p370 = pneg %p98
        $region14: #{encoder_forward.2} parent=11 // pred_check_branch
          %372 = sbr.rel (%p370) target = $region16
        $region15: #{encoder_forward.2} parent=11 // pred_region
          %s374 = ssub.s32 16, 16
          %375 = vsyncadd [#allocation3], %s374
          %s377 = sshll.u32 [#allocation2], 4
          %s378 = int_to_ptr.vmem [resolvable:$true] %s377
          %380 = dma.hbm_to_vmem [thread:$0]  %s2, 16, %s378, [#allocation3]
        $region16: #{encoder_forward.2} parent=11 // pred_fallthru
          _
        // Predicated region
        $region17: #{encoder_forward.2} parent=11 // pred_check
          %p381 = pneg %p119
        $region18: #{encoder_forward.2} parent=11 // pred_check_branch
          %383 = sbr.rel (%p381) target = $region20
        $region19: #{encoder_forward.2} parent=11 // pred_region
          %s385 = ssub.s32 16, 16
          %386 = vsyncadd [#allocation5], %s385
          %s388 = sshll.u32 [#allocation4], 4
          %s389 = int_to_ptr.vmem [resolvable:$true] %s388
          %391 = dma.hbm_to_vmem [thread:$0]  %s3, 16, %s389, [#allocation5]
        $region20: #{encoder_forward.2} parent=11 // pred_fallthru
          _
        // Predicated region
        $region21: #{encoder_forward.2} parent=11 // pred_check
          %p392 = pneg %p140
        $region22: #{encoder_forward.2} parent=11 // pred_check_branch
          %394 = sbr.rel (%p392) target = $region24
        $region23: #{encoder_forward.2} parent=11 // pred_region
          _
        $region24: #{encoder_forward.2} parent=11 // pred_fallthru
          _
        // Predicated region
        $region25: #{encoder_forward.2} parent=11 // pred_check
          %p395 = pneg %p161
        $region26: #{encoder_forward.2} parent=11 // pred_check_branch
          %397 = sbr.rel (%p395) target = $region28
        $region27: #{encoder_forward.2} parent=11 // pred_region
          %s399 = ssub.s32 16, 16
          %400 = vsyncadd [#allocation5], %s399
          %s402 = sshll.u32 [#allocation6], 4
          %s403 = int_to_ptr.vmem [resolvable:$true] %s402
          %405 = dma.hbm_to_vmem [thread:$0]  %s5, 16, %s403, [#allocation5]
        $region28: #{encoder_forward.2} parent=11 // pred_fallthru
          _
        // Predicated region
        $region29: #{encoder_forward.2} parent=11 // pred_check
          %p406 = pneg %p182
        $region30: #{encoder_forward.2} parent=11 // pred_check_branch
          %408 = sbr.rel (%p406) target = $region32
        $region31: #{encoder_forward.2} parent=11 // pred_region
          _
        $region32: #{encoder_forward.2} parent=11 // pred_fallthru
          _
        // Predicated region
        $region33: #{encoder_forward.2} parent=11 // pred_check
          %p409 = pneg %p203
        $region34: #{encoder_forward.2} parent=11 // pred_check_branch
          %411 = sbr.rel (%p409) target = $region36
        $region35: #{encoder_forward.2} parent=11 // pred_region
          %s413 = ssub.s32 16, 16
          %414 = vsyncadd [#allocation8], %s413
          %s416 = sshll.u32 [#allocation7], 4
          %s417 = int_to_ptr.vmem [resolvable:$true] %s416
          %419 = dma.hbm_to_vmem [thread:$0]  %s7, 16, %s417, [#allocation8]
        $region36: #{encoder_forward.2} parent=11 // pred_fallthru
          _
        // Predicated region
        $region37: #{encoder_forward.2} parent=11 // pred_check
          %p420 = pneg %p224
        $region38: #{encoder_forward.2} parent=11 // pred_check_branch
          %422 = sbr.rel (%p420) target = $region40
        $region39: #{encoder_forward.2} parent=11 // pred_region
          %s424 = ssub.s32 16, 16
          %425 = vsyncadd [#allocation8], %s424
          %s427 = sshll.u32 [#allocation9], 4
          %s428 = int_to_ptr.vmem [resolvable:$true] %s427
          %430 = dma.hbm_to_vmem [thread:$0]  %s8, 16, %s428, [#allocation8]
        $region40: #{encoder_forward.2} parent=11 // pred_fallthru
          _
        // Predicated region
        $region41: #{encoder_forward.2} parent=11 // pred_check
          %p431 = pneg %p245
        $region42: #{encoder_forward.2} parent=11 // pred_check_branch
          %433 = sbr.rel (%p431) target = $region44
        $region43: #{encoder_forward.2} parent=11 // pred_region
          %s435 = ssub.s32 16, 16
          %436 = vsyncadd [#allocation11], %s435
          %s438 = sshll.u32 [#allocation10], 4
          %s439 = int_to_ptr.vmem [resolvable:$true] %s438
          %441 = dma.hbm_to_vmem [thread:$0]  %s9, 16, %s439, [#allocation11]
        $region44: #{encoder_forward.2} parent=11 // pred_fallthru
          _
        // Predicated region
        $region45: #{encoder_forward.2} parent=11 // pred_check
          %p442 = pneg %p266
        $region46: #{encoder_forward.2} parent=11 // pred_check_branch
          %444 = sbr.rel (%p442) target = $region48
        $region47: #{encoder_forward.2} parent=11 // pred_region
          %s446 = ssub.s32 256, 256
          %447 = vsyncadd [#allocation11], %s446
          %s448 = sshll.u32 [#allocation12], 4
          %s449 = int_to_ptr.vmem [resolvable:$true] %s448
          %454 = dma.hbm_to_vmem [thread:$0]  %s10, 256, %s449, [#allocation11], 64, 64, 4
        $region48: #{encoder_forward.2} parent=11 // pred_fallthru
          _
        // Predicated region
        $region49: #{encoder_forward.2} parent=11 // pred_check
          %p455 = pneg %p287
        $region50: #{encoder_forward.2} parent=11 // pred_check_branch
          %457 = sbr.rel (%p455) target = $region52
        $region51: #{encoder_forward.2} parent=11 // pred_region
          %s459 = ssub.s32 16, 16
          %460 = vsyncadd [#allocation14], %s459
          %s462 = sshll.u32 [#allocation13], 4
          %s463 = int_to_ptr.vmem [resolvable:$true] %s462
          %465 = dma.hbm_to_vmem [thread:$0]  %s11, 16, %s463, [#allocation14]
        $region52: #{encoder_forward.2} parent=11 // pred_fallthru
          _
        // Predicated region
        $region53: #{encoder_forward.2} parent=11 // pred_check
          %p466 = pneg %p308
        $region54: #{encoder_forward.2} parent=11 // pred_check_branch
          %468 = sbr.rel (%p466) target = $region56
        $region55: #{encoder_forward.2} parent=11 // pred_region
          _
        $region56: #{encoder_forward.2} parent=11 // pred_fallthru
          _
        // Predicated region
        $region57: #{encoder_forward.2} parent=11 // pred_check
          %p469 = pneg %p329
        $region58: #{encoder_forward.2} parent=11 // pred_check_branch
          %471 = sbr.rel (%p469) target = $region60
        $region59: #{encoder_forward.2} parent=11 // pred_region
          %s473 = ssub.s32 16, 16
          %474 = vsyncadd [#allocation14], %s473
          %s476 = sshll.u32 [#allocation15], 4
          %s477 = int_to_ptr.vmem [resolvable:$true] %s476
          %479 = dma.hbm_to_vmem [thread:$0]  %s13, 16, %s477, [#allocation14]
        $region60: #{encoder_forward.2} parent=11 // pred_fallthru
          _
      $region12: #{encoder_forward.2} parent=5 // pred_fallthru
        _
      %p480 = scmp.lt.s32.totalorder %s25, 2
      // Predicated region
      $region61: #{encoder_forward.2} parent=5 // pred_check
        %p481 = pneg %p480
      $region62: #{encoder_forward.2} parent=5 // pred_check_branch
        %483 = sbr.rel (%p481) target = $region64
      $region63: #{encoder_forward.2} parent=5 // pred_region
        // Predicated region
        $region65: #{encoder_forward.2} parent=63 // pred_check
          %p484 = pneg %p45
        $region66: #{encoder_forward.2} parent=63 // pred_check_branch
          %486 = sbr.rel (%p484) target = $region68
        $region67: #{encoder_forward.2} parent=63 // pred_region
          %p487 = scmp.lt.s32.totalorder %s25, 1
          %s488 = scalar_select %p487, %s25, 1
          %s489 = smul.addr %s488, 8
          %s490 = scalar_lea.vmem %s0, %s489
        $region68: #{encoder_forward.2} parent=63 // pred_fallthru
          _
        // Predicated region
        $region69: #{encoder_forward.2} parent=63 // pred_check
          %p491 = pneg %p71
        $region70: #{encoder_forward.2} parent=63 // pred_check_branch
          %493 = sbr.rel (%p491) target = $region72
        $region71: #{encoder_forward.2} parent=63 // pred_region
          %p494 = scmp.lt.s32.totalorder %s25, 1
          %s495 = scalar_select %p494, %s25, 1
          %s496 = smul.addr %s495, 8
          %s497 = scalar_lea.vmem %s1, %s496
        $region72: #{encoder_forward.2} parent=63 // pred_fallthru
          _
      $region64: #{encoder_forward.2} parent=5 // pred_fallthru
        _
      %p498 = scmp.le.s32.totalorder 1, %s25
      %p499 = scmp.lt.s32.totalorder %s25, 3
      %p500 = pnand %p498, %p499
      %p501 = pneg %p500
      // Predicated region
      $region73: #{encoder_forward.2} parent=5 // pred_check
        _
      $region74: #{encoder_forward.2} parent=5 // pred_check_branch
        %503 = sbr.rel (%p500) target = $region76
      $region75: #{encoder_forward.2} parent=5 // pred_region
        %s504 = ssub.s32 %s25, 1
        // Predicated region
        $region77: #{encoder_forward.2} parent=75 // pred_check
          %p505 = pneg %p98
        $region78: #{encoder_forward.2} parent=75 // pred_check_branch
          %507 = sbr.rel (%p505) target = $region80
        $region79: #{encoder_forward.2} parent=75 // pred_region
          %508 = dma.done [#allocation3], 16
        $region80: #{encoder_forward.2} parent=75 // pred_fallthru
          _
        // Predicated region
        $region81: #{encoder_forward.2} parent=75 // pred_check
          %p509 = pneg %p119
        $region82: #{encoder_forward.2} parent=75 // pred_check_branch
          %511 = sbr.rel (%p509) target = $region84
        $region83: #{encoder_forward.2} parent=75 // pred_region
          %512 = dma.done [#allocation5], 16
        $region84: #{encoder_forward.2} parent=75 // pred_fallthru
          _
        // Predicated region
        $region85: #{encoder_forward.2} parent=75 // pred_check
          %p513 = pneg %p161
        $region86: #{encoder_forward.2} parent=75 // pred_check_branch
          %515 = sbr.rel (%p513) target = $region88
        $region87: #{encoder_forward.2} parent=75 // pred_region
          %516 = dma.done [#allocation5], 16
        $region88: #{encoder_forward.2} parent=75 // pred_fallthru
          _
        // Predicated region
        $region89: #{encoder_forward.2} parent=75 // pred_check
          %p517 = pneg %p203
        $region90: #{encoder_forward.2} parent=75 // pred_check_branch
          %519 = sbr.rel (%p517) target = $region92
        $region91: #{encoder_forward.2} parent=75 // pred_region
          %520 = dma.done [#allocation8], 16
        $region92: #{encoder_forward.2} parent=75 // pred_fallthru
          _
        // Predicated region
        $region93: #{encoder_forward.2} parent=75 // pred_check
          %p521 = pneg %p224
        $region94: #{encoder_forward.2} parent=75 // pred_check_branch
          %523 = sbr.rel (%p521) target = $region96
        $region95: #{encoder_forward.2} parent=75 // pred_region
          %524 = dma.done [#allocation8], 16
        $region96: #{encoder_forward.2} parent=75 // pred_fallthru
          _
        // Predicated region
        $region97: #{encoder_forward.2} parent=75 // pred_check
          %p525 = pneg %p245
        $region98: #{encoder_forward.2} parent=75 // pred_check_branch
          %527 = sbr.rel (%p525) target = $region100
        $region99: #{encoder_forward.2} parent=75 // pred_region
          %528 = dma.done [#allocation11], 16
        $region100: #{encoder_forward.2} parent=75 // pred_fallthru
          _
        // Predicated region
        $region101: #{encoder_forward.2} parent=75 // pred_check
          %p529 = pneg %p266
        $region102: #{encoder_forward.2} parent=75 // pred_check_branch
          %531 = sbr.rel (%p529) target = $region104
        $region103: #{encoder_forward.2} parent=75 // pred_region
          %532 = dma.done [#allocation11], 256
        $region104: #{encoder_forward.2} parent=75 // pred_fallthru
          _
        // Predicated region
        $region105: #{encoder_forward.2} parent=75 // pred_check
          %p533 = pneg %p287
        $region106: #{encoder_forward.2} parent=75 // pred_check_branch
          %535 = sbr.rel (%p533) target = $region108
        $region107: #{encoder_forward.2} parent=75 // pred_region
          %536 = dma.done [#allocation14], 16
        $region108: #{encoder_forward.2} parent=75 // pred_fallthru
          _
        // Predicated region
        $region109: #{encoder_forward.2} parent=75 // pred_check
          %p537 = pneg %p329
        $region110: #{encoder_forward.2} parent=75 // pred_check_branch
          %539 = sbr.rel (%p537) target = $region112
        $region111: #{encoder_forward.2} parent=75 // pred_region
          %540 = dma.done [#allocation14], 16
        $region112: #{encoder_forward.2} parent=75 // pred_fallthru
          _
        %p541 = scmp.lt.s32.totalorder %s30, 1
        %s542 = scalar_select %p541, %s30, 1
        %s543 = smul.addr %s542, 8
        %s544 = scalar_lea.vmem %s0, %s543
        %p545 = pneg %p51
        %p546 = pneg %p48
        %p547 = scmp.lt.s32.totalorder %s30, 1
        %s548 = scalar_select %p547, %s30, 1
        %s549 = smul.addr %s548, 8
        %s550 = scalar_lea.vmem %s1, %s549
        %p551 = pneg %p77
        %p552 = pneg %p74
        %p553 = pneg %p98
        %p554 = pneg %p95
        %p555 = pneg %p119
        %p556 = pneg %p116
        %p557 = pneg %p140
        %p558 = pneg %p137
        %p559 = pneg %p161
        %p560 = pneg %p158
        %p561 = pneg %p182
        %p562 = pneg %p179
        %p563 = pneg %p203
        %p564 = pneg %p200
        %p565 = pneg %p224
        %p566 = pneg %p221
        %p567 = pneg %p245
        %p568 = pneg %p242
        %p569 = pneg %p266
        %p570 = pneg %p263
        %p571 = pneg %p287
        %p572 = pneg %p284
        %p573 = pneg %p308
        %p574 = pneg %p305
        %p575 = pneg %p329
        %p576 = pneg %p326
        %p577 = pneg %p355
        %p578 = pneg %p352
        %p579 = scmp.lt.s32.totalorder %s30, 1
        %s580 = scalar_select %p579, %s30, 1
        %s581 = smul.addr %s580, 8
        %s582 = scalar_lea.vmem %s14, %s581
        %p583 = scmp.lt.s32.totalorder %s30, 1
        %s584 = scalar_select %p583, %s30, 1
        %s585 = smul.addr %s584, 8
        %s586 = scalar_lea.vmem %s0, %s585
        %p587 = scmp.lt.s32.totalorder %s30, 1
        %s588 = scalar_select %p587, %s30, 1
        %s589 = smul.addr %s588, 8
        %s590 = scalar_lea.vmem %s1, %s589
        %p591 = scmp.lt.s32.totalorder %s30, 1
        %s592 = scalar_select %p591, %s30, 1
        %s593 = smul.addr %s592, 8
        %s594 = scalar_lea.vmem %s14, %s593
        %v596 = vld [vmem:[%s586] sm:$0xff]
        %v597 = vld [vmem:[%s590] sm:$0xff]
        %v598 = vsub.f32 1.0, %v597
        %v599 = vmul.f32 %v598, -1e+09
        %v600 = vld [vmem:[#allocation2] sm:$0x1]
        %v601 = vld [vmem:[#allocation4] sm:$0x1]
        %vm602 = vcmask 261120
        %v603 = vsel %vm602, %v596, 0.0
        %604 = vadd.xlane.f32.xlu0 %v603
        %v605 = vpop.xlane.xlu0 %604
        %v606 = vrcp.pop 32.0
        %v607 = vmul.f32 %v605, %v606
        %v608 = vsub.f32 %v596, %v607
        %v609 = vmul.f32 %v608, %v608
        %v610 = vsel %vm602, %v609, 0.0
        %611 = vadd.xlane.f32.xlu0 %v610
        %v612 = vpop.xlane.xlu0 %611
        %v613 = vrcp.pop 31.0
        %v614 = vmul.f32 %v612, %v613
        %v615 = vrsqrt.pop %v614
        %v616 = vmul.f32 %v614, %v615
        %vm617 = vcmp.eq.f32.partialorder %v614, inf
        %v618 = vsel %vm617, %v614, %v616
        %vm619 = vcmp.eq.f32.partialorder %v614, 0.0
        %v620 = vand.u32 %v614, 2147483648
        %v621 = vsel %vm619, %v620, %v618
        %v623 = vlaneseq
        %v624 = vshrl.u32 %v623, 7
        %v625 = vsub.s32 0, %v624
        %v626 = vrot.slane %v600, %v625
        %v628 = vmul.f32 %v626, %v608
        %v629 = vadd.f32 %v621, 1e-06
        %v630 = vrcp.pop %v629
        %v631 = vmul.f32 %v628, %v630
        %v633 = vlaneseq
        %v634 = vshrl.u32 %v633, 7
        %v635 = vsub.s32 0, %v634
        %v636 = vrot.slane %v601, %v635
        %v638 = vadd.f32 %v631, %v636
        %v639 = vpack.c.bf16 %v638, %v638
        %v640 = vld [vmem:[%s4] sm:$0xf]
        %v641 = vld [vmem:[%s4 + $0x4] sm:$0xf]
        %v642 = vld [vmem:[%s4 + $0x8] sm:$0xf]
        %v643 = vld [vmem:[%s4 + $0xc] sm:$0xf]
        %v644 = vld [vmem:[#allocation6] sm:$0x1]
        %v646 = vlaneseq
        %v647 = vshrl.u32 %v646, 7
        %v648 = vsub.s32 0, %v647
        %v649 = vrot.slane %v644, %v648
        %v655 = vunpack.c.l.b16 %v640
        %v656 = vunpack.c.l.b16 %v641
        %v657 = vunpack.c.l.b16 %v642
        %v658 = vunpack.c.l.b16 %v643
        %v659 = vpack.c.b16 %v656, %v655
        %v660 = vpack.c.b16 %v658, %v657
        %v664 = vsel %vm602, %v639, 0
        %666 = vmatprep.subr.bf16.mxu0 0
        %667 = vmatpush1.bf16.msra.mxu0 0
        %668 = vmatprep.subr.bf16.mxu0 0
        %669 = vmatpush1.bf16.msra.mxu0 0
        %670 = vmatprep.subr.bf16.mxu0 0
        %671 = vmatpush1.bf16.msra.mxu0 0
        %672 = vmatprep.subr.bf16.mxu0 0
        %673 = vmatpush1.bf16.msra.mxu0 0
        %674 = vmatprep.subr.bf16.mxu0 0
        %675 = vmatpush1.bf16.msra.mxu0 0
        %676 = vmatprep.subr.bf16.mxu0 0
        %677 = vmatpush1.bf16.msra.mxu0 0
        %678 = vmatprep.subr.bf16.mxu0 0
        %679 = vmatpush1.bf16.msra.mxu0 %v660
        %680 = vmatprep.subr.bf16.mxu0 0
        %681 = vmatpush1.bf16.msra.mxu0 %v659
        %682 = vmatprep.subr.bf16.mxu0 0
        %683 = vmatpush2.bf16.msra.mxu0 0
        %684 = vmatprep.subr.bf16.mxu0 0
        %685 = vmatpush2.bf16.msra.mxu0 0
        %686 = vmatprep.subr.bf16.mxu0 0
        %687 = vmatpush2.bf16.msra.mxu0 0
        %688 = vmatprep.subr.bf16.mxu0 0
        %689 = vmatpush2.bf16.msra.mxu0 0
        %690 = vmatprep.subr.bf16.mxu0 0
        %691 = vmatpush2.bf16.msra.mxu0 0
        %692 = vmatprep.subr.bf16.mxu0 0
        %693 = vmatpush2.bf16.msra.mxu0 0
        %694 = vmatprep.subr.bf16.mxu0 0
        %695 = vmatpush2.bf16.msra.mxu0 0
        %696 = vmatprep.subr.bf16.mxu0 0
        %697 = vmatpush2.bf16.msra.mxu0 0
        %698 = vmatprep.mubr.bf16.mxu0 0
        %699 = vmatmul.mubr.bf16.gmra.mxu0 %v664
        %v700 = vpop.f32.mrf.mxu0
        %v701 = vadd.f32 %v649, %v700
        %v702 = vpop.f32.mrf.mxu0
        %v703 = vpop.f32.mrf.mxu0
        %v704 = vpop.f32.mrf.mxu0
        %705 = vdwg.mxu0
        %v706 = vmul.f32 %v701, 0.35355338
        %v707 = vpack.c.bf16 %v706, %v706
        %v708 = vpack.c.bf16 %v701, %v701
        %710 = vrot.lane.b32.xlu0 %v708, 96
        %v711 = vpop.permute.xlu0 %710
        %vm712 = vcmask 64512
        %v714 = vsel %vm712, %v707, 0
        %v717 = vsel %vm712, %v711, 0
        %719 = vmatprep.subr.bf16.mxu0 0
        %720 = vmatpush1.bf16.xpose.msra.mxu0 0
        %721 = vmatprep.subr.bf16.mxu0 0
        %722 = vmatpush1.bf16.xpose.msra.mxu0 0
        %723 = vmatprep.subr.bf16.mxu0 0
        %724 = vmatpush1.bf16.xpose.msra.mxu0 0
        %725 = vmatprep.subr.bf16.mxu0 0
        %726 = vmatpush1.bf16.xpose.msra.mxu0 0
        %727 = vmatprep.subr.bf16.mxu0 0
        %728 = vmatpush1.bf16.xpose.msra.mxu0 0
        %729 = vmatprep.subr.bf16.mxu0 0
        %730 = vmatpush1.bf16.xpose.msra.mxu0 0
        %731 = vmatprep.subr.bf16.mxu0 0
        %732 = vmatpush1.bf16.xpose.msra.mxu0 0
        %733 = vmatprep.subr.bf16.mxu0 0
        %734 = vmatpush1.bf16.xpose.msra.mxu0 %v717
        %735 = vmatprep.subr.bf16.mxu0 0
        %736 = vmatpush2.bf16.xpose.msra.mxu0 0
        %737 = vmatprep.subr.bf16.mxu0 0
        %738 = vmatpush2.bf16.xpose.msra.mxu0 0
        %739 = vmatprep.subr.bf16.mxu0 0
        %740 = vmatpush2.bf16.xpose.msra.mxu0 0
        %741 = vmatprep.subr.bf16.mxu0 0
        %742 = vmatpush2.bf16.xpose.msra.mxu0 0
        %743 = vmatprep.subr.bf16.mxu0 0
        %744 = vmatpush2.bf16.xpose.msra.mxu0 0
        %745 = vmatprep.subr.bf16.mxu0 0
        %746 = vmatpush2.bf16.xpose.msra.mxu0 0
        %747 = vmatprep.subr.bf16.mxu0 0
        %748 = vmatpush2.bf16.xpose.msra.mxu0 0
        %749 = vmatprep.subr.bf16.mxu0 0
        %750 = vmatpush2.bf16.xpose.msra.mxu0 0
        %751 = vmatprep.mubr.bf16.mxu0 0
        %752 = vmatmul.mubr.bf16.gmra.mxu0 %v714
        %v753 = vpop.f32.mrf.mxu0
        %v754 = vadd.f32 %v599, %v753
        %v755 = vpop.f32.mrf.mxu0
        %v756 = vpop.f32.mrf.mxu0
        %v757 = vpop.f32.mrf.mxu0
        %758 = vdwg.mxu0
        %v759 = vsel %vm712, %v754, -inf
        %760 = vmax.xlane.f32.xlu0 %v759
        %v761 = vpop.xlane.xlu0 %760
        %v762 = vsub.f32 %v754, %v761
        %v763 = vmul.f32 %v762, 1.442695
        %v764 = vpow.pop %v763
        %v765 = vsel %vm712, %v764, 0.0
        %766 = vadd.xlane.f32.xlu0 %v765
        %v767 = vpop.xlane.xlu0 %766
        %v768 = vrcp.pop %v767
        %v769 = vmul.f32 %v764, %v768
        %v770 = vpack.c.bf16 %v769, %v769
        %771 = vrot.lane.b32.xlu0 %v708, 64
        %v772 = vpop.permute.xlu0 %771
        %v774 = vsel %vm712, %v770, 0
        %vm776 = vcmask 1043456
        %v778 = vsel %vm776, %v772, 0
        %780 = vmatprep.subr.bf16.mxu0 0
        %781 = vmatpush1.bf16.msra.mxu0 0
        %782 = vmatprep.subr.bf16.mxu0 0
        %783 = vmatpush1.bf16.msra.mxu0 0
        %784 = vmatprep.subr.bf16.mxu0 0
        %785 = vmatpush1.bf16.msra.mxu0 0
        %786 = vmatprep.subr.bf16.mxu0 0
        %787 = vmatpush1.bf16.msra.mxu0 0
        %788 = vmatprep.subr.bf16.mxu0 0
        %789 = vmatpush1.bf16.msra.mxu0 0
        %790 = vmatprep.subr.bf16.mxu0 0
        %791 = vmatpush1.bf16.msra.mxu0 0
        %792 = vmatprep.subr.bf16.mxu0 0
        %793 = vmatpush1.bf16.msra.mxu0 0
        %794 = vmatprep.subr.bf16.mxu0 0
        %795 = vmatpush1.bf16.msra.mxu0 %v778
        %796 = vmatprep.subr.bf16.mxu0 0
        %797 = vmatpush2.bf16.msra.mxu0 0
        %798 = vmatprep.subr.bf16.mxu0 0
        %799 = vmatpush2.bf16.msra.mxu0 0
        %800 = vmatprep.subr.bf16.mxu0 0
        %801 = vmatpush2.bf16.msra.mxu0 0
        %802 = vmatprep.subr.bf16.mxu0 0
        %803 = vmatpush2.bf16.msra.mxu0 0
        %804 = vmatprep.subr.bf16.mxu0 0
        %805 = vmatpush2.bf16.msra.mxu0 0
        %806 = vmatprep.subr.bf16.mxu0 0
        %807 = vmatpush2.bf16.msra.mxu0 0
        %808 = vmatprep.subr.bf16.mxu0 0
        %809 = vmatpush2.bf16.msra.mxu0 0
        %810 = vmatprep.subr.bf16.mxu0 0
        %811 = vmatpush2.bf16.msra.mxu0 0
        %812 = vmatprep.mubr.bf16.mxu0 0
        %813 = vmatmul.mubr.bf16.gmra.mxu0 %v774
        %v814 = vpop.f32.mrf.mxu0
        %v815 = vadd.f32 0.0, %v814
        %v816 = vpop.f32.mrf.mxu0
        %v817 = vpop.f32.mrf.mxu0
        %v818 = vpop.f32.mrf.mxu0
        %819 = vdwg.mxu0
        %v820 = vpack.c.bf16 %v815, %v815
        %v821 = vld [vmem:[%s6] sm:$0xf]
        %823 = vrot.lane.b32.xlu0 %v707, 120
        %v824 = vpop.permute.xlu0 %823
        %825 = vrot.lane.b32.xlu0 %v708, 88
        %v826 = vpop.permute.xlu0 %825
        %v828 = vsel %vm712, %v824, 0
        %v831 = vsel %vm712, %v826, 0
        %833 = vmatprep.subr.bf16.mxu0 0
        %834 = vmatpush1.bf16.xpose.msra.mxu0 0
        %835 = vmatprep.subr.bf16.mxu0 0
        %836 = vmatpush1.bf16.xpose.msra.mxu0 0
        %837 = vmatprep.subr.bf16.mxu0 0
        %838 = vmatpush1.bf16.xpose.msra.mxu0 0
        %839 = vmatprep.subr.bf16.mxu0 0
        %840 = vmatpush1.bf16.xpose.msra.mxu0 0
        %841 = vmatprep.subr.bf16.mxu0 0
        %842 = vmatpush1.bf16.xpose.msra.mxu0 0
        %843 = vmatprep.subr.bf16.mxu0 0
        %844 = vmatpush1.bf16.xpose.msra.mxu0 0
        %845 = vmatprep.subr.bf16.mxu0 0
        %846 = vmatpush1.bf16.xpose.msra.mxu0 0
        %847 = vmatprep.subr.bf16.mxu0 0
        %848 = vmatpush1.bf16.xpose.msra.mxu0 %v831
        %849 = vmatprep.subr.bf16.mxu0 0
        %850 = vmatpush2.bf16.xpose.msra.mxu0 0
        %851 = vmatprep.subr.bf16.mxu0 0
        %852 = vmatpush2.bf16.xpose.msra.mxu0 0
        %853 = vmatprep.subr.bf16.mxu0 0
        %854 = vmatpush2.bf16.xpose.msra.mxu0 0
        %855 = vmatprep.subr.bf16.mxu0 0
        %856 = vmatpush2.bf16.xpose.msra.mxu0 0
        %857 = vmatprep.subr.bf16.mxu0 0
        %858 = vmatpush2.bf16.xpose.msra.mxu0 0
        %859 = vmatprep.subr.bf16.mxu0 0
        %860 = vmatpush2.bf16.xpose.msra.mxu0 0
        %861 = vmatprep.subr.bf16.mxu0 0
        %862 = vmatpush2.bf16.xpose.msra.mxu0 0
        %863 = vmatprep.subr.bf16.mxu0 0
        %864 = vmatpush2.bf16.xpose.msra.mxu0 0
        %865 = vmatprep.mubr.bf16.mxu0 0
        %866 = vmatmul.mubr.bf16.gmra.mxu0 %v828
        %v867 = vpop.f32.mrf.mxu0
        %v868 = vadd.f32 %v599, %v867
        %v869 = vpop.f32.mrf.mxu0
        %v870 = vpop.f32.mrf.mxu0
        %v871 = vpop.f32.mrf.mxu0
        %872 = vdwg.mxu0
        %v873 = vsel %vm712, %v868, -inf
        %874 = vmax.xlane.f32.xlu0 %v873
        %v875 = vpop.xlane.xlu0 %874
        %v876 = vsub.f32 %v868, %v875
        %v877 = vmul.f32 %v876, 1.442695
        %v878 = vpow.pop %v877
        %v879 = vsel %vm712, %v878, 0.0
        %880 = vadd.xlane.f32.xlu0 %v879
        %v881 = vpop.xlane.xlu0 %880
        %v882 = vrcp.pop %v881
        %v883 = vmul.f32 %v878, %v882
        %v884 = vpack.c.bf16 %v883, %v883
        %885 = vrot.lane.b32.xlu0 %v708, 56
        %v886 = vpop.permute.xlu0 %885
        %v888 = vsel %vm712, %v884, 0
        %v891 = vsel %vm776, %v886, 0
        %893 = vmatprep.subr.bf16.mxu0 0
        %894 = vmatpush1.bf16.msra.mxu0 0
        %895 = vmatprep.subr.bf16.mxu0 0
        %896 = vmatpush1.bf16.msra.mxu0 0
        %897 = vmatprep.subr.bf16.mxu0 0
        %898 = vmatpush1.bf16.msra.mxu0 0
        %899 = vmatprep.subr.bf16.mxu0 0
        %900 = vmatpush1.bf16.msra.mxu0 0
        %901 = vmatprep.subr.bf16.mxu0 0
        %902 = vmatpush1.bf16.msra.mxu0 0
        %903 = vmatprep.subr.bf16.mxu0 0
        %904 = vmatpush1.bf16.msra.mxu0 0
        %905 = vmatprep.subr.bf16.mxu0 0
        %906 = vmatpush1.bf16.msra.mxu0 0
        %907 = vmatprep.subr.bf16.mxu0 0
        %908 = vmatpush1.bf16.msra.mxu0 %v891
        %909 = vmatprep.subr.bf16.mxu0 0
        %910 = vmatpush2.bf16.msra.mxu0 0
        %911 = vmatprep.subr.bf16.mxu0 0
        %912 = vmatpush2.bf16.msra.mxu0 0
        %913 = vmatprep.subr.bf16.mxu0 0
        %914 = vmatpush2.bf16.msra.mxu0 0
        %915 = vmatprep.subr.bf16.mxu0 0
        %916 = vmatpush2.bf16.msra.mxu0 0
        %917 = vmatprep.subr.bf16.mxu0 0
        %918 = vmatpush2.bf16.msra.mxu0 0
        %919 = vmatprep.subr.bf16.mxu0 0
        %920 = vmatpush2.bf16.msra.mxu0 0
        %921 = vmatprep.subr.bf16.mxu0 0
        %922 = vmatpush2.bf16.msra.mxu0 0
        %923 = vmatprep.subr.bf16.mxu0 0
        %924 = vmatpush2.bf16.msra.mxu0 0
        %925 = vmatprep.mubr.bf16.mxu0 0
        %926 = vmatmul.mubr.bf16.gmra.mxu0 %v888
        %v927 = vpop.f32.mrf.mxu0
        %v928 = vadd.f32 0.0, %v927
        %v929 = vpop.f32.mrf.mxu0
        %v930 = vpop.f32.mrf.mxu0
        %v931 = vpop.f32.mrf.mxu0
        %932 = vdwg.mxu0
        %v933 = vpack.c.bf16 %v928, %v928
        %s934 = scalar_lea.vmem %s6, 4
        %v935 = vld [vmem:[%s934] sm:$0xf]
        %v937 = vsel %vm712, %v933, 0
        %v940 = vsel %vm776, %v935, 0
        %942 = vmatprep.subr.bf16.mxu0 0
        %943 = vmatpush1.bf16.msra.mxu0 0
        %944 = vmatprep.subr.bf16.mxu0 0
        %945 = vmatpush1.bf16.msra.mxu0 0
        %946 = vmatprep.subr.bf16.mxu0 0
        %947 = vmatpush1.bf16.msra.mxu0 0
        %948 = vmatprep.subr.bf16.mxu0 0
        %949 = vmatpush1.bf16.msra.mxu0 0
        %950 = vmatprep.subr.bf16.mxu0 0
        %951 = vmatpush1.bf16.msra.mxu0 0
        %952 = vmatprep.subr.bf16.mxu0 0
        %953 = vmatpush1.bf16.msra.mxu0 0
        %954 = vmatprep.subr.bf16.mxu0 0
        %955 = vmatpush1.bf16.msra.mxu0 0
        %956 = vmatprep.subr.bf16.mxu0 0
        %957 = vmatpush1.bf16.msra.mxu0 %v940
        %958 = vmatprep.subr.bf16.mxu0 0
        %959 = vmatpush2.bf16.msra.mxu0 0
        %960 = vmatprep.subr.bf16.mxu0 0
        %961 = vmatpush2.bf16.msra.mxu0 0
        %962 = vmatprep.subr.bf16.mxu0 0
        %963 = vmatpush2.bf16.msra.mxu0 0
        %964 = vmatprep.subr.bf16.mxu0 0
        %965 = vmatpush2.bf16.msra.mxu0 0
        %966 = vmatprep.subr.bf16.mxu0 0
        %967 = vmatpush2.bf16.msra.mxu0 0
        %968 = vmatprep.subr.bf16.mxu0 0
        %969 = vmatpush2.bf16.msra.mxu0 0
        %970 = vmatprep.subr.bf16.mxu0 0
        %971 = vmatpush2.bf16.msra.mxu0 0
        %972 = vmatprep.subr.bf16.mxu0 0
        %973 = vmatpush2.bf16.msra.mxu0 0
        %974 = vmatprep.mubr.bf16.mxu0 0
        %975 = vmatmul.mubr.bf16.gmra.mxu0 %v937
        %v976 = vpop.f32.mrf.mxu0
        %v977 = vadd.f32 0.0, %v976
        %v978 = vpop.f32.mrf.mxu0
        %v979 = vpop.f32.mrf.mxu0
        %v980 = vpop.f32.mrf.mxu0
        %981 = vdwg.mxu0
        %v983 = vsel %vm712, %v820, 0
        %v986 = vsel %vm776, %v821, 0
        %988 = vmatprep.subr.bf16.mxu0 0
        %989 = vmatpush1.bf16.msra.mxu0 0
        %990 = vmatprep.subr.bf16.mxu0 0
        %991 = vmatpush1.bf16.msra.mxu0 0
        %992 = vmatprep.subr.bf16.mxu0 0
        %993 = vmatpush1.bf16.msra.mxu0 0
        %994 = vmatprep.subr.bf16.mxu0 0
        %995 = vmatpush1.bf16.msra.mxu0 0
        %996 = vmatprep.subr.bf16.mxu0 0
        %997 = vmatpush1.bf16.msra.mxu0 0
        %998 = vmatprep.subr.bf16.mxu0 0
        %999 = vmatpush1.bf16.msra.mxu0 0
        %1000 = vmatprep.subr.bf16.mxu0 0
        %1001 = vmatpush1.bf16.msra.mxu0 0
        %1002 = vmatprep.subr.bf16.mxu0 0
        %1003 = vmatpush1.bf16.msra.mxu0 %v986
        %1004 = vmatprep.subr.bf16.mxu0 0
        %1005 = vmatpush2.bf16.msra.mxu0 0
        %1006 = vmatprep.subr.bf16.mxu0 0
        %1007 = vmatpush2.bf16.msra.mxu0 0
        %1008 = vmatprep.subr.bf16.mxu0 0
        %1009 = vmatpush2.bf16.msra.mxu0 0
        %1010 = vmatprep.subr.bf16.mxu0 0
        %1011 = vmatpush2.bf16.msra.mxu0 0
        %1012 = vmatprep.subr.bf16.mxu0 0
        %1013 = vmatpush2.bf16.msra.mxu0 0
        %1014 = vmatprep.subr.bf16.mxu0 0
        %1015 = vmatpush2.bf16.msra.mxu0 0
        %1016 = vmatprep.subr.bf16.mxu0 0
        %1017 = vmatpush2.bf16.msra.mxu0 0
        %1018 = vmatprep.subr.bf16.mxu0 0
        %1019 = vmatpush2.bf16.msra.mxu0 0
        %1020 = vmatprep.mubr.bf16.mxu0 0
        %1021 = vmatmul.mubr.bf16.gmra.mxu0 %v983
        %v1022 = vpop.f32.mrf.mxu0
        %v1023 = vadd.f32 %v977, %v1022
        %v1024 = vpop.f32.mrf.mxu0
        %v1025 = vpop.f32.mrf.mxu0
        %v1026 = vpop.f32.mrf.mxu0
        %1027 = vdwg.mxu0
        %1028 = vrot.lane.b32.xlu0 %v707, 112
        %v1029 = vpop.permute.xlu0 %1028
        %1030 = vrot.lane.b32.xlu0 %v708, 80
        %v1031 = vpop.permute.xlu0 %1030
        %v1033 = vsel %vm712, %v1029, 0
        %v1036 = vsel %vm712, %v1031, 0
        %1038 = vmatprep.subr.bf16.mxu0 0
        %1039 = vmatpush1.bf16.xpose.msra.mxu0 0
        %1040 = vmatprep.subr.bf16.mxu0 0
        %1041 = vmatpush1.bf16.xpose.msra.mxu0 0
        %1042 = vmatprep.subr.bf16.mxu0 0
        %1043 = vmatpush1.bf16.xpose.msra.mxu0 0
        %1044 = vmatprep.subr.bf16.mxu0 0
        %1045 = vmatpush1.bf16.xpose.msra.mxu0 0
        %1046 = vmatprep.subr.bf16.mxu0 0
        %1047 = vmatpush1.bf16.xpose.msra.mxu0 0
        %1048 = vmatprep.subr.bf16.mxu0 0
        %1049 = vmatpush1.bf16.xpose.msra.mxu0 0
        %1050 = vmatprep.subr.bf16.mxu0 0
        %1051 = vmatpush1.bf16.xpose.msra.mxu0 0
        %1052 = vmatprep.subr.bf16.mxu0 0
        %1053 = vmatpush1.bf16.xpose.msra.mxu0 %v1036
        %1054 = vmatprep.subr.bf16.mxu0 0
        %1055 = vmatpush2.bf16.xpose.msra.mxu0 0
        %1056 = vmatprep.subr.bf16.mxu0 0
        %1057 = vmatpush2.bf16.xpose.msra.mxu0 0
        %1058 = vmatprep.subr.bf16.mxu0 0
        %1059 = vmatpush2.bf16.xpose.msra.mxu0 0
        %1060 = vmatprep.subr.bf16.mxu0 0
        %1061 = vmatpush2.bf16.xpose.msra.mxu0 0
        %1062 = vmatprep.subr.bf16.mxu0 0
        %1063 = vmatpush2.bf16.xpose.msra.mxu0 0
        %1064 = vmatprep.subr.bf16.mxu0 0
        %1065 = vmatpush2.bf16.xpose.msra.mxu0 0
        %1066 = vmatprep.subr.bf16.mxu0 0
        %1067 = vmatpush2.bf16.xpose.msra.mxu0 0
        %1068 = vmatprep.subr.bf16.mxu0 0
        %1069 = vmatpush2.bf16.xpose.msra.mxu0 0
        %1070 = vmatprep.mubr.bf16.mxu0 0
        %1071 = vmatmul.mubr.bf16.gmra.mxu0 %v1033
        %v1072 = vpop.f32.mrf.mxu0
        %v1073 = vadd.f32 %v599, %v1072
        %v1074 = vpop.f32.mrf.mxu0
        %v1075 = vpop.f32.mrf.mxu0
        %v1076 = vpop.f32.mrf.mxu0
        %1077 = vdwg.mxu0
        %v1078 = vsel %vm712, %v1073, -inf
        %1079 = vmax.xlane.f32.xlu0 %v1078
        %v1080 = vpop.xlane.xlu0 %1079
        %v1081 = vsub.f32 %v1073, %v1080
        %v1082 = vmul.f32 %v1081, 1.442695
        %v1083 = vpow.pop %v1082
        %v1084 = vsel %vm712, %v1083, 0.0
        %1085 = vadd.xlane.f32.xlu0 %v1084
        %v1086 = vpop.xlane.xlu0 %1085
        %v1087 = vrcp.pop %v1086
        %v1088 = vmul.f32 %v1083, %v1087
        %v1089 = vpack.c.bf16 %v1088, %v1088
        %1090 = vrot.lane.b32.xlu0 %v708, 48
        %v1091 = vpop.permute.xlu0 %1090
        %v1093 = vsel %vm712, %v1089, 0
        %v1096 = vsel %vm776, %v1091, 0
        %1098 = vmatprep.subr.bf16.mxu0 0
        %1099 = vmatpush1.bf16.msra.mxu0 0
        %1100 = vmatprep.subr.bf16.mxu0 0
        %1101 = vmatpush1.bf16.msra.mxu0 0
        %1102 = vmatprep.subr.bf16.mxu0 0
        %1103 = vmatpush1.bf16.msra.mxu0 0
        %1104 = vmatprep.subr.bf16.mxu0 0
        %1105 = vmatpush1.bf16.msra.mxu0 0
        %1106 = vmatprep.subr.bf16.mxu0 0
        %1107 = vmatpush1.bf16.msra.mxu0 0
        %1108 = vmatprep.subr.bf16.mxu0 0
        %1109 = vmatpush1.bf16.msra.mxu0 0
        %1110 = vmatprep.subr.bf16.mxu0 0
        %1111 = vmatpush1.bf16.msra.mxu0 0
        %1112 = vmatprep.subr.bf16.mxu0 0
        %1113 = vmatpush1.bf16.msra.mxu0 %v1096
        %1114 = vmatprep.subr.bf16.mxu0 0
        %1115 = vmatpush2.bf16.msra.mxu0 0
        %1116 = vmatprep.subr.bf16.mxu0 0
        %1117 = vmatpush2.bf16.msra.mxu0 0
        %1118 = vmatprep.subr.bf16.mxu0 0
        %1119 = vmatpush2.bf16.msra.mxu0 0
        %1120 = vmatprep.subr.bf16.mxu0 0
        %1121 = vmatpush2.bf16.msra.mxu0 0
        %1122 = vmatprep.subr.bf16.mxu0 0
        %1123 = vmatpush2.bf16.msra.mxu0 0
        %1124 = vmatprep.subr.bf16.mxu0 0
        %1125 = vmatpush2.bf16.msra.mxu0 0
        %1126 = vmatprep.subr.bf16.mxu0 0
        %1127 = vmatpush2.bf16.msra.mxu0 0
        %1128 = vmatprep.subr.bf16.mxu0 0
        %1129 = vmatpush2.bf16.msra.mxu0 0
        %1130 = vmatprep.mubr.bf16.mxu0 0
        %1131 = vmatmul.mubr.bf16.gmra.mxu0 %v1093
        %v1132 = vpop.f32.mrf.mxu0
        %v1133 = vadd.f32 0.0, %v1132
        %v1134 = vpop.f32.mrf.mxu0
        %v1135 = vpop.f32.mrf.mxu0
        %v1136 = vpop.f32.mrf.mxu0
        %1137 = vdwg.mxu0
        %v1138 = vpack.c.bf16 %v1133, %v1133
        %s1139 = scalar_lea.vmem %s6, 8
        %v1140 = vld [vmem:[%s1139] sm:$0xf]
        %v1142 = vsel %vm712, %v1138, 0
        %v1145 = vsel %vm776, %v1140, 0
        %1147 = vmatprep.subr.bf16.mxu0 0
        %1148 = vmatpush1.bf16.msra.mxu0 0
        %1149 = vmatprep.subr.bf16.mxu0 0
        %1150 = vmatpush1.bf16.msra.mxu0 0
        %1151 = vmatprep.subr.bf16.mxu0 0
        %1152 = vmatpush1.bf16.msra.mxu0 0
        %1153 = vmatprep.subr.bf16.mxu0 0
        %1154 = vmatpush1.bf16.msra.mxu0 0
        %1155 = vmatprep.subr.bf16.mxu0 0
        %1156 = vmatpush1.bf16.msra.mxu0 0
        %1157 = vmatprep.subr.bf16.mxu0 0
        %1158 = vmatpush1.bf16.msra.mxu0 0
        %1159 = vmatprep.subr.bf16.mxu0 0
        %1160 = vmatpush1.bf16.msra.mxu0 0
        %1161 = vmatprep.subr.bf16.mxu0 0
        %1162 = vmatpush1.bf16.msra.mxu0 %v1145
        %1163 = vmatprep.subr.bf16.mxu0 0
        %1164 = vmatpush2.bf16.msra.mxu0 0
        %1165 = vmatprep.subr.bf16.mxu0 0
        %1166 = vmatpush2.bf16.msra.mxu0 0
        %1167 = vmatprep.subr.bf16.mxu0 0
        %1168 = vmatpush2.bf16.msra.mxu0 0
        %1169 = vmatprep.subr.bf16.mxu0 0
        %1170 = vmatpush2.bf16.msra.mxu0 0
        %1171 = vmatprep.subr.bf16.mxu0 0
        %1172 = vmatpush2.bf16.msra.mxu0 0
        %1173 = vmatprep.subr.bf16.mxu0 0
        %1174 = vmatpush2.bf16.msra.mxu0 0
        %1175 = vmatprep.subr.bf16.mxu0 0
        %1176 = vmatpush2.bf16.msra.mxu0 0
        %1177 = vmatprep.subr.bf16.mxu0 0
        %1178 = vmatpush2.bf16.msra.mxu0 0
        %1179 = vmatprep.mubr.bf16.mxu0 0
        %1180 = vmatmul.mubr.bf16.gmra.mxu0 %v1142
        %v1181 = vpop.f32.mrf.mxu0
        %v1182 = vadd.f32 0.0, %v1181
        %v1183 = vpop.f32.mrf.mxu0
        %v1184 = vpop.f32.mrf.mxu0
        %v1185 = vpop.f32.mrf.mxu0
        %1186 = vdwg.mxu0
        %v1187 = vadd.f32 %v1023, %v1182
        %1188 = vrot.lane.b32.xlu0 %v707, 104
        %v1189 = vpop.permute.xlu0 %1188
        %1190 = vrot.lane.b32.xlu0 %v708, 72
        %v1191 = vpop.permute.xlu0 %1190
        %v1193 = vsel %vm712, %v1189, 0
        %v1196 = vsel %vm712, %v1191, 0
        %1198 = vmatprep.subr.bf16.mxu0 0
        %1199 = vmatpush1.bf16.xpose.msra.mxu0 0
        %1200 = vmatprep.subr.bf16.mxu0 0
        %1201 = vmatpush1.bf16.xpose.msra.mxu0 0
        %1202 = vmatprep.subr.bf16.mxu0 0
        %1203 = vmatpush1.bf16.xpose.msra.mxu0 0
        %1204 = vmatprep.subr.bf16.mxu0 0
        %1205 = vmatpush1.bf16.xpose.msra.mxu0 0
        %1206 = vmatprep.subr.bf16.mxu0 0
        %1207 = vmatpush1.bf16.xpose.msra.mxu0 0
        %1208 = vmatprep.subr.bf16.mxu0 0
        %1209 = vmatpush1.bf16.xpose.msra.mxu0 0
        %1210 = vmatprep.subr.bf16.mxu0 0
        %1211 = vmatpush1.bf16.xpose.msra.mxu0 0
        %1212 = vmatprep.subr.bf16.mxu0 0
        %1213 = vmatpush1.bf16.xpose.msra.mxu0 %v1196
        %1214 = vmatprep.subr.bf16.mxu0 0
        %1215 = vmatpush2.bf16.xpose.msra.mxu0 0
        %1216 = vmatprep.subr.bf16.mxu0 0
        %1217 = vmatpush2.bf16.xpose.msra.mxu0 0
        %1218 = vmatprep.subr.bf16.mxu0 0
        %1219 = vmatpush2.bf16.xpose.msra.mxu0 0
        %1220 = vmatprep.subr.bf16.mxu0 0
        %1221 = vmatpush2.bf16.xpose.msra.mxu0 0
        %1222 = vmatprep.subr.bf16.mxu0 0
        %1223 = vmatpush2.bf16.xpose.msra.mxu0 0
        %1224 = vmatprep.subr.bf16.mxu0 0
        %1225 = vmatpush2.bf16.xpose.msra.mxu0 0
        %1226 = vmatprep.subr.bf16.mxu0 0
        %1227 = vmatpush2.bf16.xpose.msra.mxu0 0
        %1228 = vmatprep.subr.bf16.mxu0 0
        %1229 = vmatpush2.bf16.xpose.msra.mxu0 0
        %1230 = vmatprep.mubr.bf16.mxu0 0
        %1231 = vmatmul.mubr.bf16.gmra.mxu0 %v1193
        %v1232 = vpop.f32.mrf.mxu0
        %v1233 = vadd.f32 %v599, %v1232
        %v1234 = vpop.f32.mrf.mxu0
        %v1235 = vpop.f32.mrf.mxu0
        %v1236 = vpop.f32.mrf.mxu0
        %1237 = vdwg.mxu0
        %v1238 = vsel %vm712, %v1233, -inf
        %1239 = vmax.xlane.f32.xlu0 %v1238
        %v1240 = vpop.xlane.xlu0 %1239
        %v1241 = vsub.f32 %v1233, %v1240
        %v1242 = vmul.f32 %v1241, 1.442695
        %v1243 = vpow.pop %v1242
        %v1244 = vsel %vm712, %v1243, 0.0
        %1245 = vadd.xlane.f32.xlu0 %v1244
        %v1246 = vpop.xlane.xlu0 %1245
        %v1247 = vrcp.pop %v1246
        %v1248 = vmul.f32 %v1243, %v1247
        %v1249 = vpack.c.bf16 %v1248, %v1248
        %1250 = vrot.lane.b32.xlu0 %v708, 40
        %v1251 = vpop.permute.xlu0 %1250
        %v1253 = vsel %vm712, %v1249, 0
        %v1256 = vsel %vm776, %v1251, 0
        %1258 = vmatprep.subr.bf16.mxu0 0
        %1259 = vmatpush1.bf16.msra.mxu0 0
        %1260 = vmatprep.subr.bf16.mxu0 0
        %1261 = vmatpush1.bf16.msra.mxu0 0
        %1262 = vmatprep.subr.bf16.mxu0 0
        %1263 = vmatpush1.bf16.msra.mxu0 0
        %1264 = vmatprep.subr.bf16.mxu0 0
        %1265 = vmatpush1.bf16.msra.mxu0 0
        %1266 = vmatprep.subr.bf16.mxu0 0
        %1267 = vmatpush1.bf16.msra.mxu0 0
        %1268 = vmatprep.subr.bf16.mxu0 0
        %1269 = vmatpush1.bf16.msra.mxu0 0
        %1270 = vmatprep.subr.bf16.mxu0 0
        %1271 = vmatpush1.bf16.msra.mxu0 0
        %1272 = vmatprep.subr.bf16.mxu0 0
        %1273 = vmatpush1.bf16.msra.mxu0 %v1256
        %1274 = vmatprep.subr.bf16.mxu0 0
        %1275 = vmatpush2.bf16.msra.mxu0 0
        %1276 = vmatprep.subr.bf16.mxu0 0
        %1277 = vmatpush2.bf16.msra.mxu0 0
        %1278 = vmatprep.subr.bf16.mxu0 0
        %1279 = vmatpush2.bf16.msra.mxu0 0
        %1280 = vmatprep.subr.bf16.mxu0 0
        %1281 = vmatpush2.bf16.msra.mxu0 0
        %1282 = vmatprep.subr.bf16.mxu0 0
        %1283 = vmatpush2.bf16.msra.mxu0 0
        %1284 = vmatprep.subr.bf16.mxu0 0
        %1285 = vmatpush2.bf16.msra.mxu0 0
        %1286 = vmatprep.subr.bf16.mxu0 0
        %1287 = vmatpush2.bf16.msra.mxu0 0
        %1288 = vmatprep.subr.bf16.mxu0 0
        %1289 = vmatpush2.bf16.msra.mxu0 0
        %1290 = vmatprep.mubr.bf16.mxu0 0
        %1291 = vmatmul.mubr.bf16.gmra.mxu0 %v1253
        %v1292 = vpop.f32.mrf.mxu0
        %v1293 = vadd.f32 0.0, %v1292
        %v1294 = vpop.f32.mrf.mxu0
        %v1295 = vpop.f32.mrf.mxu0
        %v1296 = vpop.f32.mrf.mxu0
        %1297 = vdwg.mxu0
        %v1298 = vpack.c.bf16 %v1293, %v1293
        %s1299 = scalar_lea.vmem %s6, 12
        %v1300 = vld [vmem:[%s1299] sm:$0xf]
        %v1302 = vsel %vm712, %v1298, 0
        %v1305 = vsel %vm776, %v1300, 0
        %1307 = vmatprep.subr.bf16.mxu0 0
        %1308 = vmatpush1.bf16.msra.mxu0 0
        %1309 = vmatprep.subr.bf16.mxu0 0
        %1310 = vmatpush1.bf16.msra.mxu0 0
        %1311 = vmatprep.subr.bf16.mxu0 0
        %1312 = vmatpush1.bf16.msra.mxu0 0
        %1313 = vmatprep.subr.bf16.mxu0 0
        %1314 = vmatpush1.bf16.msra.mxu0 0
        %1315 = vmatprep.subr.bf16.mxu0 0
        %1316 = vmatpush1.bf16.msra.mxu0 0
        %1317 = vmatprep.subr.bf16.mxu0 0
        %1318 = vmatpush1.bf16.msra.mxu0 0
        %1319 = vmatprep.subr.bf16.mxu0 0
        %1320 = vmatpush1.bf16.msra.mxu0 0
        %1321 = vmatprep.subr.bf16.mxu0 0
        %1322 = vmatpush1.bf16.msra.mxu0 %v1305
        %1323 = vmatprep.subr.bf16.mxu0 0
        %1324 = vmatpush2.bf16.msra.mxu0 0
        %1325 = vmatprep.subr.bf16.mxu0 0
        %1326 = vmatpush2.bf16.msra.mxu0 0
        %1327 = vmatprep.subr.bf16.mxu0 0
        %1328 = vmatpush2.bf16.msra.mxu0 0
        %1329 = vmatprep.subr.bf16.mxu0 0
        %1330 = vmatpush2.bf16.msra.mxu0 0
        %1331 = vmatprep.subr.bf16.mxu0 0
        %1332 = vmatpush2.bf16.msra.mxu0 0
        %1333 = vmatprep.subr.bf16.mxu0 0
        %1334 = vmatpush2.bf16.msra.mxu0 0
        %1335 = vmatprep.subr.bf16.mxu0 0
        %1336 = vmatpush2.bf16.msra.mxu0 0
        %1337 = vmatprep.subr.bf16.mxu0 0
        %1338 = vmatpush2.bf16.msra.mxu0 0
        %1339 = vmatprep.mubr.bf16.mxu0 0
        %1340 = vmatmul.mubr.bf16.gmra.mxu0 %v1302
        %v1341 = vpop.f32.mrf.mxu0
        %v1342 = vadd.f32 0.0, %v1341
        %v1343 = vpop.f32.mrf.mxu0
        %v1344 = vpop.f32.mrf.mxu0
        %v1345 = vpop.f32.mrf.mxu0
        %1346 = vdwg.mxu0
        %v1347 = vadd.f32 %v1187, %v1342
        %v1348 = vadd.f32 %v596, %v1347
        %v1349 = vld [vmem:[#allocation7] sm:$0x1]
        %v1351 = vlaneseq
        %v1352 = vshrl.u32 %v1351, 7
        %v1353 = vsub.s32 0, %v1352
        %v1354 = vrot.slane %v1349, %v1353
        %v1356 = vadd.f32 %v1348, %v1354
        %v1357 = vld [vmem:[#allocation9] sm:$0x1]
        %v1358 = vld [vmem:[#allocation10] sm:$0x1]
        %v1359 = vsel %vm602, %v1356, 0.0
        %1360 = vadd.xlane.f32.xlu0 %v1359
        %v1361 = vpop.xlane.xlu0 %1360
        %v1362 = vmul.f32 %v1361, %v606
        %v1363 = vsub.f32 %v1356, %v1362
        %v1364 = vmul.f32 %v1363, %v1363
        %v1365 = vsel %vm602, %v1364, 0.0
        %1366 = vadd.xlane.f32.xlu0 %v1365
        %v1367 = vpop.xlane.xlu0 %1366
        %v1368 = vmul.f32 %v1367, %v613
        %v1369 = vrsqrt.pop %v1368
        %v1370 = vmul.f32 %v1368, %v1369
        %vm1371 = vcmp.eq.f32.partialorder %v1368, inf
        %v1372 = vsel %vm1371, %v1368, %v1370
        %vm1373 = vcmp.eq.f32.partialorder %v1368, 0.0
        %v1374 = vand.u32 %v1368, 2147483648
        %v1375 = vsel %vm1373, %v1374, %v1372
        %v1377 = vlaneseq
        %v1378 = vshrl.u32 %v1377, 7
        %v1379 = vsub.s32 0, %v1378
        %v1380 = vrot.slane %v1357, %v1379
        %v1382 = vmul.f32 %v1380, %v1363
        %v1383 = vadd.f32 %v1375, 1e-06
        %v1384 = vrcp.pop %v1383
        %v1385 = vmul.f32 %v1382, %v1384
        %v1387 = vlaneseq
        %v1388 = vshrl.u32 %v1387, 7
        %v1389 = vsub.s32 0, %v1388
        %v1390 = vrot.slane %v1358, %v1389
        %v1392 = vadd.f32 %v1385, %v1390
        %v1393 = vpack.c.bf16 %v1392, %v1392
        %v1394 = vld [vmem:[#allocation12] sm:$0xf]
        %v1395 = vld [vmem:[#allocation12 + $0x4] sm:$0xf]
        %v1396 = vld [vmem:[#allocation12 + $0x8] sm:$0xf]
        %v1397 = vld [vmem:[#allocation12 + $0xc] sm:$0xf]
        %v1398 = vld [vmem:[#allocation13] sm:$0x1]
        %v1400 = vlaneseq
        %v1401 = vshrl.u32 %v1400, 7
        %v1402 = vsub.s32 0, %v1401
        %v1403 = vrot.slane %v1398, %v1402
        %v1409 = vunpack.c.l.b16 %v1394
        %v1410 = vunpack.c.l.b16 %v1395
        %v1411 = vunpack.c.l.b16 %v1396
        %v1412 = vunpack.c.l.b16 %v1397
        %v1413 = vpack.c.b16 %v1410, %v1409
        %v1414 = vpack.c.b16 %v1412, %v1411
        %v1418 = vsel %vm602, %v1393, 0
        %1420 = vmatprep.subr.bf16.mxu0 0
        %1421 = vmatpush1.bf16.msra.mxu0 0
        %1422 = vmatprep.subr.bf16.mxu0 0
        %1423 = vmatpush1.bf16.msra.mxu0 0
        %1424 = vmatprep.subr.bf16.mxu0 0
        %1425 = vmatpush1.bf16.msra.mxu0 0
        %1426 = vmatprep.subr.bf16.mxu0 0
        %1427 = vmatpush1.bf16.msra.mxu0 0
        %1428 = vmatprep.subr.bf16.mxu0 0
        %1429 = vmatpush1.bf16.msra.mxu0 0
        %1430 = vmatprep.subr.bf16.mxu0 0
        %1431 = vmatpush1.bf16.msra.mxu0 0
        %1432 = vmatprep.subr.bf16.mxu0 0
        %1433 = vmatpush1.bf16.msra.mxu0 %v1414
        %1434 = vmatprep.subr.bf16.mxu0 0
        %1435 = vmatpush1.bf16.msra.mxu0 %v1413
        %1436 = vmatprep.subr.bf16.mxu0 0
        %1437 = vmatpush2.bf16.msra.mxu0 0
        %1438 = vmatprep.subr.bf16.mxu0 0
        %1439 = vmatpush2.bf16.msra.mxu0 0
        %1440 = vmatprep.subr.bf16.mxu0 0
        %1441 = vmatpush2.bf16.msra.mxu0 0
        %1442 = vmatprep.subr.bf16.mxu0 0
        %1443 = vmatpush2.bf16.msra.mxu0 0
        %1444 = vmatprep.subr.bf16.mxu0 0
        %1445 = vmatpush2.bf16.msra.mxu0 0
        %1446 = vmatprep.subr.bf16.mxu0 0
        %1447 = vmatpush2.bf16.msra.mxu0 0
        %1448 = vmatprep.subr.bf16.mxu0 0
        %1449 = vmatpush2.bf16.msra.mxu0 0
        %1450 = vmatprep.subr.bf16.mxu0 0
        %1451 = vmatpush2.bf16.msra.mxu0 0
        %1452 = vmatprep.mubr.bf16.mxu0 0
        %1453 = vmatmul.mubr.bf16.gmra.mxu0 %v1418
        %v1454 = vpop.f32.mrf.mxu0
        %v1455 = vadd.f32 %v1403, %v1454
        %v1456 = vpop.f32.mrf.mxu0
        %v1457 = vpop.f32.mrf.mxu0
        %v1458 = vpop.f32.mrf.mxu0
        %1459 = vdwg.mxu0
        %v1460 = vmax.f32 %v1455, 0.0
        %v1461 = vpack.c.bf16 %v1460, %v1460
        %v1462 = vld [vmem:[%s12] sm:$0xf]
        %v1463 = vld [vmem:[%s12 + $0x4] sm:$0xf]
        %v1464 = vld [vmem:[%s12 + $0x8] sm:$0xf]
        %v1465 = vld [vmem:[%s12 + $0xc] sm:$0xf]
        %v1466 = vld [vmem:[%s12 + $0x10] sm:$0xf]
        %v1467 = vld [vmem:[%s12 + $0x14] sm:$0xf]
        %v1468 = vld [vmem:[%s12 + $0x18] sm:$0xf]
        %v1469 = vld [vmem:[%s12 + $0x1c] sm:$0xf]
        %v1470 = vld [vmem:[#allocation15] sm:$0x1]
        %v1472 = vlaneseq
        %v1473 = vshrl.u32 %v1472, 7
        %v1474 = vsub.s32 0, %v1473
        %v1475 = vrot.slane %v1470, %v1474
        %v1485 = vunpack.c.l.b16 %v1462
        %v1486 = vunpack.c.l.b16 %v1463
        %v1487 = vunpack.c.l.b16 %v1464
        %v1488 = vunpack.c.l.b16 %v1465
        %v1489 = vunpack.c.l.b16 %v1466
        %v1490 = vunpack.c.l.b16 %v1467
        %v1491 = vunpack.c.l.b16 %v1468
        %v1492 = vunpack.c.l.b16 %v1469
        %v1493 = vpack.c.b16 %v1486, %v1485
        %v1494 = vpack.c.b16 %v1488, %v1487
        %v1495 = vpack.c.b16 %v1490, %v1489
        %v1496 = vpack.c.b16 %v1492, %v1491
        %vm1501 = vcmask 523264
        %v1503 = vsel %vm1501, %v1461, 0
        %1505 = vmatprep.subr.bf16.mxu0 0
        %1506 = vmatpush1.bf16.msra.mxu0 0
        %1507 = vmatprep.subr.bf16.mxu0 0
        %1508 = vmatpush1.bf16.msra.mxu0 0
        %1509 = vmatprep.subr.bf16.mxu0 0
        %1510 = vmatpush1.bf16.msra.mxu0 0
        %1511 = vmatprep.subr.bf16.mxu0 0
        %1512 = vmatpush1.bf16.msra.mxu0 0
        %1513 = vmatprep.subr.bf16.mxu0 0
        %1514 = vmatpush1.bf16.msra.mxu0 %v1496
        %1515 = vmatprep.subr.bf16.mxu0 0
        %1516 = vmatpush1.bf16.msra.mxu0 %v1495
        %1517 = vmatprep.subr.bf16.mxu0 0
        %1518 = vmatpush1.bf16.msra.mxu0 %v1494
        %1519 = vmatprep.subr.bf16.mxu0 0
        %1520 = vmatpush1.bf16.msra.mxu0 %v1493
        %1521 = vmatprep.subr.bf16.mxu0 0
        %1522 = vmatpush2.bf16.msra.mxu0 0
        %1523 = vmatprep.subr.bf16.mxu0 0
        %1524 = vmatpush2.bf16.msra.mxu0 0
        %1525 = vmatprep.subr.bf16.mxu0 0
        %1526 = vmatpush2.bf16.msra.mxu0 0
        %1527 = vmatprep.subr.bf16.mxu0 0
        %1528 = vmatpush2.bf16.msra.mxu0 0
        %1529 = vmatprep.subr.bf16.mxu0 0
        %1530 = vmatpush2.bf16.msra.mxu0 0
        %1531 = vmatprep.subr.bf16.mxu0 0
        %1532 = vmatpush2.bf16.msra.mxu0 0
        %1533 = vmatprep.subr.bf16.mxu0 0
        %1534 = vmatpush2.bf16.msra.mxu0 0
        %1535 = vmatprep.subr.bf16.mxu0 0
        %1536 = vmatpush2.bf16.msra.mxu0 0
        %1537 = vmatprep.mubr.bf16.mxu0 0
        %1538 = vmatmul.mubr.bf16.gmra.mxu0 %v1503
        %v1539 = vpop.f32.mrf.mxu0
        %v1540 = vadd.f32 %v1475, %v1539
        %v1541 = vpop.f32.mrf.mxu0
        %v1542 = vpop.f32.mrf.mxu0
        %v1543 = vpop.f32.mrf.mxu0
        %1544 = vdwg.mxu0
        %v1545 = vadd.f32 %v1356, %v1540
        %1546 = vst.msk [vmem:[%s594] sm:$0xff] %vm602, %v1545
        %p1547 = scmp.lt.s32.totalorder %s30, 1
        %s1548 = scalar_select %p1547, %s30, 1
        %s1549 = smul.addr %s1548, 8
        %s1550 = scalar_lea.vmem %s14, %s1549
        // Predicated region
        $region113: #{encoder_forward.2} parent=75 // pred_check
          %p1551 = pneg %p352
        $region114: #{encoder_forward.2} parent=75 // pred_check_branch
          %1553 = sbr.rel (%p1551) target = $region116
        $region115: #{encoder_forward.2} parent=75 // pred_region
          _
        $region116: #{encoder_forward.2} parent=75 // pred_fallthru
          _
      $region76: #{encoder_forward.2} parent=5 // pred_fallthru
        _
      %p1554 = scmp.le.s32.totalorder 2, %s25
      // Predicated region
      $region117: #{encoder_forward.2} parent=5 // pred_check
        %p1555 = pneg %p1554
      $region118: #{encoder_forward.2} parent=5 // pred_check_branch
        %1557 = sbr.rel (%p1555) target = $region120
      $region119: #{encoder_forward.2} parent=5 // pred_region
        %s1558 = ssub.s32 %s25, 2
        // Predicated region
        $region121: #{encoder_forward.2} parent=119 // pred_check
          %p1559 = pneg %p358
        $region122: #{encoder_forward.2} parent=119 // pred_check_branch
          %1561 = sbr.rel (%p1559) target = $region124
        $region123: #{encoder_forward.2} parent=119 // pred_region
          %p1562 = scmp.lt.s32.totalorder %s31, 1
          %s1563 = scalar_select %p1562, %s31, 1
          %s1564 = smul.addr %s1563, 8
          %s1565 = scalar_lea.vmem %s14, %s1564
        $region124: #{encoder_forward.2} parent=119 // pred_fallthru
          _
      $region120: #{encoder_forward.2} parent=5 // pred_fallthru
        _
    $region6: #{encoder_forward.2} parent=1 // loop_footer
      %s29 = sadd.s32 1, %s25
    $region7: #{encoder_forward.2} parent=1 // loop_footer_branch
      %24 = sbr.rel target = $region3
    $region8: #{encoder_forward.2} parent=1 // loop_exit
      _
    %1566 = vsyncpa [#allocation3], 1
    %s1567 = scalar_lea.sflag [#allocation3], 1
    %1568 = vsyncpa %s1567, 1
    %1569 = vsyncpa [#allocation5], 1
    %1570 = vsyncpa [#allocation8], 1
    %1571 = vsyncpa [#allocation11], 1
    %1572 = vsyncpa [#allocation14], 1

</llo_original>
